<compile_context>
chip_gen: v6e
topology: v6e:2x2x1
jax: 0.10.0
libtpu: 0.0.40
codegen_flags: <defaults>
</compile_context>

<pallas_src>
import math

import jax
import jax.numpy as jnp
from jax.experimental import pallas as pl
from jax.experimental.pallas import tpu as pltpu


def _embeddings_kernel(x_ref, w_ref, pb_ref, o_ref):
    """Patch matmul (bf16 inputs, f32 MXU accumulate) + f32 (pos-enc + bias) add.

    x_ref: (M, K) bf16, w_ref: (O, K) bf16, pb_ref/o_ref: (M, O) f32.
    Contraction over dim 1 of BOTH operands keeps the weight lane-dense.
    The pos+bias add happens on the f32 accumulator (don't-regress constraint
    for v5e, which has no bf16 VPU datapath).
    """
    acc = jax.lax.dot_general(
        x_ref[...], w_ref[...],
        dimension_numbers=(((1,), (1,)), ((), ())),   # "trans_b" matmul
        preferred_element_type=jnp.float32,
    )
    o_ref[...] = (acc + pb_ref[...]).astype(o_ref.dtype)


def _sinusoidal_rows(positions, hidden_size):
    """Sinusoidal embedding rows; matches Embeddings.create_sinusoidal_embeddings."""
    assert hidden_size % 2 == 0, "hidden_size must be even for sin/cos interleave"
    pos = positions.astype(jnp.float32)[:, None]
    div_term = jnp.exp(
        jnp.arange(0, hidden_size, 2, dtype=jnp.float32)
        * -(math.log(10000.0) / hidden_size)
    )
    ang = pos * div_term                                   # (n, hidden/2)
    emb = jnp.zeros((positions.shape[0], hidden_size), jnp.float32)
    emb = emb.at[:, 0::2].set(jnp.sin(ang))
    emb = emb.at[:, 1::2].set(jnp.cos(ang))
    return emb


def make_embeddings(conv_w, conv_b, batch, feat_hw):
    """One-time init: prep lane-dense bf16 weight + (pos-enc + bias) table.

    Returns (jitted forward(x, w_ok, pos_bias), w_ok, pos_bias).
    """
    O, C, ph, pw = conv_w.shape
    Hf, Wf = feat_hw
    assert Hf % ph == 0 and Wf % pw == 0
    Hp, Wp = Hf // ph, Wf // pw
    n_patches = Hp * Wp
    K = C * ph * pw
    M = batch * n_patches

    # --- hoisted static prep (runs once, outside the per-call hot path) ---
    w_ok = jnp.asarray(conv_w).reshape(O, K).astype(jnp.bfloat16)        # (O, K)
    pos_bias = (
        _sinusoidal_rows(jnp.arange(M) % n_patches, O)
        + jnp.asarray(conv_b, dtype=jnp.float32)[None, :]
    ).astype(jnp.float32)                                                 # (M, O)

    cost = pl.CostEstimate(
        flops=2 * M * K * O,
        transcendentals=0,
        bytes_accessed=M * K * 2 + O * K * 2 + M * O * 4 + M * O * 4,
    )

    call = pl.pallas_call(
        _embeddings_kernel,
        out_shape=jax.ShapeDtypeStruct((M, O), jnp.float32),
        in_specs=[
            pl.BlockSpec(memory_space=pltpu.MemorySpace.VMEM),  # patches (M, K) bf16
            pl.BlockSpec(memory_space=pltpu.MemorySpace.VMEM),  # weight  (O, K) bf16
            pl.BlockSpec(memory_space=pltpu.MemorySpace.VMEM),  # pos+bias (M, O) f32
        ],
        out_specs=pl.BlockSpec(memory_space=pltpu.MemorySpace.VMEM),
        cost_estimate=cost,
    )
    # NOTE: intentionally single-shot / grid-less — total VMEM is ~1.8 MiB, far
    # under every generation's limit (incl. v7x's 64 MiB), and the problem is
    # DMA-bound so a K grid would only add per-step pipeline overhead. If B or
    # the feature map grows, add a leading "parallel" grid axis over M (blocks a
    # multiple of 16 rows for bf16) and keep the full (O, K) weight resident
    # across it so v7x's two TensorCores both get work.

    def forward(x, w_ok, pos_bias):
        B, Cx, Hf_, Wf_ = x.shape
        # im2col of the stride==kernel patch conv, fused by XLA with the bf16
        # cast into a single read-f32 / write-bf16 op inside this jit.
        # TODO(synk): folding this relayout into the kernel would save one more
        # ~0.25 MiB HBM hop, but needs a 6-D in-VMEM transpose with 4-wide
        # trailing dims that Mosaic does not lower cleanly; kept in the wrapper.
        xp = x.reshape(B, Cx, Hp, ph, Wp, pw)
        xp = jnp.transpose(xp, (0, 2, 4, 1, 3, 5)).reshape(M, K)
        xp = xp.astype(jnp.bfloat16)
        out = call(xp, w_ok, pos_bias)
        # TODO(synk): Dropout reproduced in eval mode only (identity); stochastic
        # training-mode dropout is not implemented in the kernel.
        return out.reshape(B, n_patches, O)

    return jax.jit(forward), w_ok, pos_bias


if __name__ == "__main__":
    # Config implied by the module: img_size=128, grid=(2,2) -> patch=(4,4),
    # in_channels forced to 1024, hidden_size=32; x is the backbone feature map
    # (B, 1024, img/16, img/16) = (2, 1024, 8, 8).
    B, C, Hf, Wf = 2, 1024, 8, 8
    ph = pw = 4
    hidden = 32

    key = jax.random.PRNGKey(0)
    kx, kw, kb = jax.random.split(key, 3)
    x = jax.random.normal(kx, (B, C, Hf, Wf), dtype=jnp.float32)
    conv_w = 0.02 * jax.random.normal(kw, (hidden, C, ph, pw), dtype=jnp.float32)
    conv_b = 0.01 * jax.random.normal(kb, (hidden,), dtype=jnp.float32)

    forward, w_ok, pos_bias = make_embeddings(conv_w, conv_b, batch=B, feat_hw=(Hf, Wf))
    emb = forward(x, w_ok, pos_bias)
    emb = jax.block_until_ready(emb)

    n_patches = (Hf // ph) * (Wf // pw)
    assert emb.shape == (B, n_patches, hidden), emb.shape

    pos_rows = _sinusoidal_rows(jnp.arange(n_patches), hidden)[None]

    # Reference 1 (tight): same bf16-quantized operands, full-f32 accumulation.
    # Only reduction-order rounding differs from the kernel.
    xq = x.astype(jnp.bfloat16).astype(jnp.float32)
    wq = conv_w.astype(jnp.bfloat16).astype(jnp.float32)
    ref_conv_q = jax.lax.conv_general_dilated(
        xq, wq, window_strides=(ph, pw), padding="VALID",
        dimension_numbers=("NCHW", "OIHW", "NCHW"),
        precision=jax.lax.Precision.HIGHEST,
    ) + conv_b[None, :, None, None]
    ref_q = jnp.transpose(ref_conv_q.reshape(B, hidden, n_patches), (0, 2, 1)) + pos_rows
    assert jnp.allclose(emb, ref_q, atol=2e-3, rtol=2e-3), "mismatch vs bf16-operand ref"

    # Reference 2 (loose): pure-f32 PyTorch-equivalent math; tolerance covers the
    # intentional bf16 cast of x / weight.
    ref_conv = jax.lax.conv_general_dilated(
        x, conv_w, window_strides=(ph, pw), padding="VALID",
        dimension_numbers=("NCHW", "OIHW", "NCHW"),
        precision=jax.lax.Precision.HIGHEST,
    ) + conv_b[None, :, None, None]
    ref = jnp.transpose(ref_conv.reshape(B, hidden, n_patches), (0, 2, 1)) + pos_rows
    assert jnp.allclose(emb, ref, atol=6e-2, rtol=6e-2), "mismatch vs f32 reference"

    print("KERNEL_OK")
</pallas_src>

<mosaic_0001>
module attributes {stable_mosaic.version = 11 : i64} {
  func.func @_embeddings_kernel(%arg0: memref<8x16384xbf16, #tpu.memory_space<vmem>>, %arg1: memref<32x16384xbf16, #tpu.memory_space<vmem>>, %arg2: memref<8x32xf32, #tpu.memory_space<vmem>>, %arg3: memref<8x32xf32, #tpu.memory_space<vmem>>) attributes {dimension_semantics = [], scalar_prefetch = 0 : i64, scratch_operands = 0 : i64, tpu.core_type = #tpu.core_type<tc>} {
    %c0 = arith.constant 0 : index
    %c0_0 = arith.constant 0 : index
    %0 = vector.load %arg0[%c0, %c0_0] : memref<8x16384xbf16, #tpu.memory_space<vmem>>, vector<8x16384xbf16>
    %c0_1 = arith.constant 0 : index
    %c0_2 = arith.constant 0 : index
    %1 = vector.load %arg1[%c0_1, %c0_2] : memref<32x16384xbf16, #tpu.memory_space<vmem>>, vector<32x16384xbf16>
    %cst = arith.constant dense<0.000000e+00> : vector<8x32xf32>
    %2 = tpu.matmul %0, %1, %cst {dimension_numbers = #tpu.dot_dimension_numbers<[1], [1], [0], [0], [0, 0, 1, 0], [], []>} : vector<8x16384xbf16>, vector<32x16384xbf16>, vector<8x32xf32> -> vector<8x32xf32>
    %c0_3 = arith.constant 0 : index
    %c0_4 = arith.constant 0 : index
    %3 = vector.load %arg2[%c0_3, %c0_4] : memref<8x32xf32, #tpu.memory_space<vmem>>, vector<8x32xf32>
    %4 = arith.addf %2, %3 : vector<8x32xf32>
    %c0_5 = arith.constant 0 : index
    %c0_6 = arith.constant 0 : index
    %5 = vector.load %arg3[%c0_5, %c0_6] : memref<8x32xf32, #tpu.memory_space<vmem>>, vector<8x32xf32>
    tpu.vector_store %arg3[%c0_5, %c0_6], %4 {strides = array<i32>} : memref<8x32xf32, #tpu.memory_space<vmem>>, vector<8x32xf32>,
    return
  }
}

</mosaic_0001>

<llo_original>
// kernel: forward.1
$region0: #{forward.1}
  #allocation0 [shape = 'u32[]', space=smem, size = 0x4, offset = 0x4, fixed_abs, tag = 'smem constant byte address 0x4 - core index']
  #allocation1 [shape = 'u32[144,128]{1,0:T(1,128)}', space=vmem, size = 0x12000, scoped, tag = 'internal scratch']
  %s0 = inlined_call_operand.vmem [shape: bf16[8,16384], index: 0, kind: input, shape index: {}]
  %s1 = inlined_call_operand.vmem [shape: bf16[32,16384], index: 1, kind: input, shape index: {}]
  %s2 = inlined_call_operand.vmem [shape: f32[8,32], index: 2, kind: input, shape index: {}]
  %s3 = inlined_call_operand.hbm [shape: f32[8,32], index: 3, kind: output, shape index: {}]
  %s4 = sld [smem:[#allocation0]]
  $region22: #{forward.1} parent=0
    _
  %s6 = ssub.s32 1, %s4
  %s7 = scalar_select 0, %s6, %s4
  $region1: #{forward.1} parent=0
    #allocation2 [shape = 'u8[4096]{0}', space=vmem, size = 0x1000, scoped, tag = 'output window, operand 0, single buffered']
    #allocation3 [shape = 's32[1]{0}', space=sflag, size = 0x4, scoped, tag = 'scoped memory for forward.1']
    %8 = vsyncpa [#allocation3], 0
    // Predicated region
    $region2: #{forward.1} parent=1 // pred_check
      _
    $region3: #{forward.1} parent=1 // pred_check_branch
      %10 = sbr.rel (0) target = $region5
    $region4: #{forward.1} parent=1 // pred_region
      _
    $region5: #{forward.1} parent=1 // pred_fallthru
      _
    // Predicated region
    $region6: #{forward.1} parent=1 // pred_check
      _
    $region7: #{forward.1} parent=1 // pred_check_branch
      %12 = sbr.rel (0) target = $region9
    $region8: #{forward.1} parent=1 // pred_region
      _
    $region9: #{forward.1} parent=1 // pred_fallthru
      _
    // Predicated region
    $region10: #{forward.1} parent=1 // pred_check
      _
    $region11: #{forward.1} parent=1 // pred_check_branch
      %14 = sbr.rel (0) target = $region13
    $region12: #{forward.1} parent=1 // pred_region
      _
    $region13: #{forward.1} parent=1 // pred_fallthru
      _
    %v16 = vld [vmem:[%s0] sm:$0xff]
    %v17 = vld [vmem:[%s0 + $0x8] sm:$0xff]
    %v18 = vld [vmem:[%s0 + $0x10] sm:$0xff]
    %v19 = vld [vmem:[%s0 + $0x18] sm:$0xff]
    %v20 = vld [vmem:[%s0 + $0x20] sm:$0xff]
    %v21 = vld [vmem:[%s0 + $0x28] sm:$0xff]
    %v22 = vld [vmem:[%s0 + $0x30] sm:$0xff]
    %v23 = vld [vmem:[%s0 + $0x38] sm:$0xff]
    %v24 = vld [vmem:[%s0 + $0x40] sm:$0xff]
    %v25 = vld [vmem:[%s0 + $0x48] sm:$0xff]
    %v26 = vld [vmem:[%s0 + $0x50] sm:$0xff]
    %v27 = vld [vmem:[%s0 + $0x58] sm:$0xff]
    %v28 = vld [vmem:[%s0 + $0x60] sm:$0xff]
    %v29 = vld [vmem:[%s0 + $0x68] sm:$0xff]
    %v30 = vld [vmem:[%s0 + $0x70] sm:$0xff]
    %v31 = vld [vmem:[%s0 + $0x78] sm:$0xff]
    %v32 = vld [vmem:[%s0 + $0x80] sm:$0xff]
    %v33 = vld [vmem:[%s0 + $0x88] sm:$0xff]
    %v34 = vld [vmem:[%s0 + $0x90] sm:$0xff]
    %v35 = vld [vmem:[%s0 + $0x98] sm:$0xff]
    %v36 = vld [vmem:[%s0 + $0xa0] sm:$0xff]
    %v37 = vld [vmem:[%s0 + $0xa8] sm:$0xff]
    %v38 = vld [vmem:[%s0 + $0xb0] sm:$0xff]
    %v39 = vld [vmem:[%s0 + $0xb8] sm:$0xff]
    %v40 = vld [vmem:[%s0 + $0xc0] sm:$0xff]
    %v41 = vld [vmem:[%s0 + $0xc8] sm:$0xff]
    %v42 = vld [vmem:[%s0 + $0xd0] sm:$0xff]
    %v43 = vld [vmem:[%s0 + $0xd8] sm:$0xff]
    %v44 = vld [vmem:[%s0 + $0xe0] sm:$0xff]
    %v45 = vld [vmem:[%s0 + $0xe8] sm:$0xff]
    %v46 = vld [vmem:[%s0 + $0xf0] sm:$0xff]
    %v47 = vld [vmem:[%s0 + $0xf8] sm:$0xff]
    %v48 = vld [vmem:[%s0 + $0x100] sm:$0xff]
    %v49 = vld [vmem:[%s0 + $0x108] sm:$0xff]
    %v50 = vld [vmem:[%s0 + $0x110] sm:$0xff]
    %v51 = vld [vmem:[%s0 + $0x118] sm:$0xff]
    %v52 = vld [vmem:[%s0 + $0x120] sm:$0xff]
    %v53 = vld [vmem:[%s0 + $0x128] sm:$0xff]
    %v54 = vld [vmem:[%s0 + $0x130] sm:$0xff]
    %v55 = vld [vmem:[%s0 + $0x138] sm:$0xff]
    %v56 = vld [vmem:[%s0 + $0x140] sm:$0xff]
    %v57 = vld [vmem:[%s0 + $0x148] sm:$0xff]
    %v58 = vld [vmem:[%s0 + $0x150] sm:$0xff]
    %v59 = vld [vmem:[%s0 + $0x158] sm:$0xff]
    %v60 = vld [vmem:[%s0 + $0x160] sm:$0xff]
    %v61 = vld [vmem:[%s0 + $0x168] sm:$0xff]
    %v62 = vld [vmem:[%s0 + $0x170] sm:$0xff]
    %v63 = vld [vmem:[%s0 + $0x178] sm:$0xff]
    %v64 = vld [vmem:[%s0 + $0x180] sm:$0xff]
    %v65 = vld [vmem:[%s0 + $0x188] sm:$0xff]
    %v66 = vld [vmem:[%s0 + $0x190] sm:$0xff]
    %v67 = vld [vmem:[%s0 + $0x198] sm:$0xff]
    %v68 = vld [vmem:[%s0 + $0x1a0] sm:$0xff]
    %v69 = vld [vmem:[%s0 + $0x1a8] sm:$0xff]
    %v70 = vld [vmem:[%s0 + $0x1b0] sm:$0xff]
    %v71 = vld [vmem:[%s0 + $0x1b8] sm:$0xff]
    %v72 = vld [vmem:[%s0 + $0x1c0] sm:$0xff]
    %v73 = vld [vmem:[%s0 + $0x1c8] sm:$0xff]
    %v74 = vld [vmem:[%s0 + $0x1d0] sm:$0xff]
    %v75 = vld [vmem:[%s0 + $0x1d8] sm:$0xff]
    %v76 = vld [vmem:[%s0 + $0x1e0] sm:$0xff]
    %v77 = vld [vmem:[%s0 + $0x1e8] sm:$0xff]
    %v78 = vld [vmem:[%s0 + $0x1f0] sm:$0xff]
    %v79 = vld [vmem:[%s0 + $0x1f8] sm:$0xff]
    %v80 = vld [vmem:[%s1] sm:$0xff]
    %v81 = vld [vmem:[%s1 + $0x8] sm:$0xff]
    %v82 = vld [vmem:[%s1 + $0x10] sm:$0xff]
    %v83 = vld [vmem:[%s1 + $0x18] sm:$0xff]
    %v84 = vld [vmem:[%s1 + $0x20] sm:$0xff]
    %v85 = vld [vmem:[%s1 + $0x28] sm:$0xff]
    %v86 = vld [vmem:[%s1 + $0x30] sm:$0xff]
    %v87 = vld [vmem:[%s1 + $0x38] sm:$0xff]
    %v88 = vld [vmem:[%s1 + $0x40] sm:$0xff]
    %v89 = vld [vmem:[%s1 + $0x48] sm:$0xff]
    %v90 = vld [vmem:[%s1 + $0x50] sm:$0xff]
    %v91 = vld [vmem:[%s1 + $0x58] sm:$0xff]
    %v92 = vld [vmem:[%s1 + $0x60] sm:$0xff]
    %v93 = vld [vmem:[%s1 + $0x68] sm:$0xff]
    %v94 = vld [vmem:[%s1 + $0x70] sm:$0xff]
    %v95 = vld [vmem:[%s1 + $0x78] sm:$0xff]
    %v96 = vld [vmem:[%s1 + $0x80] sm:$0xff]
    %v97 = vld [vmem:[%s1 + $0x88] sm:$0xff]
    %v98 = vld [vmem:[%s1 + $0x90] sm:$0xff]
    %v99 = vld [vmem:[%s1 + $0x98] sm:$0xff]
    %v100 = vld [vmem:[%s1 + $0xa0] sm:$0xff]
    %v101 = vld [vmem:[%s1 + $0xa8] sm:$0xff]
    %v102 = vld [vmem:[%s1 + $0xb0] sm:$0xff]
    %v103 = vld [vmem:[%s1 + $0xb8] sm:$0xff]
    %v104 = vld [vmem:[%s1 + $0xc0] sm:$0xff]
    %v105 = vld [vmem:[%s1 + $0xc8] sm:$0xff]
    %v106 = vld [vmem:[%s1 + $0xd0] sm:$0xff]
    %v107 = vld [vmem:[%s1 + $0xd8] sm:$0xff]
    %v108 = vld [vmem:[%s1 + $0xe0] sm:$0xff]
    %v109 = vld [vmem:[%s1 + $0xe8] sm:$0xff]
    %v110 = vld [vmem:[%s1 + $0xf0] sm:$0xff]
    %v111 = vld [vmem:[%s1 + $0xf8] sm:$0xff]
    %v112 = vld [vmem:[%s1 + $0x100] sm:$0xff]
    %v113 = vld [vmem:[%s1 + $0x108] sm:$0xff]
    %v114 = vld [vmem:[%s1 + $0x110] sm:$0xff]
    %v115 = vld [vmem:[%s1 + $0x118] sm:$0xff]
    %v116 = vld [vmem:[%s1 + $0x120] sm:$0xff]
    %v117 = vld [vmem:[%s1 + $0x128] sm:$0xff]
    %v118 = vld [vmem:[%s1 + $0x130] sm:$0xff]
    %v119 = vld [vmem:[%s1 + $0x138] sm:$0xff]
    %v120 = vld [vmem:[%s1 + $0x140] sm:$0xff]
    %v121 = vld [vmem:[%s1 + $0x148] sm:$0xff]
    %v122 = vld [vmem:[%s1 + $0x150] sm:$0xff]
    %v123 = vld [vmem:[%s1 + $0x158] sm:$0xff]
    %v124 = vld [vmem:[%s1 + $0x160] sm:$0xff]
    %v125 = vld [vmem:[%s1 + $0x168] sm:$0xff]
    %v126 = vld [vmem:[%s1 + $0x170] sm:$0xff]
    %v127 = vld [vmem:[%s1 + $0x178] sm:$0xff]
    %v128 = vld [vmem:[%s1 + $0x180] sm:$0xff]
    %v129 = vld [vmem:[%s1 + $0x188] sm:$0xff]
    %v130 = vld [vmem:[%s1 + $0x190] sm:$0xff]
    %v131 = vld [vmem:[%s1 + $0x198] sm:$0xff]
    %v132 = vld [vmem:[%s1 + $0x1a0] sm:$0xff]
    %v133 = vld [vmem:[%s1 + $0x1a8] sm:$0xff]
    %v134 = vld [vmem:[%s1 + $0x1b0] sm:$0xff]
    %v135 = vld [vmem:[%s1 + $0x1b8] sm:$0xff]
    %v136 = vld [vmem:[%s1 + $0x1c0] sm:$0xff]
    %v137 = vld [vmem:[%s1 + $0x1c8] sm:$0xff]
    %v138 = vld [vmem:[%s1 + $0x1d0] sm:$0xff]
    %v139 = vld [vmem:[%s1 + $0x1d8] sm:$0xff]
    %v140 = vld [vmem:[%s1 + $0x1e0] sm:$0xff]
    %v141 = vld [vmem:[%s1 + $0x1e8] sm:$0xff]
    %v142 = vld [vmem:[%s1 + $0x1f0] sm:$0xff]
    %v143 = vld [vmem:[%s1 + $0x1f8] sm:$0xff]
    %v144 = vld [vmem:[%s1 + $0x200] sm:$0xff]
    %v145 = vld [vmem:[%s1 + $0x208] sm:$0xff]
    %v146 = vld [vmem:[%s1 + $0x210] sm:$0xff]
    %v147 = vld [vmem:[%s1 + $0x218] sm:$0xff]
    %v148 = vld [vmem:[%s1 + $0x220] sm:$0xff]
    %v149 = vld [vmem:[%s1 + $0x228] sm:$0xff]
    %v150 = vld [vmem:[%s1 + $0x230] sm:$0xff]
    %v151 = vld [vmem:[%s1 + $0x238] sm:$0xff]
    %v152 = vld [vmem:[%s1 + $0x240] sm:$0xff]
    %v153 = vld [vmem:[%s1 + $0x248] sm:$0xff]
    %v154 = vld [vmem:[%s1 + $0x250] sm:$0xff]
    %v155 = vld [vmem:[%s1 + $0x258] sm:$0xff]
    %v156 = vld [vmem:[%s1 + $0x260] sm:$0xff]
    %v157 = vld [vmem:[%s1 + $0x268] sm:$0xff]
    %v158 = vld [vmem:[%s1 + $0x270] sm:$0xff]
    %v159 = vld [vmem:[%s1 + $0x278] sm:$0xff]
    %v160 = vld [vmem:[%s1 + $0x280] sm:$0xff]
    %v161 = vld [vmem:[%s1 + $0x288] sm:$0xff]
    %v162 = vld [vmem:[%s1 + $0x290] sm:$0xff]
    %v163 = vld [vmem:[%s1 + $0x298] sm:$0xff]
    %v164 = vld [vmem:[%s1 + $0x2a0] sm:$0xff]
    %v165 = vld [vmem:[%s1 + $0x2a8] sm:$0xff]
    %v166 = vld [vmem:[%s1 + $0x2b0] sm:$0xff]
    %v167 = vld [vmem:[%s1 + $0x2b8] sm:$0xff]
    %v168 = vld [vmem:[%s1 + $0x2c0] sm:$0xff]
    %v169 = vld [vmem:[%s1 + $0x2c8] sm:$0xff]
    %v170 = vld [vmem:[%s1 + $0x2d0] sm:$0xff]
    %v171 = vld [vmem:[%s1 + $0x2d8] sm:$0xff]
    %v172 = vld [vmem:[%s1 + $0x2e0] sm:$0xff]
    %v173 = vld [vmem:[%s1 + $0x2e8] sm:$0xff]
    %v174 = vld [vmem:[%s1 + $0x2f0] sm:$0xff]
    %v175 = vld [vmem:[%s1 + $0x2f8] sm:$0xff]
    %v176 = vld [vmem:[%s1 + $0x300] sm:$0xff]
    %v177 = vld [vmem:[%s1 + $0x308] sm:$0xff]
    %v178 = vld [vmem:[%s1 + $0x310] sm:$0xff]
    %v179 = vld [vmem:[%s1 + $0x318] sm:$0xff]
    %v180 = vld [vmem:[%s1 + $0x320] sm:$0xff]
    %v181 = vld [vmem:[%s1 + $0x328] sm:$0xff]
    %v182 = vld [vmem:[%s1 + $0x330] sm:$0xff]
    %v183 = vld [vmem:[%s1 + $0x338] sm:$0xff]
    %v184 = vld [vmem:[%s1 + $0x340] sm:$0xff]
    %v185 = vld [vmem:[%s1 + $0x348] sm:$0xff]
    %v186 = vld [vmem:[%s1 + $0x350] sm:$0xff]
    %v187 = vld [vmem:[%s1 + $0x358] sm:$0xff]
    %v188 = vld [vmem:[%s1 + $0x360] sm:$0xff]
    %v189 = vld [vmem:[%s1 + $0x368] sm:$0xff]
    %v190 = vld [vmem:[%s1 + $0x370] sm:$0xff]
    %v191 = vld [vmem:[%s1 + $0x378] sm:$0xff]
    %v192 = vld [vmem:[%s1 + $0x380] sm:$0xff]
    %v193 = vld [vmem:[%s1 + $0x388] sm:$0xff]
    %v194 = vld [vmem:[%s1 + $0x390] sm:$0xff]
    %v195 = vld [vmem:[%s1 + $0x398] sm:$0xff]
    %v196 = vld [vmem:[%s1 + $0x3a0] sm:$0xff]
    %v197 = vld [vmem:[%s1 + $0x3a8] sm:$0xff]
    %v198 = vld [vmem:[%s1 + $0x3b0] sm:$0xff]
    %v199 = vld [vmem:[%s1 + $0x3b8] sm:$0xff]
    %v200 = vld [vmem:[%s1 + $0x3c0] sm:$0xff]
    %v201 = vld [vmem:[%s1 + $0x3c8] sm:$0xff]
    %v202 = vld [vmem:[%s1 + $0x3d0] sm:$0xff]
    %v203 = vld [vmem:[%s1 + $0x3d8] sm:$0xff]
    %v204 = vld [vmem:[%s1 + $0x3e0] sm:$0xff]
    %v205 = vld [vmem:[%s1 + $0x3e8] sm:$0xff]
    %v206 = vld [vmem:[%s1 + $0x3f0] sm:$0xff]
    %v207 = vld [vmem:[%s1 + $0x3f8] sm:$0xff]
    %v208 = vld [vmem:[%s1 + $0x400] sm:$0xff]
    %v209 = vld [vmem:[%s1 + $0x408] sm:$0xff]
    %v210 = vld [vmem:[%s1 + $0x410] sm:$0xff]
    %v211 = vld [vmem:[%s1 + $0x418] sm:$0xff]
    %v212 = vld [vmem:[%s1 + $0x420] sm:$0xff]
    %v213 = vld [vmem:[%s1 + $0x428] sm:$0xff]
    %v214 = vld [vmem:[%s1 + $0x430] sm:$0xff]
    %v215 = vld [vmem:[%s1 + $0x438] sm:$0xff]
    %v216 = vld [vmem:[%s1 + $0x440] sm:$0xff]
    %v217 = vld [vmem:[%s1 + $0x448] sm:$0xff]
    %v218 = vld [vmem:[%s1 + $0x450] sm:$0xff]
    %v219 = vld [vmem:[%s1 + $0x458] sm:$0xff]
    %v220 = vld [vmem:[%s1 + $0x460] sm:$0xff]
    %v221 = vld [vmem:[%s1 + $0x468] sm:$0xff]
    %v222 = vld [vmem:[%s1 + $0x470] sm:$0xff]
    %v223 = vld [vmem:[%s1 + $0x478] sm:$0xff]
    %v224 = vld [vmem:[%s1 + $0x480] sm:$0xff]
    %v225 = vld [vmem:[%s1 + $0x488] sm:$0xff]
    %v226 = vld [vmem:[%s1 + $0x490] sm:$0xff]
    %v227 = vld [vmem:[%s1 + $0x498] sm:$0xff]
    %v228 = vld [vmem:[%s1 + $0x4a0] sm:$0xff]
    %v229 = vld [vmem:[%s1 + $0x4a8] sm:$0xff]
    %v230 = vld [vmem:[%s1 + $0x4b0] sm:$0xff]
    %v231 = vld [vmem:[%s1 + $0x4b8] sm:$0xff]
    %v232 = vld [vmem:[%s1 + $0x4c0] sm:$0xff]
    %v233 = vld [vmem:[%s1 + $0x4c8] sm:$0xff]
    %v234 = vld [vmem:[%s1 + $0x4d0] sm:$0xff]
    %v235 = vld [vmem:[%s1 + $0x4d8] sm:$0xff]
    %v236 = vld [vmem:[%s1 + $0x4e0] sm:$0xff]
    %v237 = vld [vmem:[%s1 + $0x4e8] sm:$0xff]
    %v238 = vld [vmem:[%s1 + $0x4f0] sm:$0xff]
    %v239 = vld [vmem:[%s1 + $0x4f8] sm:$0xff]
    %v240 = vld [vmem:[%s1 + $0x500] sm:$0xff]
    %v241 = vld [vmem:[%s1 + $0x508] sm:$0xff]
    %v242 = vld [vmem:[%s1 + $0x510] sm:$0xff]
    %v243 = vld [vmem:[%s1 + $0x518] sm:$0xff]
    %v244 = vld [vmem:[%s1 + $0x520] sm:$0xff]
    %v245 = vld [vmem:[%s1 + $0x528] sm:$0xff]
    %v246 = vld [vmem:[%s1 + $0x530] sm:$0xff]
    %v247 = vld [vmem:[%s1 + $0x538] sm:$0xff]
    %v248 = vld [vmem:[%s1 + $0x540] sm:$0xff]
    %v249 = vld [vmem:[%s1 + $0x548] sm:$0xff]
    %v250 = vld [vmem:[%s1 + $0x550] sm:$0xff]
    %v251 = vld [vmem:[%s1 + $0x558] sm:$0xff]
    %v252 = vld [vmem:[%s1 + $0x560] sm:$0xff]
    %v253 = vld [vmem:[%s1 + $0x568] sm:$0xff]
    %v254 = vld [vmem:[%s1 + $0x570] sm:$0xff]
    %v255 = vld [vmem:[%s1 + $0x578] sm:$0xff]
    %v256 = vld [vmem:[%s1 + $0x580] sm:$0xff]
    %v257 = vld [vmem:[%s1 + $0x588] sm:$0xff]
    %v258 = vld [vmem:[%s1 + $0x590] sm:$0xff]
    %v259 = vld [vmem:[%s1 + $0x598] sm:$0xff]
    %v260 = vld [vmem:[%s1 + $0x5a0] sm:$0xff]
    %v261 = vld [vmem:[%s1 + $0x5a8] sm:$0xff]
    %v262 = vld [vmem:[%s1 + $0x5b0] sm:$0xff]
    %v263 = vld [vmem:[%s1 + $0x5b8] sm:$0xff]
    %v264 = vld [vmem:[%s1 + $0x5c0] sm:$0xff]
    %v265 = vld [vmem:[%s1 + $0x5c8] sm:$0xff]
    %v266 = vld [vmem:[%s1 + $0x5d0] sm:$0xff]
    %v267 = vld [vmem:[%s1 + $0x5d8] sm:$0xff]
    %v268 = vld [vmem:[%s1 + $0x5e0] sm:$0xff]
    %v269 = vld [vmem:[%s1 + $0x5e8] sm:$0xff]
    %v270 = vld [vmem:[%s1 + $0x5f0] sm:$0xff]
    %v271 = vld [vmem:[%s1 + $0x5f8] sm:$0xff]
    %v272 = vld [vmem:[%s1 + $0x600] sm:$0xff]
    %v273 = vld [vmem:[%s1 + $0x608] sm:$0xff]
    %v274 = vld [vmem:[%s1 + $0x610] sm:$0xff]
    %v275 = vld [vmem:[%s1 + $0x618] sm:$0xff]
    %v276 = vld [vmem:[%s1 + $0x620] sm:$0xff]
    %v277 = vld [vmem:[%s1 + $0x628] sm:$0xff]
    %v278 = vld [vmem:[%s1 + $0x630] sm:$0xff]
    %v279 = vld [vmem:[%s1 + $0x638] sm:$0xff]
    %v280 = vld [vmem:[%s1 + $0x640] sm:$0xff]
    %v281 = vld [vmem:[%s1 + $0x648] sm:$0xff]
    %v282 = vld [vmem:[%s1 + $0x650] sm:$0xff]
    %v283 = vld [vmem:[%s1 + $0x658] sm:$0xff]
    %v284 = vld [vmem:[%s1 + $0x660] sm:$0xff]
    %v285 = vld [vmem:[%s1 + $0x668] sm:$0xff]
    %v286 = vld [vmem:[%s1 + $0x670] sm:$0xff]
    %v287 = vld [vmem:[%s1 + $0x678] sm:$0xff]
    %v288 = vld [vmem:[%s1 + $0x680] sm:$0xff]
    %v289 = vld [vmem:[%s1 + $0x688] sm:$0xff]
    %v290 = vld [vmem:[%s1 + $0x690] sm:$0xff]
    %v291 = vld [vmem:[%s1 + $0x698] sm:$0xff]
    %v292 = vld [vmem:[%s1 + $0x6a0] sm:$0xff]
    %v293 = vld [vmem:[%s1 + $0x6a8] sm:$0xff]
    %v294 = vld [vmem:[%s1 + $0x6b0] sm:$0xff]
    %v295 = vld [vmem:[%s1 + $0x6b8] sm:$0xff]
    %v296 = vld [vmem:[%s1 + $0x6c0] sm:$0xff]
    %v297 = vld [vmem:[%s1 + $0x6c8] sm:$0xff]
    %v298 = vld [vmem:[%s1 + $0x6d0] sm:$0xff]
    %v299 = vld [vmem:[%s1 + $0x6d8] sm:$0xff]
    %v300 = vld [vmem:[%s1 + $0x6e0] sm:$0xff]
    %v301 = vld [vmem:[%s1 + $0x6e8] sm:$0xff]
    %v302 = vld [vmem:[%s1 + $0x6f0] sm:$0xff]
    %v303 = vld [vmem:[%s1 + $0x6f8] sm:$0xff]
    %v304 = vld [vmem:[%s1 + $0x700] sm:$0xff]
    %v305 = vld [vmem:[%s1 + $0x708] sm:$0xff]
    %v306 = vld [vmem:[%s1 + $0x710] sm:$0xff]
    %v307 = vld [vmem:[%s1 + $0x718] sm:$0xff]
    %v308 = vld [vmem:[%s1 + $0x720] sm:$0xff]
    %v309 = vld [vmem:[%s1 + $0x728] sm:$0xff]
    %v310 = vld [vmem:[%s1 + $0x730] sm:$0xff]
    %v311 = vld [vmem:[%s1 + $0x738] sm:$0xff]
    %v312 = vld [vmem:[%s1 + $0x740] sm:$0xff]
    %v313 = vld [vmem:[%s1 + $0x748] sm:$0xff]
    %v314 = vld [vmem:[%s1 + $0x750] sm:$0xff]
    %v315 = vld [vmem:[%s1 + $0x758] sm:$0xff]
    %v316 = vld [vmem:[%s1 + $0x760] sm:$0xff]
    %v317 = vld [vmem:[%s1 + $0x768] sm:$0xff]
    %v318 = vld [vmem:[%s1 + $0x770] sm:$0xff]
    %v319 = vld [vmem:[%s1 + $0x778] sm:$0xff]
    %v320 = vld [vmem:[%s1 + $0x780] sm:$0xff]
    %v321 = vld [vmem:[%s1 + $0x788] sm:$0xff]
    %v322 = vld [vmem:[%s1 + $0x790] sm:$0xff]
    %v323 = vld [vmem:[%s1 + $0x798] sm:$0xff]
    %v324 = vld [vmem:[%s1 + $0x7a0] sm:$0xff]
    %v325 = vld [vmem:[%s1 + $0x7a8] sm:$0xff]
    %v326 = vld [vmem:[%s1 + $0x7b0] sm:$0xff]
    %v327 = vld [vmem:[%s1 + $0x7b8] sm:$0xff]
    %v328 = vld [vmem:[%s1 + $0x7c0] sm:$0xff]
    %v329 = vld [vmem:[%s1 + $0x7c8] sm:$0xff]
    %v330 = vld [vmem:[%s1 + $0x7d0] sm:$0xff]
    %v331 = vld [vmem:[%s1 + $0x7d8] sm:$0xff]
    %v332 = vld [vmem:[%s1 + $0x7e0] sm:$0xff]
    %v333 = vld [vmem:[%s1 + $0x7e8] sm:$0xff]
    %v334 = vld [vmem:[%s1 + $0x7f0] sm:$0xff]
    %v335 = vld [vmem:[%s1 + $0x7f8] sm:$0xff]
    %v336 = vld [vmem:[%s2] sm:$0xff]
    %v401 = vunpack.c.l.b16 %v16
    %v402 = vunpack.c.h.b16 %v16
    %v403 = vunpack.c.l.b16 %v17
    %v404 = vunpack.c.h.b16 %v17
    %v405 = vunpack.c.l.b16 %v18
    %v406 = vunpack.c.h.b16 %v18
    %v407 = vunpack.c.l.b16 %v19
    %v408 = vunpack.c.h.b16 %v19
    %v409 = vunpack.c.l.b16 %v20
    %v410 = vunpack.c.h.b16 %v20
    %v411 = vunpack.c.l.b16 %v21
    %v412 = vunpack.c.h.b16 %v21
    %v413 = vunpack.c.l.b16 %v22
    %v414 = vunpack.c.h.b16 %v22
    %v415 = vunpack.c.l.b16 %v23
    %v416 = vunpack.c.h.b16 %v23
    %v417 = vunpack.c.l.b16 %v24
    %v418 = vunpack.c.h.b16 %v24
    %v419 = vunpack.c.l.b16 %v25
    %v420 = vunpack.c.h.b16 %v25
    %v421 = vunpack.c.l.b16 %v26
    %v422 = vunpack.c.h.b16 %v26
    %v423 = vunpack.c.l.b16 %v27
    %v424 = vunpack.c.h.b16 %v27
    %v425 = vunpack.c.l.b16 %v28
    %v426 = vunpack.c.h.b16 %v28
    %v427 = vunpack.c.l.b16 %v29
    %v428 = vunpack.c.h.b16 %v29
    %v429 = vunpack.c.l.b16 %v30
    %v430 = vunpack.c.h.b16 %v30
    %v431 = vunpack.c.l.b16 %v31
    %v432 = vunpack.c.h.b16 %v31
    %v433 = vunpack.c.l.b16 %v32
    %v434 = vunpack.c.h.b16 %v32
    %v435 = vunpack.c.l.b16 %v33
    %v436 = vunpack.c.h.b16 %v33
    %v437 = vunpack.c.l.b16 %v34
    %v438 = vunpack.c.h.b16 %v34
    %v439 = vunpack.c.l.b16 %v35
    %v440 = vunpack.c.h.b16 %v35
    %v441 = vunpack.c.l.b16 %v36
    %v442 = vunpack.c.h.b16 %v36
    %v443 = vunpack.c.l.b16 %v37
    %v444 = vunpack.c.h.b16 %v37
    %v445 = vunpack.c.l.b16 %v38
    %v446 = vunpack.c.h.b16 %v38
    %v447 = vunpack.c.l.b16 %v39
    %v448 = vunpack.c.h.b16 %v39
    %v449 = vunpack.c.l.b16 %v40
    %v450 = vunpack.c.h.b16 %v40
    %v451 = vunpack.c.l.b16 %v41
    %v452 = vunpack.c.h.b16 %v41
    %v453 = vunpack.c.l.b16 %v42
    %v454 = vunpack.c.h.b16 %v42
    %v455 = vunpack.c.l.b16 %v43
    %v456 = vunpack.c.h.b16 %v43
    %v457 = vunpack.c.l.b16 %v44
    %v458 = vunpack.c.h.b16 %v44
    %v459 = vunpack.c.l.b16 %v45
    %v460 = vunpack.c.h.b16 %v45
    %v461 = vunpack.c.l.b16 %v46
    %v462 = vunpack.c.h.b16 %v46
    %v463 = vunpack.c.l.b16 %v47
    %v464 = vunpack.c.h.b16 %v47
    %v465 = vunpack.c.l.b16 %v48
    %v466 = vunpack.c.h.b16 %v48
    %v467 = vunpack.c.l.b16 %v49
    %v468 = vunpack.c.h.b16 %v49
    %v469 = vunpack.c.l.b16 %v50
    %v470 = vunpack.c.h.b16 %v50
    %v471 = vunpack.c.l.b16 %v51
    %v472 = vunpack.c.h.b16 %v51
    %v473 = vunpack.c.l.b16 %v52
    %v474 = vunpack.c.h.b16 %v52
    %v475 = vunpack.c.l.b16 %v53
    %v476 = vunpack.c.h.b16 %v53
    %v477 = vunpack.c.l.b16 %v54
    %v478 = vunpack.c.h.b16 %v54
    %v479 = vunpack.c.l.b16 %v55
    %v480 = vunpack.c.h.b16 %v55
    %v481 = vunpack.c.l.b16 %v56
    %v482 = vunpack.c.h.b16 %v56
    %v483 = vunpack.c.l.b16 %v57
    %v484 = vunpack.c.h.b16 %v57
    %v485 = vunpack.c.l.b16 %v58
    %v486 = vunpack.c.h.b16 %v58
    %v487 = vunpack.c.l.b16 %v59
    %v488 = vunpack.c.h.b16 %v59
    %v489 = vunpack.c.l.b16 %v60
    %v490 = vunpack.c.h.b16 %v60
    %v491 = vunpack.c.l.b16 %v61
    %v492 = vunpack.c.h.b16 %v61
    %v493 = vunpack.c.l.b16 %v62
    %v494 = vunpack.c.h.b16 %v62
    %v495 = vunpack.c.l.b16 %v63
    %v496 = vunpack.c.h.b16 %v63
    %v497 = vunpack.c.l.b16 %v64
    %v498 = vunpack.c.h.b16 %v64
    %v499 = vunpack.c.l.b16 %v65
    %v500 = vunpack.c.h.b16 %v65
    %v501 = vunpack.c.l.b16 %v66
    %v502 = vunpack.c.h.b16 %v66
    %v503 = vunpack.c.l.b16 %v67
    %v504 = vunpack.c.h.b16 %v67
    %v505 = vunpack.c.l.b16 %v68
    %v506 = vunpack.c.h.b16 %v68
    %v507 = vunpack.c.l.b16 %v69
    %v508 = vunpack.c.h.b16 %v69
    %v509 = vunpack.c.l.b16 %v70
    %v510 = vunpack.c.h.b16 %v70
    %v511 = vunpack.c.l.b16 %v71
    %v512 = vunpack.c.h.b16 %v71
    %v513 = vunpack.c.l.b16 %v72
    %v514 = vunpack.c.h.b16 %v72
    %v515 = vunpack.c.l.b16 %v73
    %v516 = vunpack.c.h.b16 %v73
    %v517 = vunpack.c.l.b16 %v74
    %v518 = vunpack.c.h.b16 %v74
    %v519 = vunpack.c.l.b16 %v75
    %v520 = vunpack.c.h.b16 %v75
    %v521 = vunpack.c.l.b16 %v76
    %v522 = vunpack.c.h.b16 %v76
    %v523 = vunpack.c.l.b16 %v77
    %v524 = vunpack.c.h.b16 %v77
    %v525 = vunpack.c.l.b16 %v78
    %v526 = vunpack.c.h.b16 %v78
    %v527 = vunpack.c.l.b16 %v79
    %v528 = vunpack.c.h.b16 %v79
    %v529 = vpack.c.b16 %v401, %v401
    %v530 = vpack.c.b16 %v402, %v402
    %v531 = vpack.c.b16 %v403, %v403
    %v532 = vpack.c.b16 %v404, %v404
    %v533 = vpack.c.b16 %v405, %v405
    %v534 = vpack.c.b16 %v406, %v406
    %v535 = vpack.c.b16 %v407, %v407
    %v536 = vpack.c.b16 %v408, %v408
    %v537 = vpack.c.b16 %v409, %v409
    %v538 = vpack.c.b16 %v410, %v410
    %v539 = vpack.c.b16 %v411, %v411
    %v540 = vpack.c.b16 %v412, %v412
    %v541 = vpack.c.b16 %v413, %v413
    %v542 = vpack.c.b16 %v414, %v414
    %v543 = vpack.c.b16 %v415, %v415
    %v544 = vpack.c.b16 %v416, %v416
    %v545 = vpack.c.b16 %v417, %v417
    %v546 = vpack.c.b16 %v418, %v418
    %v547 = vpack.c.b16 %v419, %v419
    %v548 = vpack.c.b16 %v420, %v420
    %v549 = vpack.c.b16 %v421, %v421
    %v550 = vpack.c.b16 %v422, %v422
    %v551 = vpack.c.b16 %v423, %v423
    %v552 = vpack.c.b16 %v424, %v424
    %v553 = vpack.c.b16 %v425, %v425
    %v554 = vpack.c.b16 %v426, %v426
    %v555 = vpack.c.b16 %v427, %v427
    %v556 = vpack.c.b16 %v428, %v428
    %v557 = vpack.c.b16 %v429, %v429
    %v558 = vpack.c.b16 %v430, %v430
    %v559 = vpack.c.b16 %v431, %v431
    %v560 = vpack.c.b16 %v432, %v432
    %v561 = vpack.c.b16 %v433, %v433
    %v562 = vpack.c.b16 %v434, %v434
    %v563 = vpack.c.b16 %v435, %v435
    %v564 = vpack.c.b16 %v436, %v436
    %v565 = vpack.c.b16 %v437, %v437
    %v566 = vpack.c.b16 %v438, %v438
    %v567 = vpack.c.b16 %v439, %v439
    %v568 = vpack.c.b16 %v440, %v440
    %v569 = vpack.c.b16 %v441, %v441
    %v570 = vpack.c.b16 %v442, %v442
    %v571 = vpack.c.b16 %v443, %v443
    %v572 = vpack.c.b16 %v444, %v444
    %v573 = vpack.c.b16 %v445, %v445
    %v574 = vpack.c.b16 %v446, %v446
    %v575 = vpack.c.b16 %v447, %v447
    %v576 = vpack.c.b16 %v448, %v448
    %v577 = vpack.c.b16 %v449, %v449
    %v578 = vpack.c.b16 %v450, %v450
    %v579 = vpack.c.b16 %v451, %v451
    %v580 = vpack.c.b16 %v452, %v452
    %v581 = vpack.c.b16 %v453, %v453
    %v582 = vpack.c.b16 %v454, %v454
    %v583 = vpack.c.b16 %v455, %v455
    %v584 = vpack.c.b16 %v456, %v456
    %v585 = vpack.c.b16 %v457, %v457
    %v586 = vpack.c.b16 %v458, %v458
    %v587 = vpack.c.b16 %v459, %v459
    %v588 = vpack.c.b16 %v460, %v460
    %v589 = vpack.c.b16 %v461, %v461
    %v590 = vpack.c.b16 %v462, %v462
    %v591 = vpack.c.b16 %v463, %v463
    %v592 = vpack.c.b16 %v464, %v464
    %v593 = vpack.c.b16 %v465, %v465
    %v594 = vpack.c.b16 %v466, %v466
    %v595 = vpack.c.b16 %v467, %v467
    %v596 = vpack.c.b16 %v468, %v468
    %v597 = vpack.c.b16 %v469, %v469
    %v598 = vpack.c.b16 %v470, %v470
    %v599 = vpack.c.b16 %v471, %v471
    %v600 = vpack.c.b16 %v472, %v472
    %v601 = vpack.c.b16 %v473, %v473
    %v602 = vpack.c.b16 %v474, %v474
    %v603 = vpack.c.b16 %v475, %v475
    %v604 = vpack.c.b16 %v476, %v476
    %v605 = vpack.c.b16 %v477, %v477
    %v606 = vpack.c.b16 %v478, %v478
    %v607 = vpack.c.b16 %v479, %v479
    %v608 = vpack.c.b16 %v480, %v480
    %v609 = vpack.c.b16 %v481, %v481
    %v610 = vpack.c.b16 %v482, %v482
    %v611 = vpack.c.b16 %v483, %v483
    %v612 = vpack.c.b16 %v484, %v484
    %v613 = vpack.c.b16 %v485, %v485
    %v614 = vpack.c.b16 %v486, %v486
    %v615 = vpack.c.b16 %v487, %v487
    %v616 = vpack.c.b16 %v488, %v488
    %v617 = vpack.c.b16 %v489, %v489
    %v618 = vpack.c.b16 %v490, %v490
    %v619 = vpack.c.b16 %v491, %v491
    %v620 = vpack.c.b16 %v492, %v492
    %v621 = vpack.c.b16 %v493, %v493
    %v622 = vpack.c.b16 %v494, %v494
    %v623 = vpack.c.b16 %v495, %v495
    %v624 = vpack.c.b16 %v496, %v496
    %v625 = vpack.c.b16 %v497, %v497
    %v626 = vpack.c.b16 %v498, %v498
    %v627 = vpack.c.b16 %v499, %v499
    %v628 = vpack.c.b16 %v500, %v500
    %v629 = vpack.c.b16 %v501, %v501
    %v630 = vpack.c.b16 %v502, %v502
    %v631 = vpack.c.b16 %v503, %v503
    %v632 = vpack.c.b16 %v504, %v504
    %v633 = vpack.c.b16 %v505, %v505
    %v634 = vpack.c.b16 %v506, %v506
    %v635 = vpack.c.b16 %v507, %v507
    %v636 = vpack.c.b16 %v508, %v508
    %v637 = vpack.c.b16 %v509, %v509
    %v638 = vpack.c.b16 %v510, %v510
    %v639 = vpack.c.b16 %v511, %v511
    %v640 = vpack.c.b16 %v512, %v512
    %v641 = vpack.c.b16 %v513, %v513
    %v642 = vpack.c.b16 %v514, %v514
    %v643 = vpack.c.b16 %v515, %v515
    %v644 = vpack.c.b16 %v516, %v516
    %v645 = vpack.c.b16 %v517, %v517
    %v646 = vpack.c.b16 %v518, %v518
    %v647 = vpack.c.b16 %v519, %v519
    %v648 = vpack.c.b16 %v520, %v520
    %v649 = vpack.c.b16 %v521, %v521
    %v650 = vpack.c.b16 %v522, %v522
    %v651 = vpack.c.b16 %v523, %v523
    %v652 = vpack.c.b16 %v524, %v524
    %v653 = vpack.c.b16 %v525, %v525
    %v654 = vpack.c.b16 %v526, %v526
    %v655 = vpack.c.b16 %v527, %v527
    %v656 = vpack.c.b16 %v528, %v528
    %v1041 = vunpack.c.l.b16 %v80
    %v1042 = vunpack.c.h.b16 %v80
    %v1043 = vunpack.c.l.b16 %v81
    %v1044 = vunpack.c.h.b16 %v81
    %v1045 = vunpack.c.l.b16 %v82
    %v1046 = vunpack.c.h.b16 %v82
    %v1047 = vunpack.c.l.b16 %v83
    %v1048 = vunpack.c.h.b16 %v83
    %v1049 = vunpack.c.l.b16 %v84
    %v1050 = vunpack.c.h.b16 %v84
    %v1051 = vunpack.c.l.b16 %v85
    %v1052 = vunpack.c.h.b16 %v85
    %v1053 = vunpack.c.l.b16 %v86
    %v1054 = vunpack.c.h.b16 %v86
    %v1055 = vunpack.c.l.b16 %v87
    %v1056 = vunpack.c.h.b16 %v87
    %v1057 = vunpack.c.l.b16 %v88
    %v1058 = vunpack.c.h.b16 %v88
    %v1059 = vunpack.c.l.b16 %v89
    %v1060 = vunpack.c.h.b16 %v89
    %v1061 = vunpack.c.l.b16 %v90
    %v1062 = vunpack.c.h.b16 %v90
    %v1063 = vunpack.c.l.b16 %v91
    %v1064 = vunpack.c.h.b16 %v91
    %v1065 = vunpack.c.l.b16 %v92
    %v1066 = vunpack.c.h.b16 %v92
    %v1067 = vunpack.c.l.b16 %v93
    %v1068 = vunpack.c.h.b16 %v93
    %v1069 = vunpack.c.l.b16 %v94
    %v1070 = vunpack.c.h.b16 %v94
    %v1071 = vunpack.c.l.b16 %v95
    %v1072 = vunpack.c.h.b16 %v95
    %v1073 = vunpack.c.l.b16 %v96
    %v1074 = vunpack.c.h.b16 %v96
    %v1075 = vunpack.c.l.b16 %v97
    %v1076 = vunpack.c.h.b16 %v97
    %v1077 = vunpack.c.l.b16 %v98
    %v1078 = vunpack.c.h.b16 %v98
    %v1079 = vunpack.c.l.b16 %v99
    %v1080 = vunpack.c.h.b16 %v99
    %v1081 = vunpack.c.l.b16 %v100
    %v1082 = vunpack.c.h.b16 %v100
    %v1083 = vunpack.c.l.b16 %v101
    %v1084 = vunpack.c.h.b16 %v101
    %v1085 = vunpack.c.l.b16 %v102
    %v1086 = vunpack.c.h.b16 %v102
    %v1087 = vunpack.c.l.b16 %v103
    %v1088 = vunpack.c.h.b16 %v103
    %v1089 = vunpack.c.l.b16 %v104
    %v1090 = vunpack.c.h.b16 %v104
    %v1091 = vunpack.c.l.b16 %v105
    %v1092 = vunpack.c.h.b16 %v105
    %v1093 = vunpack.c.l.b16 %v106
    %v1094 = vunpack.c.h.b16 %v106
    %v1095 = vunpack.c.l.b16 %v107
    %v1096 = vunpack.c.h.b16 %v107
    %v1097 = vunpack.c.l.b16 %v108
    %v1098 = vunpack.c.h.b16 %v108
    %v1099 = vunpack.c.l.b16 %v109
    %v1100 = vunpack.c.h.b16 %v109
    %v1101 = vunpack.c.l.b16 %v110
    %v1102 = vunpack.c.h.b16 %v110
    %v1103 = vunpack.c.l.b16 %v111
    %v1104 = vunpack.c.h.b16 %v111
    %v1105 = vunpack.c.l.b16 %v112
    %v1106 = vunpack.c.h.b16 %v112
    %v1107 = vunpack.c.l.b16 %v113
    %v1108 = vunpack.c.h.b16 %v113
    %v1109 = vunpack.c.l.b16 %v114
    %v1110 = vunpack.c.h.b16 %v114
    %v1111 = vunpack.c.l.b16 %v115
    %v1112 = vunpack.c.h.b16 %v115
    %v1113 = vunpack.c.l.b16 %v116
    %v1114 = vunpack.c.h.b16 %v116
    %v1115 = vunpack.c.l.b16 %v117
    %v1116 = vunpack.c.h.b16 %v117
    %v1117 = vunpack.c.l.b16 %v118
    %v1118 = vunpack.c.h.b16 %v118
    %v1119 = vunpack.c.l.b16 %v119
    %v1120 = vunpack.c.h.b16 %v119
    %v1121 = vunpack.c.l.b16 %v120
    %v1122 = vunpack.c.h.b16 %v120
    %v1123 = vunpack.c.l.b16 %v121
    %v1124 = vunpack.c.h.b16 %v121
    %v1125 = vunpack.c.l.b16 %v122
    %v1126 = vunpack.c.h.b16 %v122
    %v1127 = vunpack.c.l.b16 %v123
    %v1128 = vunpack.c.h.b16 %v123
    %v1129 = vunpack.c.l.b16 %v124
    %v1130 = vunpack.c.h.b16 %v124
    %v1131 = vunpack.c.l.b16 %v125
    %v1132 = vunpack.c.h.b16 %v125
    %v1133 = vunpack.c.l.b16 %v126
    %v1134 = vunpack.c.h.b16 %v126
    %v1135 = vunpack.c.l.b16 %v127
    %v1136 = vunpack.c.h.b16 %v127
    %v1137 = vunpack.c.l.b16 %v128
    %v1138 = vunpack.c.h.b16 %v128
    %v1139 = vunpack.c.l.b16 %v129
    %v1140 = vunpack.c.h.b16 %v129
    %v1141 = vunpack.c.l.b16 %v130
    %v1142 = vunpack.c.h.b16 %v130
    %v1143 = vunpack.c.l.b16 %v131
    %v1144 = vunpack.c.h.b16 %v131
    %v1145 = vunpack.c.l.b16 %v132
    %v1146 = vunpack.c.h.b16 %v132
    %v1147 = vunpack.c.l.b16 %v133
    %v1148 = vunpack.c.h.b16 %v133
    %v1149 = vunpack.c.l.b16 %v134
    %v1150 = vunpack.c.h.b16 %v134
    %v1151 = vunpack.c.l.b16 %v135
    %v1152 = vunpack.c.h.b16 %v135
    %v1153 = vunpack.c.l.b16 %v136
    %v1154 = vunpack.c.h.b16 %v136
    %v1155 = vunpack.c.l.b16 %v137
    %v1156 = vunpack.c.h.b16 %v137
    %v1157 = vunpack.c.l.b16 %v138
    %v1158 = vunpack.c.h.b16 %v138
    %v1159 = vunpack.c.l.b16 %v139
    %v1160 = vunpack.c.h.b16 %v139
    %v1161 = vunpack.c.l.b16 %v140
    %v1162 = vunpack.c.h.b16 %v140
    %v1163 = vunpack.c.l.b16 %v141
    %v1164 = vunpack.c.h.b16 %v141
    %v1165 = vunpack.c.l.b16 %v142
    %v1166 = vunpack.c.h.b16 %v142
    %v1167 = vunpack.c.l.b16 %v143
    %v1168 = vunpack.c.h.b16 %v143
    %v1169 = vunpack.c.l.b16 %v144
    %v1170 = vunpack.c.h.b16 %v144
    %v1171 = vunpack.c.l.b16 %v145
    %v1172 = vunpack.c.h.b16 %v145
    %v1173 = vunpack.c.l.b16 %v146
    %v1174 = vunpack.c.h.b16 %v146
    %v1175 = vunpack.c.l.b16 %v147
    %v1176 = vunpack.c.h.b16 %v147
    %v1177 = vunpack.c.l.b16 %v148
    %v1178 = vunpack.c.h.b16 %v148
    %v1179 = vunpack.c.l.b16 %v149
    %v1180 = vunpack.c.h.b16 %v149
    %v1181 = vunpack.c.l.b16 %v150
    %v1182 = vunpack.c.h.b16 %v150
    %v1183 = vunpack.c.l.b16 %v151
    %v1184 = vunpack.c.h.b16 %v151
    %v1185 = vunpack.c.l.b16 %v152
    %v1186 = vunpack.c.h.b16 %v152
    %v1187 = vunpack.c.l.b16 %v153
    %v1188 = vunpack.c.h.b16 %v153
    %v1189 = vunpack.c.l.b16 %v154
    %v1190 = vunpack.c.h.b16 %v154
    %v1191 = vunpack.c.l.b16 %v155
    %v1192 = vunpack.c.h.b16 %v155
    %v1193 = vunpack.c.l.b16 %v156
    %v1194 = vunpack.c.h.b16 %v156
    %v1195 = vunpack.c.l.b16 %v157
    %v1196 = vunpack.c.h.b16 %v157
    %v1197 = vunpack.c.l.b16 %v158
    %v1198 = vunpack.c.h.b16 %v158
    %v1199 = vunpack.c.l.b16 %v159
    %v1200 = vunpack.c.h.b16 %v159
    %v1201 = vunpack.c.l.b16 %v160
    %v1202 = vunpack.c.h.b16 %v160
    %v1203 = vunpack.c.l.b16 %v161
    %v1204 = vunpack.c.h.b16 %v161
    %v1205 = vunpack.c.l.b16 %v162
    %v1206 = vunpack.c.h.b16 %v162
    %v1207 = vunpack.c.l.b16 %v163
    %v1208 = vunpack.c.h.b16 %v163
    %v1209 = vunpack.c.l.b16 %v164
    %v1210 = vunpack.c.h.b16 %v164
    %v1211 = vunpack.c.l.b16 %v165
    %v1212 = vunpack.c.h.b16 %v165
    %v1213 = vunpack.c.l.b16 %v166
    %v1214 = vunpack.c.h.b16 %v166
    %v1215 = vunpack.c.l.b16 %v167
    %v1216 = vunpack.c.h.b16 %v167
    %v1217 = vunpack.c.l.b16 %v168
    %v1218 = vunpack.c.h.b16 %v168
    %v1219 = vunpack.c.l.b16 %v169
    %v1220 = vunpack.c.h.b16 %v169
    %v1221 = vunpack.c.l.b16 %v170
    %v1222 = vunpack.c.h.b16 %v170
    %v1223 = vunpack.c.l.b16 %v171
    %v1224 = vunpack.c.h.b16 %v171
    %v1225 = vunpack.c.l.b16 %v172
    %v1226 = vunpack.c.h.b16 %v172
    %v1227 = vunpack.c.l.b16 %v173
    %v1228 = vunpack.c.h.b16 %v173
    %v1229 = vunpack.c.l.b16 %v174
    %v1230 = vunpack.c.h.b16 %v174
    %v1231 = vunpack.c.l.b16 %v175
    %v1232 = vunpack.c.h.b16 %v175
    %v1233 = vunpack.c.l.b16 %v176
    %v1234 = vunpack.c.h.b16 %v176
    %v1235 = vunpack.c.l.b16 %v177
    %v1236 = vunpack.c.h.b16 %v177
    %v1237 = vunpack.c.l.b16 %v178
    %v1238 = vunpack.c.h.b16 %v178
    %v1239 = vunpack.c.l.b16 %v179
    %v1240 = vunpack.c.h.b16 %v179
    %v1241 = vunpack.c.l.b16 %v180
    %v1242 = vunpack.c.h.b16 %v180
    %v1243 = vunpack.c.l.b16 %v181
    %v1244 = vunpack.c.h.b16 %v181
    %v1245 = vunpack.c.l.b16 %v182
    %v1246 = vunpack.c.h.b16 %v182
    %v1247 = vunpack.c.l.b16 %v183
    %v1248 = vunpack.c.h.b16 %v183
    %v1249 = vunpack.c.l.b16 %v184
    %v1250 = vunpack.c.h.b16 %v184
    %v1251 = vunpack.c.l.b16 %v185
    %v1252 = vunpack.c.h.b16 %v185
    %v1253 = vunpack.c.l.b16 %v186
    %v1254 = vunpack.c.h.b16 %v186
    %v1255 = vunpack.c.l.b16 %v187
    %v1256 = vunpack.c.h.b16 %v187
    %v1257 = vunpack.c.l.b16 %v188
    %v1258 = vunpack.c.h.b16 %v188
    %v1259 = vunpack.c.l.b16 %v189
    %v1260 = vunpack.c.h.b16 %v189
    %v1261 = vunpack.c.l.b16 %v190
    %v1262 = vunpack.c.h.b16 %v190
    %v1263 = vunpack.c.l.b16 %v191
    %v1264 = vunpack.c.h.b16 %v191
    %v1265 = vunpack.c.l.b16 %v192
    %v1266 = vunpack.c.h.b16 %v192
    %v1267 = vunpack.c.l.b16 %v193
    %v1268 = vunpack.c.h.b16 %v193
    %v1269 = vunpack.c.l.b16 %v194
    %v1270 = vunpack.c.h.b16 %v194
    %v1271 = vunpack.c.l.b16 %v195
    %v1272 = vunpack.c.h.b16 %v195
    %v1273 = vunpack.c.l.b16 %v196
    %v1274 = vunpack.c.h.b16 %v196
    %v1275 = vunpack.c.l.b16 %v197
    %v1276 = vunpack.c.h.b16 %v197
    %v1277 = vunpack.c.l.b16 %v198
    %v1278 = vunpack.c.h.b16 %v198
    %v1279 = vunpack.c.l.b16 %v199
    %v1280 = vunpack.c.h.b16 %v199
    %v1281 = vunpack.c.l.b16 %v200
    %v1282 = vunpack.c.h.b16 %v200
    %v1283 = vunpack.c.l.b16 %v201
    %v1284 = vunpack.c.h.b16 %v201
    %v1285 = vunpack.c.l.b16 %v202
    %v1286 = vunpack.c.h.b16 %v202
    %v1287 = vunpack.c.l.b16 %v203
    %v1288 = vunpack.c.h.b16 %v203
    %v1289 = vunpack.c.l.b16 %v204
    %v1290 = vunpack.c.h.b16 %v204
    %v1291 = vunpack.c.l.b16 %v205
    %v1292 = vunpack.c.h.b16 %v205
    %v1293 = vunpack.c.l.b16 %v206
    %v1294 = vunpack.c.h.b16 %v206
    %v1295 = vunpack.c.l.b16 %v207
    %v1296 = vunpack.c.h.b16 %v207
    %v1297 = vunpack.c.l.b16 %v208
    %v1298 = vunpack.c.h.b16 %v208
    %v1299 = vunpack.c.l.b16 %v209
    %v1300 = vunpack.c.h.b16 %v209
    %v1301 = vunpack.c.l.b16 %v210
    %v1302 = vunpack.c.h.b16 %v210
    %v1303 = vunpack.c.l.b16 %v211
    %v1304 = vunpack.c.h.b16 %v211
    %v1305 = vunpack.c.l.b16 %v212
    %v1306 = vunpack.c.h.b16 %v212
    %v1307 = vunpack.c.l.b16 %v213
    %v1308 = vunpack.c.h.b16 %v213
    %v1309 = vunpack.c.l.b16 %v214
    %v1310 = vunpack.c.h.b16 %v214
    %v1311 = vunpack.c.l.b16 %v215
    %v1312 = vunpack.c.h.b16 %v215
    %v1313 = vunpack.c.l.b16 %v216
    %v1314 = vunpack.c.h.b16 %v216
    %v1315 = vunpack.c.l.b16 %v217
    %v1316 = vunpack.c.h.b16 %v217
    %v1317 = vunpack.c.l.b16 %v218
    %v1318 = vunpack.c.h.b16 %v218
    %v1319 = vunpack.c.l.b16 %v219
    %v1320 = vunpack.c.h.b16 %v219
    %v1321 = vunpack.c.l.b16 %v220
    %v1322 = vunpack.c.h.b16 %v220
    %v1323 = vunpack.c.l.b16 %v221
    %v1324 = vunpack.c.h.b16 %v221
    %v1325 = vunpack.c.l.b16 %v222
    %v1326 = vunpack.c.h.b16 %v222
    %v1327 = vunpack.c.l.b16 %v223
    %v1328 = vunpack.c.h.b16 %v223
    %v1329 = vunpack.c.l.b16 %v224
    %v1330 = vunpack.c.h.b16 %v224
    %v1331 = vunpack.c.l.b16 %v225
    %v1332 = vunpack.c.h.b16 %v225
    %v1333 = vunpack.c.l.b16 %v226
    %v1334 = vunpack.c.h.b16 %v226
    %v1335 = vunpack.c.l.b16 %v227
    %v1336 = vunpack.c.h.b16 %v227
    %v1337 = vunpack.c.l.b16 %v228
    %v1338 = vunpack.c.h.b16 %v228
    %v1339 = vunpack.c.l.b16 %v229
    %v1340 = vunpack.c.h.b16 %v229
    %v1341 = vunpack.c.l.b16 %v230
    %v1342 = vunpack.c.h.b16 %v230
    %v1343 = vunpack.c.l.b16 %v231
    %v1344 = vunpack.c.h.b16 %v231
    %v1345 = vunpack.c.l.b16 %v232
    %v1346 = vunpack.c.h.b16 %v232
    %v1347 = vunpack.c.l.b16 %v233
    %v1348 = vunpack.c.h.b16 %v233
    %v1349 = vunpack.c.l.b16 %v234
    %v1350 = vunpack.c.h.b16 %v234
    %v1351 = vunpack.c.l.b16 %v235
    %v1352 = vunpack.c.h.b16 %v235
    %v1353 = vunpack.c.l.b16 %v236
    %v1354 = vunpack.c.h.b16 %v236
    %v1355 = vunpack.c.l.b16 %v237
    %v1356 = vunpack.c.h.b16 %v237
    %v1357 = vunpack.c.l.b16 %v238
    %v1358 = vunpack.c.h.b16 %v238
    %v1359 = vunpack.c.l.b16 %v239
    %v1360 = vunpack.c.h.b16 %v239
    %v1361 = vunpack.c.l.b16 %v240
    %v1362 = vunpack.c.h.b16 %v240
    %v1363 = vunpack.c.l.b16 %v241
    %v1364 = vunpack.c.h.b16 %v241
    %v1365 = vunpack.c.l.b16 %v242
    %v1366 = vunpack.c.h.b16 %v242
    %v1367 = vunpack.c.l.b16 %v243
    %v1368 = vunpack.c.h.b16 %v243
    %v1369 = vunpack.c.l.b16 %v244
    %v1370 = vunpack.c.h.b16 %v244
    %v1371 = vunpack.c.l.b16 %v245
    %v1372 = vunpack.c.h.b16 %v245
    %v1373 = vunpack.c.l.b16 %v246
    %v1374 = vunpack.c.h.b16 %v246
    %v1375 = vunpack.c.l.b16 %v247
    %v1376 = vunpack.c.h.b16 %v247
    %v1377 = vunpack.c.l.b16 %v248
    %v1378 = vunpack.c.h.b16 %v248
    %v1379 = vunpack.c.l.b16 %v249
    %v1380 = vunpack.c.h.b16 %v249
    %v1381 = vunpack.c.l.b16 %v250
    %v1382 = vunpack.c.h.b16 %v250
    %v1383 = vunpack.c.l.b16 %v251
    %v1384 = vunpack.c.h.b16 %v251
    %v1385 = vunpack.c.l.b16 %v252
    %v1386 = vunpack.c.h.b16 %v252
    %v1387 = vunpack.c.l.b16 %v253
    %v1388 = vunpack.c.h.b16 %v253
    %v1389 = vunpack.c.l.b16 %v254
    %v1390 = vunpack.c.h.b16 %v254
    %v1391 = vunpack.c.l.b16 %v255
    %v1392 = vunpack.c.h.b16 %v255
    %v1393 = vunpack.c.l.b16 %v256
    %v1394 = vunpack.c.h.b16 %v256
    %v1395 = vunpack.c.l.b16 %v257
    %v1396 = vunpack.c.h.b16 %v257
    %v1397 = vunpack.c.l.b16 %v258
    %v1398 = vunpack.c.h.b16 %v258
    %v1399 = vunpack.c.l.b16 %v259
    %v1400 = vunpack.c.h.b16 %v259
    %v1401 = vunpack.c.l.b16 %v260
    %v1402 = vunpack.c.h.b16 %v260
    %v1403 = vunpack.c.l.b16 %v261
    %v1404 = vunpack.c.h.b16 %v261
    %v1405 = vunpack.c.l.b16 %v262
    %v1406 = vunpack.c.h.b16 %v262
    %v1407 = vunpack.c.l.b16 %v263
    %v1408 = vunpack.c.h.b16 %v263
    %v1409 = vunpack.c.l.b16 %v264
    %v1410 = vunpack.c.h.b16 %v264
    %v1411 = vunpack.c.l.b16 %v265
    %v1412 = vunpack.c.h.b16 %v265
    %v1413 = vunpack.c.l.b16 %v266
    %v1414 = vunpack.c.h.b16 %v266
    %v1415 = vunpack.c.l.b16 %v267
    %v1416 = vunpack.c.h.b16 %v267
    %v1417 = vunpack.c.l.b16 %v268
    %v1418 = vunpack.c.h.b16 %v268
    %v1419 = vunpack.c.l.b16 %v269
    %v1420 = vunpack.c.h.b16 %v269
    %v1421 = vunpack.c.l.b16 %v270
    %v1422 = vunpack.c.h.b16 %v270
    %v1423 = vunpack.c.l.b16 %v271
    %v1424 = vunpack.c.h.b16 %v271
    %v1425 = vunpack.c.l.b16 %v272
    %v1426 = vunpack.c.h.b16 %v272
    %v1427 = vunpack.c.l.b16 %v273
    %v1428 = vunpack.c.h.b16 %v273
    %v1429 = vunpack.c.l.b16 %v274
    %v1430 = vunpack.c.h.b16 %v274
    %v1431 = vunpack.c.l.b16 %v275
    %v1432 = vunpack.c.h.b16 %v275
    %v1433 = vunpack.c.l.b16 %v276
    %v1434 = vunpack.c.h.b16 %v276
    %v1435 = vunpack.c.l.b16 %v277
    %v1436 = vunpack.c.h.b16 %v277
    %v1437 = vunpack.c.l.b16 %v278
    %v1438 = vunpack.c.h.b16 %v278
    %v1439 = vunpack.c.l.b16 %v279
    %v1440 = vunpack.c.h.b16 %v279
    %v1441 = vunpack.c.l.b16 %v280
    %v1442 = vunpack.c.h.b16 %v280
    %v1443 = vunpack.c.l.b16 %v281
    %v1444 = vunpack.c.h.b16 %v281
    %v1445 = vunpack.c.l.b16 %v282
    %v1446 = vunpack.c.h.b16 %v282
    %v1447 = vunpack.c.l.b16 %v283
    %v1448 = vunpack.c.h.b16 %v283
    %v1449 = vunpack.c.l.b16 %v284
    %v1450 = vunpack.c.h.b16 %v284
    %v1451 = vunpack.c.l.b16 %v285
    %v1452 = vunpack.c.h.b16 %v285
    %v1453 = vunpack.c.l.b16 %v286
    %v1454 = vunpack.c.h.b16 %v286
    %v1455 = vunpack.c.l.b16 %v287
    %v1456 = vunpack.c.h.b16 %v287
    %v1457 = vunpack.c.l.b16 %v288
    %v1458 = vunpack.c.h.b16 %v288
    %v1459 = vunpack.c.l.b16 %v289
    %v1460 = vunpack.c.h.b16 %v289
    %v1461 = vunpack.c.l.b16 %v290
    %v1462 = vunpack.c.h.b16 %v290
    %v1463 = vunpack.c.l.b16 %v291
    %v1464 = vunpack.c.h.b16 %v291
    %v1465 = vunpack.c.l.b16 %v292
    %v1466 = vunpack.c.h.b16 %v292
    %v1467 = vunpack.c.l.b16 %v293
    %v1468 = vunpack.c.h.b16 %v293
    %v1469 = vunpack.c.l.b16 %v294
    %v1470 = vunpack.c.h.b16 %v294
    %v1471 = vunpack.c.l.b16 %v295
    %v1472 = vunpack.c.h.b16 %v295
    %v1473 = vunpack.c.l.b16 %v296
    %v1474 = vunpack.c.h.b16 %v296
    %v1475 = vunpack.c.l.b16 %v297
    %v1476 = vunpack.c.h.b16 %v297
    %v1477 = vunpack.c.l.b16 %v298
    %v1478 = vunpack.c.h.b16 %v298
    %v1479 = vunpack.c.l.b16 %v299
    %v1480 = vunpack.c.h.b16 %v299
    %v1481 = vunpack.c.l.b16 %v300
    %v1482 = vunpack.c.h.b16 %v300
    %v1483 = vunpack.c.l.b16 %v301
    %v1484 = vunpack.c.h.b16 %v301
    %v1485 = vunpack.c.l.b16 %v302
    %v1486 = vunpack.c.h.b16 %v302
    %v1487 = vunpack.c.l.b16 %v303
    %v1488 = vunpack.c.h.b16 %v303
    %v1489 = vunpack.c.l.b16 %v304
    %v1490 = vunpack.c.h.b16 %v304
    %v1491 = vunpack.c.l.b16 %v305
    %v1492 = vunpack.c.h.b16 %v305
    %v1493 = vunpack.c.l.b16 %v306
    %v1494 = vunpack.c.h.b16 %v306
    %v1495 = vunpack.c.l.b16 %v307
    %v1496 = vunpack.c.h.b16 %v307
    %v1497 = vunpack.c.l.b16 %v308
    %v1498 = vunpack.c.h.b16 %v308
    %v1499 = vunpack.c.l.b16 %v309
    %v1500 = vunpack.c.h.b16 %v309
    %v1501 = vunpack.c.l.b16 %v310
    %v1502 = vunpack.c.h.b16 %v310
    %v1503 = vunpack.c.l.b16 %v311
    %v1504 = vunpack.c.h.b16 %v311
    %v1505 = vunpack.c.l.b16 %v312
    %v1506 = vunpack.c.h.b16 %v312
    %v1507 = vunpack.c.l.b16 %v313
    %v1508 = vunpack.c.h.b16 %v313
    %v1509 = vunpack.c.l.b16 %v314
    %v1510 = vunpack.c.h.b16 %v314
    %v1511 = vunpack.c.l.b16 %v315
    %v1512 = vunpack.c.h.b16 %v315
    %v1513 = vunpack.c.l.b16 %v316
    %v1514 = vunpack.c.h.b16 %v316
    %v1515 = vunpack.c.l.b16 %v317
    %v1516 = vunpack.c.h.b16 %v317
    %v1517 = vunpack.c.l.b16 %v318
    %v1518 = vunpack.c.h.b16 %v318
    %v1519 = vunpack.c.l.b16 %v319
    %v1520 = vunpack.c.h.b16 %v319
    %v1521 = vunpack.c.l.b16 %v320
    %v1522 = vunpack.c.h.b16 %v320
    %v1523 = vunpack.c.l.b16 %v321
    %v1524 = vunpack.c.h.b16 %v321
    %v1525 = vunpack.c.l.b16 %v322
    %v1526 = vunpack.c.h.b16 %v322
    %v1527 = vunpack.c.l.b16 %v323
    %v1528 = vunpack.c.h.b16 %v323
    %v1529 = vunpack.c.l.b16 %v324
    %v1530 = vunpack.c.h.b16 %v324
    %v1531 = vunpack.c.l.b16 %v325
    %v1532 = vunpack.c.h.b16 %v325
    %v1533 = vunpack.c.l.b16 %v326
    %v1534 = vunpack.c.h.b16 %v326
    %v1535 = vunpack.c.l.b16 %v327
    %v1536 = vunpack.c.h.b16 %v327
    %v1537 = vunpack.c.l.b16 %v328
    %v1538 = vunpack.c.h.b16 %v328
    %v1539 = vunpack.c.l.b16 %v329
    %v1540 = vunpack.c.h.b16 %v329
    %v1541 = vunpack.c.l.b16 %v330
    %v1542 = vunpack.c.h.b16 %v330
    %v1543 = vunpack.c.l.b16 %v331
    %v1544 = vunpack.c.h.b16 %v331
    %v1545 = vunpack.c.l.b16 %v332
    %v1546 = vunpack.c.h.b16 %v332
    %v1547 = vunpack.c.l.b16 %v333
    %v1548 = vunpack.c.h.b16 %v333
    %v1549 = vunpack.c.l.b16 %v334
    %v1550 = vunpack.c.h.b16 %v334
    %v1551 = vunpack.c.l.b16 %v335
    %v1552 = vunpack.c.h.b16 %v335
    %v1553 = vpack.c.b16 %v1169, %v1041
    %v1554 = vpack.c.b16 %v1170, %v1042
    %v1555 = vpack.c.b16 %v1171, %v1043
    %v1556 = vpack.c.b16 %v1172, %v1044
    %v1557 = vpack.c.b16 %v1173, %v1045
    %v1558 = vpack.c.b16 %v1174, %v1046
    %v1559 = vpack.c.b16 %v1175, %v1047
    %v1560 = vpack.c.b16 %v1176, %v1048
    %v1561 = vpack.c.b16 %v1177, %v1049
    %v1562 = vpack.c.b16 %v1178, %v1050
    %v1563 = vpack.c.b16 %v1179, %v1051
    %v1564 = vpack.c.b16 %v1180, %v1052
    %v1565 = vpack.c.b16 %v1181, %v1053
    %v1566 = vpack.c.b16 %v1182, %v1054
    %v1567 = vpack.c.b16 %v1183, %v1055
    %v1568 = vpack.c.b16 %v1184, %v1056
    %v1569 = vpack.c.b16 %v1185, %v1057
    %v1570 = vpack.c.b16 %v1186, %v1058
    %v1571 = vpack.c.b16 %v1187, %v1059
    %v1572 = vpack.c.b16 %v1188, %v1060
    %v1573 = vpack.c.b16 %v1189, %v1061
    %v1574 = vpack.c.b16 %v1190, %v1062
    %v1575 = vpack.c.b16 %v1191, %v1063
    %v1576 = vpack.c.b16 %v1192, %v1064
    %v1577 = vpack.c.b16 %v1193, %v1065
    %v1578 = vpack.c.b16 %v1194, %v1066
    %v1579 = vpack.c.b16 %v1195, %v1067
    %v1580 = vpack.c.b16 %v1196, %v1068
    %v1581 = vpack.c.b16 %v1197, %v1069
    %v1582 = vpack.c.b16 %v1198, %v1070
    %v1583 = vpack.c.b16 %v1199, %v1071
    %v1584 = vpack.c.b16 %v1200, %v1072
    %v1585 = vpack.c.b16 %v1201, %v1073
    %v1586 = vpack.c.b16 %v1202, %v1074
    %v1587 = vpack.c.b16 %v1203, %v1075
    %v1588 = vpack.c.b16 %v1204, %v1076
    %v1589 = vpack.c.b16 %v1205, %v1077
    %v1590 = vpack.c.b16 %v1206, %v1078
    %v1591 = vpack.c.b16 %v1207, %v1079
    %v1592 = vpack.c.b16 %v1208, %v1080
    %v1593 = vpack.c.b16 %v1209, %v1081
    %v1594 = vpack.c.b16 %v1210, %v1082
    %v1595 = vpack.c.b16 %v1211, %v1083
    %v1596 = vpack.c.b16 %v1212, %v1084
    %v1597 = vpack.c.b16 %v1213, %v1085
    %v1598 = vpack.c.b16 %v1214, %v1086
    %v1599 = vpack.c.b16 %v1215, %v1087
    %v1600 = vpack.c.b16 %v1216, %v1088
    %v1601 = vpack.c.b16 %v1217, %v1089
    %v1602 = vpack.c.b16 %v1218, %v1090
    %v1603 = vpack.c.b16 %v1219, %v1091
    %v1604 = vpack.c.b16 %v1220, %v1092
    %v1605 = vpack.c.b16 %v1221, %v1093
    %v1606 = vpack.c.b16 %v1222, %v1094
    %v1607 = vpack.c.b16 %v1223, %v1095
    %v1608 = vpack.c.b16 %v1224, %v1096
    %v1609 = vpack.c.b16 %v1225, %v1097
    %v1610 = vpack.c.b16 %v1226, %v1098
    %v1611 = vpack.c.b16 %v1227, %v1099
    %v1612 = vpack.c.b16 %v1228, %v1100
    %v1613 = vpack.c.b16 %v1229, %v1101
    %v1614 = vpack.c.b16 %v1230, %v1102
    %v1615 = vpack.c.b16 %v1231, %v1103
    %v1616 = vpack.c.b16 %v1232, %v1104
    %v1617 = vpack.c.b16 %v1233, %v1105
    %v1618 = vpack.c.b16 %v1234, %v1106
    %v1619 = vpack.c.b16 %v1235, %v1107
    %v1620 = vpack.c.b16 %v1236, %v1108
    %v1621 = vpack.c.b16 %v1237, %v1109
    %v1622 = vpack.c.b16 %v1238, %v1110
    %v1623 = vpack.c.b16 %v1239, %v1111
    %v1624 = vpack.c.b16 %v1240, %v1112
    %v1625 = vpack.c.b16 %v1241, %v1113
    %v1626 = vpack.c.b16 %v1242, %v1114
    %v1627 = vpack.c.b16 %v1243, %v1115
    %v1628 = vpack.c.b16 %v1244, %v1116
    %v1629 = vpack.c.b16 %v1245, %v1117
    %v1630 = vpack.c.b16 %v1246, %v1118
    %v1631 = vpack.c.b16 %v1247, %v1119
    %v1632 = vpack.c.b16 %v1248, %v1120
    %v1633 = vpack.c.b16 %v1249, %v1121
    %v1634 = vpack.c.b16 %v1250, %v1122
    %v1635 = vpack.c.b16 %v1251, %v1123
    %v1636 = vpack.c.b16 %v1252, %v1124
    %v1637 = vpack.c.b16 %v1253, %v1125
    %v1638 = vpack.c.b16 %v1254, %v1126
    %v1639 = vpack.c.b16 %v1255, %v1127
    %v1640 = vpack.c.b16 %v1256, %v1128
    %v1641 = vpack.c.b16 %v1257, %v1129
    %v1642 = vpack.c.b16 %v1258, %v1130
    %v1643 = vpack.c.b16 %v1259, %v1131
    %v1644 = vpack.c.b16 %v1260, %v1132
    %v1645 = vpack.c.b16 %v1261, %v1133
    %v1646 = vpack.c.b16 %v1262, %v1134
    %v1647 = vpack.c.b16 %v1263, %v1135
    %v1648 = vpack.c.b16 %v1264, %v1136
    %v1649 = vpack.c.b16 %v1265, %v1137
    %v1650 = vpack.c.b16 %v1266, %v1138
    %v1651 = vpack.c.b16 %v1267, %v1139
    %v1652 = vpack.c.b16 %v1268, %v1140
    %v1653 = vpack.c.b16 %v1269, %v1141
    %v1654 = vpack.c.b16 %v1270, %v1142
    %v1655 = vpack.c.b16 %v1271, %v1143
    %v1656 = vpack.c.b16 %v1272, %v1144
    %v1657 = vpack.c.b16 %v1273, %v1145
    %v1658 = vpack.c.b16 %v1274, %v1146
    %v1659 = vpack.c.b16 %v1275, %v1147
    %v1660 = vpack.c.b16 %v1276, %v1148
    %v1661 = vpack.c.b16 %v1277, %v1149
    %v1662 = vpack.c.b16 %v1278, %v1150
    %v1663 = vpack.c.b16 %v1279, %v1151
    %v1664 = vpack.c.b16 %v1280, %v1152
    %v1665 = vpack.c.b16 %v1281, %v1153
    %v1666 = vpack.c.b16 %v1282, %v1154
    %v1667 = vpack.c.b16 %v1283, %v1155
    %v1668 = vpack.c.b16 %v1284, %v1156
    %v1669 = vpack.c.b16 %v1285, %v1157
    %v1670 = vpack.c.b16 %v1286, %v1158
    %v1671 = vpack.c.b16 %v1287, %v1159
    %v1672 = vpack.c.b16 %v1288, %v1160
    %v1673 = vpack.c.b16 %v1289, %v1161
    %v1674 = vpack.c.b16 %v1290, %v1162
    %v1675 = vpack.c.b16 %v1291, %v1163
    %v1676 = vpack.c.b16 %v1292, %v1164
    %v1677 = vpack.c.b16 %v1293, %v1165
    %v1678 = vpack.c.b16 %v1294, %v1166
    %v1679 = vpack.c.b16 %v1295, %v1167
    %v1680 = vpack.c.b16 %v1296, %v1168
    %v1681 = vpack.c.b16 %v1425, %v1297
    %v1682 = vpack.c.b16 %v1426, %v1298
    %v1683 = vpack.c.b16 %v1427, %v1299
    %v1684 = vpack.c.b16 %v1428, %v1300
    %v1685 = vpack.c.b16 %v1429, %v1301
    %v1686 = vpack.c.b16 %v1430, %v1302
    %v1687 = vpack.c.b16 %v1431, %v1303
    %v1688 = vpack.c.b16 %v1432, %v1304
    %v1689 = vpack.c.b16 %v1433, %v1305
    %v1690 = vpack.c.b16 %v1434, %v1306
    %v1691 = vpack.c.b16 %v1435, %v1307
    %v1692 = vpack.c.b16 %v1436, %v1308
    %v1693 = vpack.c.b16 %v1437, %v1309
    %v1694 = vpack.c.b16 %v1438, %v1310
    %v1695 = vpack.c.b16 %v1439, %v1311
    %v1696 = vpack.c.b16 %v1440, %v1312
    %v1697 = vpack.c.b16 %v1441, %v1313
    %v1698 = vpack.c.b16 %v1442, %v1314
    %v1699 = vpack.c.b16 %v1443, %v1315
    %v1700 = vpack.c.b16 %v1444, %v1316
    %v1701 = vpack.c.b16 %v1445, %v1317
    %v1702 = vpack.c.b16 %v1446, %v1318
    %v1703 = vpack.c.b16 %v1447, %v1319
    %v1704 = vpack.c.b16 %v1448, %v1320
    %v1705 = vpack.c.b16 %v1449, %v1321
    %v1706 = vpack.c.b16 %v1450, %v1322
    %v1707 = vpack.c.b16 %v1451, %v1323
    %v1708 = vpack.c.b16 %v1452, %v1324
    %v1709 = vpack.c.b16 %v1453, %v1325
    %v1710 = vpack.c.b16 %v1454, %v1326
    %v1711 = vpack.c.b16 %v1455, %v1327
    %v1712 = vpack.c.b16 %v1456, %v1328
    %v1713 = vpack.c.b16 %v1457, %v1329
    %v1714 = vpack.c.b16 %v1458, %v1330
    %v1715 = vpack.c.b16 %v1459, %v1331
    %v1716 = vpack.c.b16 %v1460, %v1332
    %v1717 = vpack.c.b16 %v1461, %v1333
    %v1718 = vpack.c.b16 %v1462, %v1334
    %v1719 = vpack.c.b16 %v1463, %v1335
    %v1720 = vpack.c.b16 %v1464, %v1336
    %v1721 = vpack.c.b16 %v1465, %v1337
    %v1722 = vpack.c.b16 %v1466, %v1338
    %v1723 = vpack.c.b16 %v1467, %v1339
    %v1724 = vpack.c.b16 %v1468, %v1340
    %v1725 = vpack.c.b16 %v1469, %v1341
    %v1726 = vpack.c.b16 %v1470, %v1342
    %v1727 = vpack.c.b16 %v1471, %v1343
    %v1728 = vpack.c.b16 %v1472, %v1344
    %v1729 = vpack.c.b16 %v1473, %v1345
    %v1730 = vpack.c.b16 %v1474, %v1346
    %v1731 = vpack.c.b16 %v1475, %v1347
    %v1732 = vpack.c.b16 %v1476, %v1348
    %v1733 = vpack.c.b16 %v1477, %v1349
    %v1734 = vpack.c.b16 %v1478, %v1350
    %v1735 = vpack.c.b16 %v1479, %v1351
    %v1736 = vpack.c.b16 %v1480, %v1352
    %v1737 = vpack.c.b16 %v1481, %v1353
    %v1738 = vpack.c.b16 %v1482, %v1354
    %v1739 = vpack.c.b16 %v1483, %v1355
    %v1740 = vpack.c.b16 %v1484, %v1356
    %v1741 = vpack.c.b16 %v1485, %v1357
    %v1742 = vpack.c.b16 %v1486, %v1358
    %v1743 = vpack.c.b16 %v1487, %v1359
    %v1744 = vpack.c.b16 %v1488, %v1360
    %v1745 = vpack.c.b16 %v1489, %v1361
    %v1746 = vpack.c.b16 %v1490, %v1362
    %v1747 = vpack.c.b16 %v1491, %v1363
    %v1748 = vpack.c.b16 %v1492, %v1364
    %v1749 = vpack.c.b16 %v1493, %v1365
    %v1750 = vpack.c.b16 %v1494, %v1366
    %v1751 = vpack.c.b16 %v1495, %v1367
    %v1752 = vpack.c.b16 %v1496, %v1368
    %v1753 = vpack.c.b16 %v1497, %v1369
    %v1754 = vpack.c.b16 %v1498, %v1370
    %v1755 = vpack.c.b16 %v1499, %v1371
    %v1756 = vpack.c.b16 %v1500, %v1372
    %v1757 = vpack.c.b16 %v1501, %v1373
    %v1758 = vpack.c.b16 %v1502, %v1374
    %v1759 = vpack.c.b16 %v1503, %v1375
    %v1760 = vpack.c.b16 %v1504, %v1376
    %v1761 = vpack.c.b16 %v1505, %v1377
    %v1762 = vpack.c.b16 %v1506, %v1378
    %v1763 = vpack.c.b16 %v1507, %v1379
    %v1764 = vpack.c.b16 %v1508, %v1380
    %v1765 = vpack.c.b16 %v1509, %v1381
    %v1766 = vpack.c.b16 %v1510, %v1382
    %v1767 = vpack.c.b16 %v1511, %v1383
    %v1768 = vpack.c.b16 %v1512, %v1384
    %v1769 = vpack.c.b16 %v1513, %v1385
    %v1770 = vpack.c.b16 %v1514, %v1386
    %v1771 = vpack.c.b16 %v1515, %v1387
    %v1772 = vpack.c.b16 %v1516, %v1388
    %v1773 = vpack.c.b16 %v1517, %v1389
    %v1774 = vpack.c.b16 %v1518, %v1390
    %v1775 = vpack.c.b16 %v1519, %v1391
    %v1776 = vpack.c.b16 %v1520, %v1392
    %v1777 = vpack.c.b16 %v1521, %v1393
    %v1778 = vpack.c.b16 %v1522, %v1394
    %v1779 = vpack.c.b16 %v1523, %v1395
    %v1780 = vpack.c.b16 %v1524, %v1396
    %v1781 = vpack.c.b16 %v1525, %v1397
    %v1782 = vpack.c.b16 %v1526, %v1398
    %v1783 = vpack.c.b16 %v1527, %v1399
    %v1784 = vpack.c.b16 %v1528, %v1400
    %v1785 = vpack.c.b16 %v1529, %v1401
    %v1786 = vpack.c.b16 %v1530, %v1402
    %v1787 = vpack.c.b16 %v1531, %v1403
    %v1788 = vpack.c.b16 %v1532, %v1404
    %v1789 = vpack.c.b16 %v1533, %v1405
    %v1790 = vpack.c.b16 %v1534, %v1406
    %v1791 = vpack.c.b16 %v1535, %v1407
    %v1792 = vpack.c.b16 %v1536, %v1408
    %v1793 = vpack.c.b16 %v1537, %v1409
    %v1794 = vpack.c.b16 %v1538, %v1410
    %v1795 = vpack.c.b16 %v1539, %v1411
    %v1796 = vpack.c.b16 %v1540, %v1412
    %v1797 = vpack.c.b16 %v1541, %v1413
    %v1798 = vpack.c.b16 %v1542, %v1414
    %v1799 = vpack.c.b16 %v1543, %v1415
    %v1800 = vpack.c.b16 %v1544, %v1416
    %v1801 = vpack.c.b16 %v1545, %v1417
    %v1802 = vpack.c.b16 %v1546, %v1418
    %v1803 = vpack.c.b16 %v1547, %v1419
    %v1804 = vpack.c.b16 %v1548, %v1420
    %v1805 = vpack.c.b16 %v1549, %v1421
    %v1806 = vpack.c.b16 %v1550, %v1422
    %v1807 = vpack.c.b16 %v1551, %v1423
    %v1808 = vpack.c.b16 %v1552, %v1424
    %2065 = vmatprep.subr.bf16.mxu0 0
    %2066 = vmatpush1.bf16.xpose.msra.mxu0 0
    %2067 = vmatprep.subr.bf16.mxu0 0
    %2068 = vmatpush1.bf16.xpose.msra.mxu0 0
    %2069 = vmatprep.subr.bf16.mxu0 0
    %2070 = vmatpush1.bf16.xpose.msra.mxu0 0
    %2071 = vmatprep.subr.bf16.mxu0 0
    %2072 = vmatpush1.bf16.xpose.msra.mxu0 0
    %2073 = vmatprep.subr.bf16.mxu0 0
    %2074 = vmatpush1.bf16.xpose.msra.mxu0 0
    %2075 = vmatprep.subr.bf16.mxu0 0
    %2076 = vmatpush1.bf16.xpose.msra.mxu0 0
    %2077 = vmatprep.subr.bf16.mxu0 %v1682
    %2078 = vmatpush1.bf16.xpose.msra.mxu0 %v1681
    %2079 = vmatprep.subr.bf16.mxu0 %v1554
    %2080 = vmatpush1.bf16.xpose.msra.mxu0 %v1553
    %2081 = vmatprep.subr.bf16.mxu0 0
    %2082 = vmatpush2.bf16.xpose.msra.mxu0 0
    %2083 = vmatprep.subr.bf16.mxu0 0
    %2084 = vmatpush2.bf16.xpose.msra.mxu0 0
    %2085 = vmatprep.subr.bf16.mxu0 0
    %2086 = vmatpush2.bf16.xpose.msra.mxu0 0
    %2087 = vmatprep.subr.bf16.mxu0 0
    %2088 = vmatpush2.bf16.xpose.msra.mxu0 0
    %2089 = vmatprep.subr.bf16.mxu0 0
    %2090 = vmatpush2.bf16.xpose.msra.mxu0 0
    %2091 = vmatprep.subr.bf16.mxu0 0
    %2092 = vmatpush2.bf16.xpose.msra.mxu0 0
    %2093 = vmatprep.subr.bf16.mxu0 0
    %2094 = vmatpush2.bf16.xpose.msra.mxu0 0
    %2095 = vmatprep.subr.bf16.mxu0 0
    %2096 = vmatpush2.bf16.xpose.msra.mxu0 0
    %2097 = vmatprep.mubr.bf16.mxu0 %v530
    %2098 = vmatmul.mubr.bf16.gmra.mxu0 %v529
    %v2099 = vpop.f32.mrf.mxu0
    %v2100 = vadd.f32 %v336, %v2099
    %v2101 = vpop.f32.mrf.mxu0
    %v2102 = vpop.f32.mrf.mxu0
    %v2103 = vpop.f32.mrf.mxu0
    %2104 = vdwg.mxu0
    %2105 = vmatprep.subr.bf16.mxu0 0
    %2106 = vmatpush1.bf16.xpose.msra.mxu0 0
    %2107 = vmatprep.subr.bf16.mxu0 0
    %2108 = vmatpush1.bf16.xpose.msra.mxu0 0
    %2109 = vmatprep.subr.bf16.mxu0 0
    %2110 = vmatpush1.bf16.xpose.msra.mxu0 0
    %2111 = vmatprep.subr.bf16.mxu0 0
    %2112 = vmatpush1.bf16.xpose.msra.mxu0 0
    %2113 = vmatprep.subr.bf16.mxu0 0
    %2114 = vmatpush1.bf16.xpose.msra.mxu0 0
    %2115 = vmatprep.subr.bf16.mxu0 0
    %2116 = vmatpush1.bf16.xpose.msra.mxu0 0
    %2117 = vmatprep.subr.bf16.mxu0 %v1684
    %2118 = vmatpush1.bf16.xpose.msra.mxu0 %v1683
    %2119 = vmatprep.subr.bf16.mxu0 %v1556
    %2120 = vmatpush1.bf16.xpose.msra.mxu0 %v1555
    %2121 = vmatprep.subr.bf16.mxu0 0
    %2122 = vmatpush2.bf16.xpose.msra.mxu0 0
    %2123 = vmatprep.subr.bf16.mxu0 0
    %2124 = vmatpush2.bf16.xpose.msra.mxu0 0
    %2125 = vmatprep.subr.bf16.mxu0 0
    %2126 = vmatpush2.bf16.xpose.msra.mxu0 0
    %2127 = vmatprep.subr.bf16.mxu0 0
    %2128 = vmatpush2.bf16.xpose.msra.mxu0 0
    %2129 = vmatprep.subr.bf16.mxu0 0
    %2130 = vmatpush2.bf16.xpose.msra.mxu0 0
    %2131 = vmatprep.subr.bf16.mxu0 0
    %2132 = vmatpush2.bf16.xpose.msra.mxu0 0
    %2133 = vmatprep.subr.bf16.mxu0 0
    %2134 = vmatpush2.bf16.xpose.msra.mxu0 0
    %2135 = vmatprep.subr.bf16.mxu0 0
    %2136 = vmatpush2.bf16.xpose.msra.mxu0 0
    %2137 = vmatprep.mubr.bf16.mxu0 %v532
    %2138 = vmatmul.mubr.bf16.gmra.mxu0 %v531
    %v2139 = vpop.f32.mrf.mxu0
    %v2140 = vadd.f32 %v2100, %v2139
    %v2141 = vpop.f32.mrf.mxu0
    %v2142 = vpop.f32.mrf.mxu0
    %v2143 = vpop.f32.mrf.mxu0
    %2144 = vdwg.mxu0
    %2145 = vmatprep.subr.bf16.mxu0 0
    %2146 = vmatpush1.bf16.xpose.msra.mxu0 0
    %2147 = vmatprep.subr.bf16.mxu0 0
    %2148 = vmatpush1.bf16.xpose.msra.mxu0 0
    %2149 = vmatprep.subr.bf16.mxu0 0
    %2150 = vmatpush1.bf16.xpose.msra.mxu0 0
    %2151 = vmatprep.subr.bf16.mxu0 0
    %2152 = vmatpush1.bf16.xpose.msra.mxu0 0
    %2153 = vmatprep.subr.bf16.mxu0 0
    %2154 = vmatpush1.bf16.xpose.msra.mxu0 0
    %2155 = vmatprep.subr.bf16.mxu0 0
    %2156 = vmatpush1.bf16.xpose.msra.mxu0 0
    %2157 = vmatprep.subr.bf16.mxu0 %v1686
    %2158 = vmatpush1.bf16.xpose.msra.mxu0 %v1685
    %2159 = vmatprep.subr.bf16.mxu0 %v1558
    %2160 = vmatpush1.bf16.xpose.msra.mxu0 %v1557
    %2161 = vmatprep.subr.bf16.mxu0 0
    %2162 = vmatpush2.bf16.xpose.msra.mxu0 0
    %2163 = vmatprep.subr.bf16.mxu0 0
    %2164 = vmatpush2.bf16.xpose.msra.mxu0 0
    %2165 = vmatprep.subr.bf16.mxu0 0
    %2166 = vmatpush2.bf16.xpose.msra.mxu0 0
    %2167 = vmatprep.subr.bf16.mxu0 0
    %2168 = vmatpush2.bf16.xpose.msra.mxu0 0
    %2169 = vmatprep.subr.bf16.mxu0 0
    %2170 = vmatpush2.bf16.xpose.msra.mxu0 0
    %2171 = vmatprep.subr.bf16.mxu0 0
    %2172 = vmatpush2.bf16.xpose.msra.mxu0 0
    %2173 = vmatprep.subr.bf16.mxu0 0
    %2174 = vmatpush2.bf16.xpose.msra.mxu0 0
    %2175 = vmatprep.subr.bf16.mxu0 0
    %2176 = vmatpush2.bf16.xpose.msra.mxu0 0
    %2177 = vmatprep.mubr.bf16.mxu0 %v534
    %2178 = vmatmul.mubr.bf16.gmra.mxu0 %v533
    %v2179 = vpop.f32.mrf.mxu0
    %v2180 = vadd.f32 %v2140, %v2179
    %v2181 = vpop.f32.mrf.mxu0
    %v2182 = vpop.f32.mrf.mxu0
    %v2183 = vpop.f32.mrf.mxu0
    %2184 = vdwg.mxu0
    %2185 = vmatprep.subr.bf16.mxu0 0
    %2186 = vmatpush1.bf16.xpose.msra.mxu0 0
    %2187 = vmatprep.subr.bf16.mxu0 0
    %2188 = vmatpush1.bf16.xpose.msra.mxu0 0
    %2189 = vmatprep.subr.bf16.mxu0 0
    %2190 = vmatpush1.bf16.xpose.msra.mxu0 0
    %2191 = vmatprep.subr.bf16.mxu0 0
    %2192 = vmatpush1.bf16.xpose.msra.mxu0 0
    %2193 = vmatprep.subr.bf16.mxu0 0
    %2194 = vmatpush1.bf16.xpose.msra.mxu0 0
    %2195 = vmatprep.subr.bf16.mxu0 0
    %2196 = vmatpush1.bf16.xpose.msra.mxu0 0
    %2197 = vmatprep.subr.bf16.mxu0 %v1688
    %2198 = vmatpush1.bf16.xpose.msra.mxu0 %v1687
    %2199 = vmatprep.subr.bf16.mxu0 %v1560
    %2200 = vmatpush1.bf16.xpose.msra.mxu0 %v1559
    %2201 = vmatprep.subr.bf16.mxu0 0
    %2202 = vmatpush2.bf16.xpose.msra.mxu0 0
    %2203 = vmatprep.subr.bf16.mxu0 0
    %2204 = vmatpush2.bf16.xpose.msra.mxu0 0
    %2205 = vmatprep.subr.bf16.mxu0 0
    %2206 = vmatpush2.bf16.xpose.msra.mxu0 0
    %2207 = vmatprep.subr.bf16.mxu0 0
    %2208 = vmatpush2.bf16.xpose.msra.mxu0 0
    %2209 = vmatprep.subr.bf16.mxu0 0
    %2210 = vmatpush2.bf16.xpose.msra.mxu0 0
    %2211 = vmatprep.subr.bf16.mxu0 0
    %2212 = vmatpush2.bf16.xpose.msra.mxu0 0
    %2213 = vmatprep.subr.bf16.mxu0 0
    %2214 = vmatpush2.bf16.xpose.msra.mxu0 0
    %2215 = vmatprep.subr.bf16.mxu0 0
    %2216 = vmatpush2.bf16.xpose.msra.mxu0 0
    %2217 = vmatprep.mubr.bf16.mxu0 %v536
    %2218 = vmatmul.mubr.bf16.gmra.mxu0 %v535
    %v2219 = vpop.f32.mrf.mxu0
    %v2220 = vadd.f32 %v2180, %v2219
    %v2221 = vpop.f32.mrf.mxu0
    %v2222 = vpop.f32.mrf.mxu0
    %v2223 = vpop.f32.mrf.mxu0
    %2224 = vdwg.mxu0
    %2225 = vmatprep.subr.bf16.mxu0 0
    %2226 = vmatpush1.bf16.xpose.msra.mxu0 0
    %2227 = vmatprep.subr.bf16.mxu0 0
    %2228 = vmatpush1.bf16.xpose.msra.mxu0 0
    %2229 = vmatprep.subr.bf16.mxu0 0
    %2230 = vmatpush1.bf16.xpose.msra.mxu0 0
    %2231 = vmatprep.subr.bf16.mxu0 0
    %2232 = vmatpush1.bf16.xpose.msra.mxu0 0
    %2233 = vmatprep.subr.bf16.mxu0 0
    %2234 = vmatpush1.bf16.xpose.msra.mxu0 0
    %2235 = vmatprep.subr.bf16.mxu0 0
    %2236 = vmatpush1.bf16.xpose.msra.mxu0 0
    %2237 = vmatprep.subr.bf16.mxu0 %v1690
    %2238 = vmatpush1.bf16.xpose.msra.mxu0 %v1689
    %2239 = vmatprep.subr.bf16.mxu0 %v1562
    %2240 = vmatpush1.bf16.xpose.msra.mxu0 %v1561
    %2241 = vmatprep.subr.bf16.mxu0 0
    %2242 = vmatpush2.bf16.xpose.msra.mxu0 0
    %2243 = vmatprep.subr.bf16.mxu0 0
    %2244 = vmatpush2.bf16.xpose.msra.mxu0 0
    %2245 = vmatprep.subr.bf16.mxu0 0
    %2246 = vmatpush2.bf16.xpose.msra.mxu0 0
    %2247 = vmatprep.subr.bf16.mxu0 0
    %2248 = vmatpush2.bf16.xpose.msra.mxu0 0
    %2249 = vmatprep.subr.bf16.mxu0 0
    %2250 = vmatpush2.bf16.xpose.msra.mxu0 0
    %2251 = vmatprep.subr.bf16.mxu0 0
    %2252 = vmatpush2.bf16.xpose.msra.mxu0 0
    %2253 = vmatprep.subr.bf16.mxu0 0
    %2254 = vmatpush2.bf16.xpose.msra.mxu0 0
    %2255 = vmatprep.subr.bf16.mxu0 0
    %2256 = vmatpush2.bf16.xpose.msra.mxu0 0
    %2257 = vmatprep.mubr.bf16.mxu0 %v538
    %2258 = vmatmul.mubr.bf16.gmra.mxu0 %v537
    %v2259 = vpop.f32.mrf.mxu0
    %v2260 = vadd.f32 %v2220, %v2259
    %v2261 = vpop.f32.mrf.mxu0
    %v2262 = vpop.f32.mrf.mxu0
    %v2263 = vpop.f32.mrf.mxu0
    %2264 = vdwg.mxu0
    %2265 = vmatprep.subr.bf16.mxu0 0
    %2266 = vmatpush1.bf16.xpose.msra.mxu0 0
    %2267 = vmatprep.subr.bf16.mxu0 0
    %2268 = vmatpush1.bf16.xpose.msra.mxu0 0
    %2269 = vmatprep.subr.bf16.mxu0 0
    %2270 = vmatpush1.bf16.xpose.msra.mxu0 0
    %2271 = vmatprep.subr.bf16.mxu0 0
    %2272 = vmatpush1.bf16.xpose.msra.mxu0 0
    %2273 = vmatprep.subr.bf16.mxu0 0
    %2274 = vmatpush1.bf16.xpose.msra.mxu0 0
    %2275 = vmatprep.subr.bf16.mxu0 0
    %2276 = vmatpush1.bf16.xpose.msra.mxu0 0
    %2277 = vmatprep.subr.bf16.mxu0 %v1692
    %2278 = vmatpush1.bf16.xpose.msra.mxu0 %v1691
    %2279 = vmatprep.subr.bf16.mxu0 %v1564
    %2280 = vmatpush1.bf16.xpose.msra.mxu0 %v1563
    %2281 = vmatprep.subr.bf16.mxu0 0
    %2282 = vmatpush2.bf16.xpose.msra.mxu0 0
    %2283 = vmatprep.subr.bf16.mxu0 0
    %2284 = vmatpush2.bf16.xpose.msra.mxu0 0
    %2285 = vmatprep.subr.bf16.mxu0 0
    %2286 = vmatpush2.bf16.xpose.msra.mxu0 0
    %2287 = vmatprep.subr.bf16.mxu0 0
    %2288 = vmatpush2.bf16.xpose.msra.mxu0 0
    %2289 = vmatprep.subr.bf16.mxu0 0
    %2290 = vmatpush2.bf16.xpose.msra.mxu0 0
    %2291 = vmatprep.subr.bf16.mxu0 0
    %2292 = vmatpush2.bf16.xpose.msra.mxu0 0
    %2293 = vmatprep.subr.bf16.mxu0 0
    %2294 = vmatpush2.bf16.xpose.msra.mxu0 0
    %2295 = vmatprep.subr.bf16.mxu0 0
    %2296 = vmatpush2.bf16.xpose.msra.mxu0 0
    %2297 = vmatprep.mubr.bf16.mxu0 %v540
    %2298 = vmatmul.mubr.bf16.gmra.mxu0 %v539
    %v2299 = vpop.f32.mrf.mxu0
    %v2300 = vadd.f32 %v2260, %v2299
    %v2301 = vpop.f32.mrf.mxu0
    %v2302 = vpop.f32.mrf.mxu0
    %v2303 = vpop.f32.mrf.mxu0
    %2304 = vdwg.mxu0
    %2305 = vmatprep.subr.bf16.mxu0 0
    %2306 = vmatpush1.bf16.xpose.msra.mxu0 0
    %2307 = vmatprep.subr.bf16.mxu0 0
    %2308 = vmatpush1.bf16.xpose.msra.mxu0 0
    %2309 = vmatprep.subr.bf16.mxu0 0
    %2310 = vmatpush1.bf16.xpose.msra.mxu0 0
    %2311 = vmatprep.subr.bf16.mxu0 0
    %2312 = vmatpush1.bf16.xpose.msra.mxu0 0
    %2313 = vmatprep.subr.bf16.mxu0 0
    %2314 = vmatpush1.bf16.xpose.msra.mxu0 0
    %2315 = vmatprep.subr.bf16.mxu0 0
    %2316 = vmatpush1.bf16.xpose.msra.mxu0 0
    %2317 = vmatprep.subr.bf16.mxu0 %v1694
    %2318 = vmatpush1.bf16.xpose.msra.mxu0 %v1693
    %2319 = vmatprep.subr.bf16.mxu0 %v1566
    %2320 = vmatpush1.bf16.xpose.msra.mxu0 %v1565
    %2321 = vmatprep.subr.bf16.mxu0 0
    %2322 = vmatpush2.bf16.xpose.msra.mxu0 0
    %2323 = vmatprep.subr.bf16.mxu0 0
    %2324 = vmatpush2.bf16.xpose.msra.mxu0 0
    %2325 = vmatprep.subr.bf16.mxu0 0
    %2326 = vmatpush2.bf16.xpose.msra.mxu0 0
    %2327 = vmatprep.subr.bf16.mxu0 0
    %2328 = vmatpush2.bf16.xpose.msra.mxu0 0
    %2329 = vmatprep.subr.bf16.mxu0 0
    %2330 = vmatpush2.bf16.xpose.msra.mxu0 0
    %2331 = vmatprep.subr.bf16.mxu0 0
    %2332 = vmatpush2.bf16.xpose.msra.mxu0 0
    %2333 = vmatprep.subr.bf16.mxu0 0
    %2334 = vmatpush2.bf16.xpose.msra.mxu0 0
    %2335 = vmatprep.subr.bf16.mxu0 0
    %2336 = vmatpush2.bf16.xpose.msra.mxu0 0
    %2337 = vmatprep.mubr.bf16.mxu0 %v542
    %2338 = vmatmul.mubr.bf16.gmra.mxu0 %v541
    %v2339 = vpop.f32.mrf.mxu0
    %v2340 = vadd.f32 %v2300, %v2339
    %v2341 = vpop.f32.mrf.mxu0
    %v2342 = vpop.f32.mrf.mxu0
    %v2343 = vpop.f32.mrf.mxu0
    %2344 = vdwg.mxu0
    %2345 = vmatprep.subr.bf16.mxu0 0
    %2346 = vmatpush1.bf16.xpose.msra.mxu0 0
    %2347 = vmatprep.subr.bf16.mxu0 0
    %2348 = vmatpush1.bf16.xpose.msra.mxu0 0
    %2349 = vmatprep.subr.bf16.mxu0 0
    %2350 = vmatpush1.bf16.xpose.msra.mxu0 0
    %2351 = vmatprep.subr.bf16.mxu0 0
    %2352 = vmatpush1.bf16.xpose.msra.mxu0 0
    %2353 = vmatprep.subr.bf16.mxu0 0
    %2354 = vmatpush1.bf16.xpose.msra.mxu0 0
    %2355 = vmatprep.subr.bf16.mxu0 0
    %2356 = vmatpush1.bf16.xpose.msra.mxu0 0
    %2357 = vmatprep.subr.bf16.mxu0 %v1696
    %2358 = vmatpush1.bf16.xpose.msra.mxu0 %v1695
    %2359 = vmatprep.subr.bf16.mxu0 %v1568
    %2360 = vmatpush1.bf16.xpose.msra.mxu0 %v1567
    %2361 = vmatprep.subr.bf16.mxu0 0
    %2362 = vmatpush2.bf16.xpose.msra.mxu0 0
    %2363 = vmatprep.subr.bf16.mxu0 0
    %2364 = vmatpush2.bf16.xpose.msra.mxu0 0
    %2365 = vmatprep.subr.bf16.mxu0 0
    %2366 = vmatpush2.bf16.xpose.msra.mxu0 0
    %2367 = vmatprep.subr.bf16.mxu0 0
    %2368 = vmatpush2.bf16.xpose.msra.mxu0 0
    %2369 = vmatprep.subr.bf16.mxu0 0
    %2370 = vmatpush2.bf16.xpose.msra.mxu0 0
    %2371 = vmatprep.subr.bf16.mxu0 0
    %2372 = vmatpush2.bf16.xpose.msra.mxu0 0
    %2373 = vmatprep.subr.bf16.mxu0 0
    %2374 = vmatpush2.bf16.xpose.msra.mxu0 0
    %2375 = vmatprep.subr.bf16.mxu0 0
    %2376 = vmatpush2.bf16.xpose.msra.mxu0 0
    %2377 = vmatprep.mubr.bf16.mxu0 %v544
    %2378 = vmatmul.mubr.bf16.gmra.mxu0 %v543
    %v2379 = vpop.f32.mrf.mxu0
    %v2380 = vadd.f32 %v2340, %v2379
    %v2381 = vpop.f32.mrf.mxu0
    %v2382 = vpop.f32.mrf.mxu0
    %v2383 = vpop.f32.mrf.mxu0
    %2384 = vdwg.mxu0
    %2385 = vmatprep.subr.bf16.mxu0 0
    %2386 = vmatpush1.bf16.xpose.msra.mxu0 0
    %2387 = vmatprep.subr.bf16.mxu0 0
    %2388 = vmatpush1.bf16.xpose.msra.mxu0 0
    %2389 = vmatprep.subr.bf16.mxu0 0
    %2390 = vmatpush1.bf16.xpose.msra.mxu0 0
    %2391 = vmatprep.subr.bf16.mxu0 0
    %2392 = vmatpush1.bf16.xpose.msra.mxu0 0
    %2393 = vmatprep.subr.bf16.mxu0 0
    %2394 = vmatpush1.bf16.xpose.msra.mxu0 0
    %2395 = vmatprep.subr.bf16.mxu0 0
    %2396 = vmatpush1.bf16.xpose.msra.mxu0 0
    %2397 = vmatprep.subr.bf16.mxu0 %v1698
    %2398 = vmatpush1.bf16.xpose.msra.mxu0 %v1697
    %2399 = vmatprep.subr.bf16.mxu0 %v1570
    %2400 = vmatpush1.bf16.xpose.msra.mxu0 %v1569
    %2401 = vmatprep.subr.bf16.mxu0 0
    %2402 = vmatpush2.bf16.xpose.msra.mxu0 0
    %2403 = vmatprep.subr.bf16.mxu0 0
    %2404 = vmatpush2.bf16.xpose.msra.mxu0 0
    %2405 = vmatprep.subr.bf16.mxu0 0
    %2406 = vmatpush2.bf16.xpose.msra.mxu0 0
    %2407 = vmatprep.subr.bf16.mxu0 0
    %2408 = vmatpush2.bf16.xpose.msra.mxu0 0
    %2409 = vmatprep.subr.bf16.mxu0 0
    %2410 = vmatpush2.bf16.xpose.msra.mxu0 0
    %2411 = vmatprep.subr.bf16.mxu0 0
    %2412 = vmatpush2.bf16.xpose.msra.mxu0 0
    %2413 = vmatprep.subr.bf16.mxu0 0
    %2414 = vmatpush2.bf16.xpose.msra.mxu0 0
    %2415 = vmatprep.subr.bf16.mxu0 0
    %2416 = vmatpush2.bf16.xpose.msra.mxu0 0
    %2417 = vmatprep.mubr.bf16.mxu0 %v546
    %2418 = vmatmul.mubr.bf16.gmra.mxu0 %v545
    %v2419 = vpop.f32.mrf.mxu0
    %v2420 = vadd.f32 %v2380, %v2419
    %v2421 = vpop.f32.mrf.mxu0
    %v2422 = vpop.f32.mrf.mxu0
    %v2423 = vpop.f32.mrf.mxu0
    %2424 = vdwg.mxu0
    %2425 = vmatprep.subr.bf16.mxu0 0
    %2426 = vmatpush1.bf16.xpose.msra.mxu0 0
    %2427 = vmatprep.subr.bf16.mxu0 0
    %2428 = vmatpush1.bf16.xpose.msra.mxu0 0
    %2429 = vmatprep.subr.bf16.mxu0 0
    %2430 = vmatpush1.bf16.xpose.msra.mxu0 0
    %2431 = vmatprep.subr.bf16.mxu0 0
    %2432 = vmatpush1.bf16.xpose.msra.mxu0 0
    %2433 = vmatprep.subr.bf16.mxu0 0
    %2434 = vmatpush1.bf16.xpose.msra.mxu0 0
    %2435 = vmatprep.subr.bf16.mxu0 0
    %2436 = vmatpush1.bf16.xpose.msra.mxu0 0
    %2437 = vmatprep.subr.bf16.mxu0 %v1700
    %2438 = vmatpush1.bf16.xpose.msra.mxu0 %v1699
    %2439 = vmatprep.subr.bf16.mxu0 %v1572
    %2440 = vmatpush1.bf16.xpose.msra.mxu0 %v1571
    %2441 = vmatprep.subr.bf16.mxu0 0
    %2442 = vmatpush2.bf16.xpose.msra.mxu0 0
    %2443 = vmatprep.subr.bf16.mxu0 0
    %2444 = vmatpush2.bf16.xpose.msra.mxu0 0
    %2445 = vmatprep.subr.bf16.mxu0 0
    %2446 = vmatpush2.bf16.xpose.msra.mxu0 0
    %2447 = vmatprep.subr.bf16.mxu0 0
    %2448 = vmatpush2.bf16.xpose.msra.mxu0 0
    %2449 = vmatprep.subr.bf16.mxu0 0
    %2450 = vmatpush2.bf16.xpose.msra.mxu0 0
    %2451 = vmatprep.subr.bf16.mxu0 0
    %2452 = vmatpush2.bf16.xpose.msra.mxu0 0
    %2453 = vmatprep.subr.bf16.mxu0 0
    %2454 = vmatpush2.bf16.xpose.msra.mxu0 0
    %2455 = vmatprep.subr.bf16.mxu0 0
    %2456 = vmatpush2.bf16.xpose.msra.mxu0 0
    %2457 = vmatprep.mubr.bf16.mxu0 %v548
    %2458 = vmatmul.mubr.bf16.gmra.mxu0 %v547
    %v2459 = vpop.f32.mrf.mxu0
    %v2460 = vadd.f32 %v2420, %v2459
    %v2461 = vpop.f32.mrf.mxu0
    %v2462 = vpop.f32.mrf.mxu0
    %v2463 = vpop.f32.mrf.mxu0
    %2464 = vdwg.mxu0
    %2465 = vmatprep.subr.bf16.mxu0 0
    %2466 = vmatpush1.bf16.xpose.msra.mxu0 0
    %2467 = vmatprep.subr.bf16.mxu0 0
    %2468 = vmatpush1.bf16.xpose.msra.mxu0 0
    %2469 = vmatprep.subr.bf16.mxu0 0
    %2470 = vmatpush1.bf16.xpose.msra.mxu0 0
    %2471 = vmatprep.subr.bf16.mxu0 0
    %2472 = vmatpush1.bf16.xpose.msra.mxu0 0
    %2473 = vmatprep.subr.bf16.mxu0 0
    %2474 = vmatpush1.bf16.xpose.msra.mxu0 0
    %2475 = vmatprep.subr.bf16.mxu0 0
    %2476 = vmatpush1.bf16.xpose.msra.mxu0 0
    %2477 = vmatprep.subr.bf16.mxu0 %v1702
    %2478 = vmatpush1.bf16.xpose.msra.mxu0 %v1701
    %2479 = vmatprep.subr.bf16.mxu0 %v1574
    %2480 = vmatpush1.bf16.xpose.msra.mxu0 %v1573
    %2481 = vmatprep.subr.bf16.mxu0 0
    %2482 = vmatpush2.bf16.xpose.msra.mxu0 0
    %2483 = vmatprep.subr.bf16.mxu0 0
    %2484 = vmatpush2.bf16.xpose.msra.mxu0 0
    %2485 = vmatprep.subr.bf16.mxu0 0
    %2486 = vmatpush2.bf16.xpose.msra.mxu0 0
    %2487 = vmatprep.subr.bf16.mxu0 0
    %2488 = vmatpush2.bf16.xpose.msra.mxu0 0
    %2489 = vmatprep.subr.bf16.mxu0 0
    %2490 = vmatpush2.bf16.xpose.msra.mxu0 0
    %2491 = vmatprep.subr.bf16.mxu0 0
    %2492 = vmatpush2.bf16.xpose.msra.mxu0 0
    %2493 = vmatprep.subr.bf16.mxu0 0
    %2494 = vmatpush2.bf16.xpose.msra.mxu0 0
    %2495 = vmatprep.subr.bf16.mxu0 0
    %2496 = vmatpush2.bf16.xpose.msra.mxu0 0
    %2497 = vmatprep.mubr.bf16.mxu0 %v550
    %2498 = vmatmul.mubr.bf16.gmra.mxu0 %v549
    %v2499 = vpop.f32.mrf.mxu0
    %v2500 = vadd.f32 %v2460, %v2499
    %v2501 = vpop.f32.mrf.mxu0
    %v2502 = vpop.f32.mrf.mxu0
    %v2503 = vpop.f32.mrf.mxu0
    %2504 = vdwg.mxu0
    %2505 = vmatprep.subr.bf16.mxu0 0
    %2506 = vmatpush1.bf16.xpose.msra.mxu0 0
    %2507 = vmatprep.subr.bf16.mxu0 0
    %2508 = vmatpush1.bf16.xpose.msra.mxu0 0
    %2509 = vmatprep.subr.bf16.mxu0 0
    %2510 = vmatpush1.bf16.xpose.msra.mxu0 0
    %2511 = vmatprep.subr.bf16.mxu0 0
    %2512 = vmatpush1.bf16.xpose.msra.mxu0 0
    %2513 = vmatprep.subr.bf16.mxu0 0
    %2514 = vmatpush1.bf16.xpose.msra.mxu0 0
    %2515 = vmatprep.subr.bf16.mxu0 0
    %2516 = vmatpush1.bf16.xpose.msra.mxu0 0
    %2517 = vmatprep.subr.bf16.mxu0 %v1704
    %2518 = vmatpush1.bf16.xpose.msra.mxu0 %v1703
    %2519 = vmatprep.subr.bf16.mxu0 %v1576
    %2520 = vmatpush1.bf16.xpose.msra.mxu0 %v1575
    %2521 = vmatprep.subr.bf16.mxu0 0
    %2522 = vmatpush2.bf16.xpose.msra.mxu0 0
    %2523 = vmatprep.subr.bf16.mxu0 0
    %2524 = vmatpush2.bf16.xpose.msra.mxu0 0
    %2525 = vmatprep.subr.bf16.mxu0 0
    %2526 = vmatpush2.bf16.xpose.msra.mxu0 0
    %2527 = vmatprep.subr.bf16.mxu0 0
    %2528 = vmatpush2.bf16.xpose.msra.mxu0 0
    %2529 = vmatprep.subr.bf16.mxu0 0
    %2530 = vmatpush2.bf16.xpose.msra.mxu0 0
    %2531 = vmatprep.subr.bf16.mxu0 0
    %2532 = vmatpush2.bf16.xpose.msra.mxu0 0
    %2533 = vmatprep.subr.bf16.mxu0 0
    %2534 = vmatpush2.bf16.xpose.msra.mxu0 0
    %2535 = vmatprep.subr.bf16.mxu0 0
    %2536 = vmatpush2.bf16.xpose.msra.mxu0 0
    %2537 = vmatprep.mubr.bf16.mxu0 %v552
    %2538 = vmatmul.mubr.bf16.gmra.mxu0 %v551
    %v2539 = vpop.f32.mrf.mxu0
    %v2540 = vadd.f32 %v2500, %v2539
    %v2541 = vpop.f32.mrf.mxu0
    %v2542 = vpop.f32.mrf.mxu0
    %v2543 = vpop.f32.mrf.mxu0
    %2544 = vdwg.mxu0
    %2545 = vmatprep.subr.bf16.mxu0 0
    %2546 = vmatpush1.bf16.xpose.msra.mxu0 0
    %2547 = vmatprep.subr.bf16.mxu0 0
    %2548 = vmatpush1.bf16.xpose.msra.mxu0 0
    %2549 = vmatprep.subr.bf16.mxu0 0
    %2550 = vmatpush1.bf16.xpose.msra.mxu0 0
    %2551 = vmatprep.subr.bf16.mxu0 0
    %2552 = vmatpush1.bf16.xpose.msra.mxu0 0
    %2553 = vmatprep.subr.bf16.mxu0 0
    %2554 = vmatpush1.bf16.xpose.msra.mxu0 0
    %2555 = vmatprep.subr.bf16.mxu0 0
    %2556 = vmatpush1.bf16.xpose.msra.mxu0 0
    %2557 = vmatprep.subr.bf16.mxu0 %v1706
    %2558 = vmatpush1.bf16.xpose.msra.mxu0 %v1705
    %2559 = vmatprep.subr.bf16.mxu0 %v1578
    %2560 = vmatpush1.bf16.xpose.msra.mxu0 %v1577
    %2561 = vmatprep.subr.bf16.mxu0 0
    %2562 = vmatpush2.bf16.xpose.msra.mxu0 0
    %2563 = vmatprep.subr.bf16.mxu0 0
    %2564 = vmatpush2.bf16.xpose.msra.mxu0 0
    %2565 = vmatprep.subr.bf16.mxu0 0
    %2566 = vmatpush2.bf16.xpose.msra.mxu0 0
    %2567 = vmatprep.subr.bf16.mxu0 0
    %2568 = vmatpush2.bf16.xpose.msra.mxu0 0
    %2569 = vmatprep.subr.bf16.mxu0 0
    %2570 = vmatpush2.bf16.xpose.msra.mxu0 0
    %2571 = vmatprep.subr.bf16.mxu0 0
    %2572 = vmatpush2.bf16.xpose.msra.mxu0 0
    %2573 = vmatprep.subr.bf16.mxu0 0
    %2574 = vmatpush2.bf16.xpose.msra.mxu0 0
    %2575 = vmatprep.subr.bf16.mxu0 0
    %2576 = vmatpush2.bf16.xpose.msra.mxu0 0
    %2577 = vmatprep.mubr.bf16.mxu0 %v554
    %2578 = vmatmul.mubr.bf16.gmra.mxu0 %v553
    %v2579 = vpop.f32.mrf.mxu0
    %v2580 = vadd.f32 %v2540, %v2579
    %v2581 = vpop.f32.mrf.mxu0
    %v2582 = vpop.f32.mrf.mxu0
    %v2583 = vpop.f32.mrf.mxu0
    %2584 = vdwg.mxu0
    %2585 = vmatprep.subr.bf16.mxu0 0
    %2586 = vmatpush1.bf16.xpose.msra.mxu0 0
    %2587 = vmatprep.subr.bf16.mxu0 0
    %2588 = vmatpush1.bf16.xpose.msra.mxu0 0
    %2589 = vmatprep.subr.bf16.mxu0 0
    %2590 = vmatpush1.bf16.xpose.msra.mxu0 0
    %2591 = vmatprep.subr.bf16.mxu0 0
    %2592 = vmatpush1.bf16.xpose.msra.mxu0 0
    %2593 = vmatprep.subr.bf16.mxu0 0
    %2594 = vmatpush1.bf16.xpose.msra.mxu0 0
    %2595 = vmatprep.subr.bf16.mxu0 0
    %2596 = vmatpush1.bf16.xpose.msra.mxu0 0
    %2597 = vmatprep.subr.bf16.mxu0 %v1708
    %2598 = vmatpush1.bf16.xpose.msra.mxu0 %v1707
    %2599 = vmatprep.subr.bf16.mxu0 %v1580
    %2600 = vmatpush1.bf16.xpose.msra.mxu0 %v1579
    %2601 = vmatprep.subr.bf16.mxu0 0
    %2602 = vmatpush2.bf16.xpose.msra.mxu0 0
    %2603 = vmatprep.subr.bf16.mxu0 0
    %2604 = vmatpush2.bf16.xpose.msra.mxu0 0
    %2605 = vmatprep.subr.bf16.mxu0 0
    %2606 = vmatpush2.bf16.xpose.msra.mxu0 0
    %2607 = vmatprep.subr.bf16.mxu0 0
    %2608 = vmatpush2.bf16.xpose.msra.mxu0 0
    %2609 = vmatprep.subr.bf16.mxu0 0
    %2610 = vmatpush2.bf16.xpose.msra.mxu0 0
    %2611 = vmatprep.subr.bf16.mxu0 0
    %2612 = vmatpush2.bf16.xpose.msra.mxu0 0
    %2613 = vmatprep.subr.bf16.mxu0 0
    %2614 = vmatpush2.bf16.xpose.msra.mxu0 0
    %2615 = vmatprep.subr.bf16.mxu0 0
    %2616 = vmatpush2.bf16.xpose.msra.mxu0 0
    %2617 = vmatprep.mubr.bf16.mxu0 %v556
    %2618 = vmatmul.mubr.bf16.gmra.mxu0 %v555
    %v2619 = vpop.f32.mrf.mxu0
    %v2620 = vadd.f32 %v2580, %v2619
    %v2621 = vpop.f32.mrf.mxu0
    %v2622 = vpop.f32.mrf.mxu0
    %v2623 = vpop.f32.mrf.mxu0
    %2624 = vdwg.mxu0
    %2625 = vmatprep.subr.bf16.mxu0 0
    %2626 = vmatpush1.bf16.xpose.msra.mxu0 0
    %2627 = vmatprep.subr.bf16.mxu0 0
    %2628 = vmatpush1.bf16.xpose.msra.mxu0 0
    %2629 = vmatprep.subr.bf16.mxu0 0
    %2630 = vmatpush1.bf16.xpose.msra.mxu0 0
    %2631 = vmatprep.subr.bf16.mxu0 0
    %2632 = vmatpush1.bf16.xpose.msra.mxu0 0
    %2633 = vmatprep.subr.bf16.mxu0 0
    %2634 = vmatpush1.bf16.xpose.msra.mxu0 0
    %2635 = vmatprep.subr.bf16.mxu0 0
    %2636 = vmatpush1.bf16.xpose.msra.mxu0 0
    %2637 = vmatprep.subr.bf16.mxu0 %v1710
    %2638 = vmatpush1.bf16.xpose.msra.mxu0 %v1709
    %2639 = vmatprep.subr.bf16.mxu0 %v1582
    %2640 = vmatpush1.bf16.xpose.msra.mxu0 %v1581
    %2641 = vmatprep.subr.bf16.mxu0 0
    %2642 = vmatpush2.bf16.xpose.msra.mxu0 0
    %2643 = vmatprep.subr.bf16.mxu0 0
    %2644 = vmatpush2.bf16.xpose.msra.mxu0 0
    %2645 = vmatprep.subr.bf16.mxu0 0
    %2646 = vmatpush2.bf16.xpose.msra.mxu0 0
    %2647 = vmatprep.subr.bf16.mxu0 0
    %2648 = vmatpush2.bf16.xpose.msra.mxu0 0
    %2649 = vmatprep.subr.bf16.mxu0 0
    %2650 = vmatpush2.bf16.xpose.msra.mxu0 0
    %2651 = vmatprep.subr.bf16.mxu0 0
    %2652 = vmatpush2.bf16.xpose.msra.mxu0 0
    %2653 = vmatprep.subr.bf16.mxu0 0
    %2654 = vmatpush2.bf16.xpose.msra.mxu0 0
    %2655 = vmatprep.subr.bf16.mxu0 0
    %2656 = vmatpush2.bf16.xpose.msra.mxu0 0
    %2657 = vmatprep.mubr.bf16.mxu0 %v558
    %2658 = vmatmul.mubr.bf16.gmra.mxu0 %v557
    %v2659 = vpop.f32.mrf.mxu0
    %v2660 = vadd.f32 %v2620, %v2659
    %v2661 = vpop.f32.mrf.mxu0
    %v2662 = vpop.f32.mrf.mxu0
    %v2663 = vpop.f32.mrf.mxu0
    %2664 = vdwg.mxu0
    %2665 = vmatprep.subr.bf16.mxu0 0
    %2666 = vmatpush1.bf16.xpose.msra.mxu0 0
    %2667 = vmatprep.subr.bf16.mxu0 0
    %2668 = vmatpush1.bf16.xpose.msra.mxu0 0
    %2669 = vmatprep.subr.bf16.mxu0 0
    %2670 = vmatpush1.bf16.xpose.msra.mxu0 0
    %2671 = vmatprep.subr.bf16.mxu0 0
    %2672 = vmatpush1.bf16.xpose.msra.mxu0 0
    %2673 = vmatprep.subr.bf16.mxu0 0
    %2674 = vmatpush1.bf16.xpose.msra.mxu0 0
    %2675 = vmatprep.subr.bf16.mxu0 0
    %2676 = vmatpush1.bf16.xpose.msra.mxu0 0
    %2677 = vmatprep.subr.bf16.mxu0 %v1712
    %2678 = vmatpush1.bf16.xpose.msra.mxu0 %v1711
    %2679 = vmatprep.subr.bf16.mxu0 %v1584
    %2680 = vmatpush1.bf16.xpose.msra.mxu0 %v1583
    %2681 = vmatprep.subr.bf16.mxu0 0
    %2682 = vmatpush2.bf16.xpose.msra.mxu0 0
    %2683 = vmatprep.subr.bf16.mxu0 0
    %2684 = vmatpush2.bf16.xpose.msra.mxu0 0
    %2685 = vmatprep.subr.bf16.mxu0 0
    %2686 = vmatpush2.bf16.xpose.msra.mxu0 0
    %2687 = vmatprep.subr.bf16.mxu0 0
    %2688 = vmatpush2.bf16.xpose.msra.mxu0 0
    %2689 = vmatprep.subr.bf16.mxu0 0
    %2690 = vmatpush2.bf16.xpose.msra.mxu0 0
    %2691 = vmatprep.subr.bf16.mxu0 0
    %2692 = vmatpush2.bf16.xpose.msra.mxu0 0
    %2693 = vmatprep.subr.bf16.mxu0 0
    %2694 = vmatpush2.bf16.xpose.msra.mxu0 0
    %2695 = vmatprep.subr.bf16.mxu0 0
    %2696 = vmatpush2.bf16.xpose.msra.mxu0 0
    %2697 = vmatprep.mubr.bf16.mxu0 %v560
    %2698 = vmatmul.mubr.bf16.gmra.mxu0 %v559
    %v2699 = vpop.f32.mrf.mxu0
    %v2700 = vadd.f32 %v2660, %v2699
    %v2701 = vpop.f32.mrf.mxu0
    %v2702 = vpop.f32.mrf.mxu0
    %v2703 = vpop.f32.mrf.mxu0
    %2704 = vdwg.mxu0
    %2705 = vmatprep.subr.bf16.mxu0 0
    %2706 = vmatpush1.bf16.xpose.msra.mxu0 0
    %2707 = vmatprep.subr.bf16.mxu0 0
    %2708 = vmatpush1.bf16.xpose.msra.mxu0 0
    %2709 = vmatprep.subr.bf16.mxu0 0
    %2710 = vmatpush1.bf16.xpose.msra.mxu0 0
    %2711 = vmatprep.subr.bf16.mxu0 0
    %2712 = vmatpush1.bf16.xpose.msra.mxu0 0
    %2713 = vmatprep.subr.bf16.mxu0 0
    %2714 = vmatpush1.bf16.xpose.msra.mxu0 0
    %2715 = vmatprep.subr.bf16.mxu0 0
    %2716 = vmatpush1.bf16.xpose.msra.mxu0 0
    %2717 = vmatprep.subr.bf16.mxu0 %v1714
    %2718 = vmatpush1.bf16.xpose.msra.mxu0 %v1713
    %2719 = vmatprep.subr.bf16.mxu0 %v1586
    %2720 = vmatpush1.bf16.xpose.msra.mxu0 %v1585
    %2721 = vmatprep.subr.bf16.mxu0 0
    %2722 = vmatpush2.bf16.xpose.msra.mxu0 0
    %2723 = vmatprep.subr.bf16.mxu0 0
    %2724 = vmatpush2.bf16.xpose.msra.mxu0 0
    %2725 = vmatprep.subr.bf16.mxu0 0
    %2726 = vmatpush2.bf16.xpose.msra.mxu0 0
    %2727 = vmatprep.subr.bf16.mxu0 0
    %2728 = vmatpush2.bf16.xpose.msra.mxu0 0
    %2729 = vmatprep.subr.bf16.mxu0 0
    %2730 = vmatpush2.bf16.xpose.msra.mxu0 0
    %2731 = vmatprep.subr.bf16.mxu0 0
    %2732 = vmatpush2.bf16.xpose.msra.mxu0 0
    %2733 = vmatprep.subr.bf16.mxu0 0
    %2734 = vmatpush2.bf16.xpose.msra.mxu0 0
    %2735 = vmatprep.subr.bf16.mxu0 0
    %2736 = vmatpush2.bf16.xpose.msra.mxu0 0
    %2737 = vmatprep.mubr.bf16.mxu0 %v562
    %2738 = vmatmul.mubr.bf16.gmra.mxu0 %v561
    %v2739 = vpop.f32.mrf.mxu0
    %v2740 = vadd.f32 %v2700, %v2739
    %v2741 = vpop.f32.mrf.mxu0
    %v2742 = vpop.f32.mrf.mxu0
    %v2743 = vpop.f32.mrf.mxu0
    %2744 = vdwg.mxu0
    %2745 = vmatprep.subr.bf16.mxu0 0
    %2746 = vmatpush1.bf16.xpose.msra.mxu0 0
    %2747 = vmatprep.subr.bf16.mxu0 0
    %2748 = vmatpush1.bf16.xpose.msra.mxu0 0
    %2749 = vmatprep.subr.bf16.mxu0 0
    %2750 = vmatpush1.bf16.xpose.msra.mxu0 0
    %2751 = vmatprep.subr.bf16.mxu0 0
    %2752 = vmatpush1.bf16.xpose.msra.mxu0 0
    %2753 = vmatprep.subr.bf16.mxu0 0
    %2754 = vmatpush1.bf16.xpose.msra.mxu0 0
    %2755 = vmatprep.subr.bf16.mxu0 0
    %2756 = vmatpush1.bf16.xpose.msra.mxu0 0
    %2757 = vmatprep.subr.bf16.mxu0 %v1716
    %2758 = vmatpush1.bf16.xpose.msra.mxu0 %v1715
    %2759 = vmatprep.subr.bf16.mxu0 %v1588
    %2760 = vmatpush1.bf16.xpose.msra.mxu0 %v1587
    %2761 = vmatprep.subr.bf16.mxu0 0
    %2762 = vmatpush2.bf16.xpose.msra.mxu0 0
    %2763 = vmatprep.subr.bf16.mxu0 0
    %2764 = vmatpush2.bf16.xpose.msra.mxu0 0
    %2765 = vmatprep.subr.bf16.mxu0 0
    %2766 = vmatpush2.bf16.xpose.msra.mxu0 0
    %2767 = vmatprep.subr.bf16.mxu0 0
    %2768 = vmatpush2.bf16.xpose.msra.mxu0 0
    %2769 = vmatprep.subr.bf16.mxu0 0
    %2770 = vmatpush2.bf16.xpose.msra.mxu0 0
    %2771 = vmatprep.subr.bf16.mxu0 0
    %2772 = vmatpush2.bf16.xpose.msra.mxu0 0
    %2773 = vmatprep.subr.bf16.mxu0 0
    %2774 = vmatpush2.bf16.xpose.msra.mxu0 0
    %2775 = vmatprep.subr.bf16.mxu0 0
    %2776 = vmatpush2.bf16.xpose.msra.mxu0 0
    %2777 = vmatprep.mubr.bf16.mxu0 %v564
    %2778 = vmatmul.mubr.bf16.gmra.mxu0 %v563
    %v2779 = vpop.f32.mrf.mxu0
    %v2780 = vadd.f32 %v2740, %v2779
    %v2781 = vpop.f32.mrf.mxu0
    %v2782 = vpop.f32.mrf.mxu0
    %v2783 = vpop.f32.mrf.mxu0
    %2784 = vdwg.mxu0
    %2785 = vmatprep.subr.bf16.mxu0 0
    %2786 = vmatpush1.bf16.xpose.msra.mxu0 0
    %2787 = vmatprep.subr.bf16.mxu0 0
    %2788 = vmatpush1.bf16.xpose.msra.mxu0 0
    %2789 = vmatprep.subr.bf16.mxu0 0
    %2790 = vmatpush1.bf16.xpose.msra.mxu0 0
    %2791 = vmatprep.subr.bf16.mxu0 0
    %2792 = vmatpush1.bf16.xpose.msra.mxu0 0
    %2793 = vmatprep.subr.bf16.mxu0 0
    %2794 = vmatpush1.bf16.xpose.msra.mxu0 0
    %2795 = vmatprep.subr.bf16.mxu0 0
    %2796 = vmatpush1.bf16.xpose.msra.mxu0 0
    %2797 = vmatprep.subr.bf16.mxu0 %v1718
    %2798 = vmatpush1.bf16.xpose.msra.mxu0 %v1717
    %2799 = vmatprep.subr.bf16.mxu0 %v1590
    %2800 = vmatpush1.bf16.xpose.msra.mxu0 %v1589
    %2801 = vmatprep.subr.bf16.mxu0 0
    %2802 = vmatpush2.bf16.xpose.msra.mxu0 0
    %2803 = vmatprep.subr.bf16.mxu0 0
    %2804 = vmatpush2.bf16.xpose.msra.mxu0 0
    %2805 = vmatprep.subr.bf16.mxu0 0
    %2806 = vmatpush2.bf16.xpose.msra.mxu0 0
    %2807 = vmatprep.subr.bf16.mxu0 0
    %2808 = vmatpush2.bf16.xpose.msra.mxu0 0
    %2809 = vmatprep.subr.bf16.mxu0 0
    %2810 = vmatpush2.bf16.xpose.msra.mxu0 0
    %2811 = vmatprep.subr.bf16.mxu0 0
    %2812 = vmatpush2.bf16.xpose.msra.mxu0 0
    %2813 = vmatprep.subr.bf16.mxu0 0
    %2814 = vmatpush2.bf16.xpose.msra.mxu0 0
    %2815 = vmatprep.subr.bf16.mxu0 0
    %2816 = vmatpush2.bf16.xpose.msra.mxu0 0
    %2817 = vmatprep.mubr.bf16.mxu0 %v566
    %2818 = vmatmul.mubr.bf16.gmra.mxu0 %v565
    %v2819 = vpop.f32.mrf.mxu0
    %v2820 = vadd.f32 %v2780, %v2819
    %v2821 = vpop.f32.mrf.mxu0
    %v2822 = vpop.f32.mrf.mxu0
    %v2823 = vpop.f32.mrf.mxu0
    %2824 = vdwg.mxu0
    %2825 = vmatprep.subr.bf16.mxu0 0
    %2826 = vmatpush1.bf16.xpose.msra.mxu0 0
    %2827 = vmatprep.subr.bf16.mxu0 0
    %2828 = vmatpush1.bf16.xpose.msra.mxu0 0
    %2829 = vmatprep.subr.bf16.mxu0 0
    %2830 = vmatpush1.bf16.xpose.msra.mxu0 0
    %2831 = vmatprep.subr.bf16.mxu0 0
    %2832 = vmatpush1.bf16.xpose.msra.mxu0 0
    %2833 = vmatprep.subr.bf16.mxu0 0
    %2834 = vmatpush1.bf16.xpose.msra.mxu0 0
    %2835 = vmatprep.subr.bf16.mxu0 0
    %2836 = vmatpush1.bf16.xpose.msra.mxu0 0
    %2837 = vmatprep.subr.bf16.mxu0 %v1720
    %2838 = vmatpush1.bf16.xpose.msra.mxu0 %v1719
    %2839 = vmatprep.subr.bf16.mxu0 %v1592
    %2840 = vmatpush1.bf16.xpose.msra.mxu0 %v1591
    %2841 = vmatprep.subr.bf16.mxu0 0
    %2842 = vmatpush2.bf16.xpose.msra.mxu0 0
    %2843 = vmatprep.subr.bf16.mxu0 0
    %2844 = vmatpush2.bf16.xpose.msra.mxu0 0
    %2845 = vmatprep.subr.bf16.mxu0 0
    %2846 = vmatpush2.bf16.xpose.msra.mxu0 0
    %2847 = vmatprep.subr.bf16.mxu0 0
    %2848 = vmatpush2.bf16.xpose.msra.mxu0 0
    %2849 = vmatprep.subr.bf16.mxu0 0
    %2850 = vmatpush2.bf16.xpose.msra.mxu0 0
    %2851 = vmatprep.subr.bf16.mxu0 0
    %2852 = vmatpush2.bf16.xpose.msra.mxu0 0
    %2853 = vmatprep.subr.bf16.mxu0 0
    %2854 = vmatpush2.bf16.xpose.msra.mxu0 0
    %2855 = vmatprep.subr.bf16.mxu0 0
    %2856 = vmatpush2.bf16.xpose.msra.mxu0 0
    %2857 = vmatprep.mubr.bf16.mxu0 %v568
    %2858 = vmatmul.mubr.bf16.gmra.mxu0 %v567
    %v2859 = vpop.f32.mrf.mxu0
    %v2860 = vadd.f32 %v2820, %v2859
    %v2861 = vpop.f32.mrf.mxu0
    %v2862 = vpop.f32.mrf.mxu0
    %v2863 = vpop.f32.mrf.mxu0
    %2864 = vdwg.mxu0
    %2865 = vmatprep.subr.bf16.mxu0 0
    %2866 = vmatpush1.bf16.xpose.msra.mxu0 0
    %2867 = vmatprep.subr.bf16.mxu0 0
    %2868 = vmatpush1.bf16.xpose.msra.mxu0 0
    %2869 = vmatprep.subr.bf16.mxu0 0
    %2870 = vmatpush1.bf16.xpose.msra.mxu0 0
    %2871 = vmatprep.subr.bf16.mxu0 0
    %2872 = vmatpush1.bf16.xpose.msra.mxu0 0
    %2873 = vmatprep.subr.bf16.mxu0 0
    %2874 = vmatpush1.bf16.xpose.msra.mxu0 0
    %2875 = vmatprep.subr.bf16.mxu0 0
    %2876 = vmatpush1.bf16.xpose.msra.mxu0 0
    %2877 = vmatprep.subr.bf16.mxu0 %v1722
    %2878 = vmatpush1.bf16.xpose.msra.mxu0 %v1721
    %2879 = vmatprep.subr.bf16.mxu0 %v1594
    %2880 = vmatpush1.bf16.xpose.msra.mxu0 %v1593
    %2881 = vmatprep.subr.bf16.mxu0 0
    %2882 = vmatpush2.bf16.xpose.msra.mxu0 0
    %2883 = vmatprep.subr.bf16.mxu0 0
    %2884 = vmatpush2.bf16.xpose.msra.mxu0 0
    %2885 = vmatprep.subr.bf16.mxu0 0
    %2886 = vmatpush2.bf16.xpose.msra.mxu0 0
    %2887 = vmatprep.subr.bf16.mxu0 0
    %2888 = vmatpush2.bf16.xpose.msra.mxu0 0
    %2889 = vmatprep.subr.bf16.mxu0 0
    %2890 = vmatpush2.bf16.xpose.msra.mxu0 0
    %2891 = vmatprep.subr.bf16.mxu0 0
    %2892 = vmatpush2.bf16.xpose.msra.mxu0 0
    %2893 = vmatprep.subr.bf16.mxu0 0
    %2894 = vmatpush2.bf16.xpose.msra.mxu0 0
    %2895 = vmatprep.subr.bf16.mxu0 0
    %2896 = vmatpush2.bf16.xpose.msra.mxu0 0
    %2897 = vmatprep.mubr.bf16.mxu0 %v570
    %2898 = vmatmul.mubr.bf16.gmra.mxu0 %v569
    %v2899 = vpop.f32.mrf.mxu0
    %v2900 = vadd.f32 %v2860, %v2899
    %v2901 = vpop.f32.mrf.mxu0
    %v2902 = vpop.f32.mrf.mxu0
    %v2903 = vpop.f32.mrf.mxu0
    %2904 = vdwg.mxu0
    %2905 = vmatprep.subr.bf16.mxu0 0
    %2906 = vmatpush1.bf16.xpose.msra.mxu0 0
    %2907 = vmatprep.subr.bf16.mxu0 0
    %2908 = vmatpush1.bf16.xpose.msra.mxu0 0
    %2909 = vmatprep.subr.bf16.mxu0 0
    %2910 = vmatpush1.bf16.xpose.msra.mxu0 0
    %2911 = vmatprep.subr.bf16.mxu0 0
    %2912 = vmatpush1.bf16.xpose.msra.mxu0 0
    %2913 = vmatprep.subr.bf16.mxu0 0
    %2914 = vmatpush1.bf16.xpose.msra.mxu0 0
    %2915 = vmatprep.subr.bf16.mxu0 0
    %2916 = vmatpush1.bf16.xpose.msra.mxu0 0
    %2917 = vmatprep.subr.bf16.mxu0 %v1724
    %2918 = vmatpush1.bf16.xpose.msra.mxu0 %v1723
    %2919 = vmatprep.subr.bf16.mxu0 %v1596
    %2920 = vmatpush1.bf16.xpose.msra.mxu0 %v1595
    %2921 = vmatprep.subr.bf16.mxu0 0
    %2922 = vmatpush2.bf16.xpose.msra.mxu0 0
    %2923 = vmatprep.subr.bf16.mxu0 0
    %2924 = vmatpush2.bf16.xpose.msra.mxu0 0
    %2925 = vmatprep.subr.bf16.mxu0 0
    %2926 = vmatpush2.bf16.xpose.msra.mxu0 0
    %2927 = vmatprep.subr.bf16.mxu0 0
    %2928 = vmatpush2.bf16.xpose.msra.mxu0 0
    %2929 = vmatprep.subr.bf16.mxu0 0
    %2930 = vmatpush2.bf16.xpose.msra.mxu0 0
    %2931 = vmatprep.subr.bf16.mxu0 0
    %2932 = vmatpush2.bf16.xpose.msra.mxu0 0
    %2933 = vmatprep.subr.bf16.mxu0 0
    %2934 = vmatpush2.bf16.xpose.msra.mxu0 0
    %2935 = vmatprep.subr.bf16.mxu0 0
    %2936 = vmatpush2.bf16.xpose.msra.mxu0 0
    %2937 = vmatprep.mubr.bf16.mxu0 %v572
    %2938 = vmatmul.mubr.bf16.gmra.mxu0 %v571
    %v2939 = vpop.f32.mrf.mxu0
    %v2940 = vadd.f32 %v2900, %v2939
    %v2941 = vpop.f32.mrf.mxu0
    %v2942 = vpop.f32.mrf.mxu0
    %v2943 = vpop.f32.mrf.mxu0
    %2944 = vdwg.mxu0
    %2945 = vmatprep.subr.bf16.mxu0 0
    %2946 = vmatpush1.bf16.xpose.msra.mxu0 0
    %2947 = vmatprep.subr.bf16.mxu0 0
    %2948 = vmatpush1.bf16.xpose.msra.mxu0 0
    %2949 = vmatprep.subr.bf16.mxu0 0
    %2950 = vmatpush1.bf16.xpose.msra.mxu0 0
    %2951 = vmatprep.subr.bf16.mxu0 0
    %2952 = vmatpush1.bf16.xpose.msra.mxu0 0
    %2953 = vmatprep.subr.bf16.mxu0 0
    %2954 = vmatpush1.bf16.xpose.msra.mxu0 0
    %2955 = vmatprep.subr.bf16.mxu0 0
    %2956 = vmatpush1.bf16.xpose.msra.mxu0 0
    %2957 = vmatprep.subr.bf16.mxu0 %v1726
    %2958 = vmatpush1.bf16.xpose.msra.mxu0 %v1725
    %2959 = vmatprep.subr.bf16.mxu0 %v1598
    %2960 = vmatpush1.bf16.xpose.msra.mxu0 %v1597
    %2961 = vmatprep.subr.bf16.mxu0 0
    %2962 = vmatpush2.bf16.xpose.msra.mxu0 0
    %2963 = vmatprep.subr.bf16.mxu0 0
    %2964 = vmatpush2.bf16.xpose.msra.mxu0 0
    %2965 = vmatprep.subr.bf16.mxu0 0
    %2966 = vmatpush2.bf16.xpose.msra.mxu0 0
    %2967 = vmatprep.subr.bf16.mxu0 0
    %2968 = vmatpush2.bf16.xpose.msra.mxu0 0
    %2969 = vmatprep.subr.bf16.mxu0 0
    %2970 = vmatpush2.bf16.xpose.msra.mxu0 0
    %2971 = vmatprep.subr.bf16.mxu0 0
    %2972 = vmatpush2.bf16.xpose.msra.mxu0 0
    %2973 = vmatprep.subr.bf16.mxu0 0
    %2974 = vmatpush2.bf16.xpose.msra.mxu0 0
    %2975 = vmatprep.subr.bf16.mxu0 0
    %2976 = vmatpush2.bf16.xpose.msra.mxu0 0
    %2977 = vmatprep.mubr.bf16.mxu0 %v574
    %2978 = vmatmul.mubr.bf16.gmra.mxu0 %v573
    %v2979 = vpop.f32.mrf.mxu0
    %v2980 = vadd.f32 %v2940, %v2979
    %v2981 = vpop.f32.mrf.mxu0
    %v2982 = vpop.f32.mrf.mxu0
    %v2983 = vpop.f32.mrf.mxu0
    %2984 = vdwg.mxu0
    %2985 = vmatprep.subr.bf16.mxu0 0
    %2986 = vmatpush1.bf16.xpose.msra.mxu0 0
    %2987 = vmatprep.subr.bf16.mxu0 0
    %2988 = vmatpush1.bf16.xpose.msra.mxu0 0
    %2989 = vmatprep.subr.bf16.mxu0 0
    %2990 = vmatpush1.bf16.xpose.msra.mxu0 0
    %2991 = vmatprep.subr.bf16.mxu0 0
    %2992 = vmatpush1.bf16.xpose.msra.mxu0 0
    %2993 = vmatprep.subr.bf16.mxu0 0
    %2994 = vmatpush1.bf16.xpose.msra.mxu0 0
    %2995 = vmatprep.subr.bf16.mxu0 0
    %2996 = vmatpush1.bf16.xpose.msra.mxu0 0
    %2997 = vmatprep.subr.bf16.mxu0 %v1728
    %2998 = vmatpush1.bf16.xpose.msra.mxu0 %v1727
    %2999 = vmatprep.subr.bf16.mxu0 %v1600
    %3000 = vmatpush1.bf16.xpose.msra.mxu0 %v1599
    %3001 = vmatprep.subr.bf16.mxu0 0
    %3002 = vmatpush2.bf16.xpose.msra.mxu0 0
    %3003 = vmatprep.subr.bf16.mxu0 0
    %3004 = vmatpush2.bf16.xpose.msra.mxu0 0
    %3005 = vmatprep.subr.bf16.mxu0 0
    %3006 = vmatpush2.bf16.xpose.msra.mxu0 0
    %3007 = vmatprep.subr.bf16.mxu0 0
    %3008 = vmatpush2.bf16.xpose.msra.mxu0 0
    %3009 = vmatprep.subr.bf16.mxu0 0
    %3010 = vmatpush2.bf16.xpose.msra.mxu0 0
    %3011 = vmatprep.subr.bf16.mxu0 0
    %3012 = vmatpush2.bf16.xpose.msra.mxu0 0
    %3013 = vmatprep.subr.bf16.mxu0 0
    %3014 = vmatpush2.bf16.xpose.msra.mxu0 0
    %3015 = vmatprep.subr.bf16.mxu0 0
    %3016 = vmatpush2.bf16.xpose.msra.mxu0 0
    %3017 = vmatprep.mubr.bf16.mxu0 %v576
    %3018 = vmatmul.mubr.bf16.gmra.mxu0 %v575
    %v3019 = vpop.f32.mrf.mxu0
    %v3020 = vadd.f32 %v2980, %v3019
    %v3021 = vpop.f32.mrf.mxu0
    %v3022 = vpop.f32.mrf.mxu0
    %v3023 = vpop.f32.mrf.mxu0
    %3024 = vdwg.mxu0
    %3025 = vmatprep.subr.bf16.mxu0 0
    %3026 = vmatpush1.bf16.xpose.msra.mxu0 0
    %3027 = vmatprep.subr.bf16.mxu0 0
    %3028 = vmatpush1.bf16.xpose.msra.mxu0 0
    %3029 = vmatprep.subr.bf16.mxu0 0
    %3030 = vmatpush1.bf16.xpose.msra.mxu0 0
    %3031 = vmatprep.subr.bf16.mxu0 0
    %3032 = vmatpush1.bf16.xpose.msra.mxu0 0
    %3033 = vmatprep.subr.bf16.mxu0 0
    %3034 = vmatpush1.bf16.xpose.msra.mxu0 0
    %3035 = vmatprep.subr.bf16.mxu0 0
    %3036 = vmatpush1.bf16.xpose.msra.mxu0 0
    %3037 = vmatprep.subr.bf16.mxu0 %v1730
    %3038 = vmatpush1.bf16.xpose.msra.mxu0 %v1729
    %3039 = vmatprep.subr.bf16.mxu0 %v1602
    %3040 = vmatpush1.bf16.xpose.msra.mxu0 %v1601
    %3041 = vmatprep.subr.bf16.mxu0 0
    %3042 = vmatpush2.bf16.xpose.msra.mxu0 0
    %3043 = vmatprep.subr.bf16.mxu0 0
    %3044 = vmatpush2.bf16.xpose.msra.mxu0 0
    %3045 = vmatprep.subr.bf16.mxu0 0
    %3046 = vmatpush2.bf16.xpose.msra.mxu0 0
    %3047 = vmatprep.subr.bf16.mxu0 0
    %3048 = vmatpush2.bf16.xpose.msra.mxu0 0
    %3049 = vmatprep.subr.bf16.mxu0 0
    %3050 = vmatpush2.bf16.xpose.msra.mxu0 0
    %3051 = vmatprep.subr.bf16.mxu0 0
    %3052 = vmatpush2.bf16.xpose.msra.mxu0 0
    %3053 = vmatprep.subr.bf16.mxu0 0
    %3054 = vmatpush2.bf16.xpose.msra.mxu0 0
    %3055 = vmatprep.subr.bf16.mxu0 0
    %3056 = vmatpush2.bf16.xpose.msra.mxu0 0
    %3057 = vmatprep.mubr.bf16.mxu0 %v578
    %3058 = vmatmul.mubr.bf16.gmra.mxu0 %v577
    %v3059 = vpop.f32.mrf.mxu0
    %v3060 = vadd.f32 %v3020, %v3059
    %v3061 = vpop.f32.mrf.mxu0
    %v3062 = vpop.f32.mrf.mxu0
    %v3063 = vpop.f32.mrf.mxu0
    %3064 = vdwg.mxu0
    %3065 = vmatprep.subr.bf16.mxu0 0
    %3066 = vmatpush1.bf16.xpose.msra.mxu0 0
    %3067 = vmatprep.subr.bf16.mxu0 0
    %3068 = vmatpush1.bf16.xpose.msra.mxu0 0
    %3069 = vmatprep.subr.bf16.mxu0 0
    %3070 = vmatpush1.bf16.xpose.msra.mxu0 0
    %3071 = vmatprep.subr.bf16.mxu0 0
    %3072 = vmatpush1.bf16.xpose.msra.mxu0 0
    %3073 = vmatprep.subr.bf16.mxu0 0
    %3074 = vmatpush1.bf16.xpose.msra.mxu0 0
    %3075 = vmatprep.subr.bf16.mxu0 0
    %3076 = vmatpush1.bf16.xpose.msra.mxu0 0
    %3077 = vmatprep.subr.bf16.mxu0 %v1732
    %3078 = vmatpush1.bf16.xpose.msra.mxu0 %v1731
    %3079 = vmatprep.subr.bf16.mxu0 %v1604
    %3080 = vmatpush1.bf16.xpose.msra.mxu0 %v1603
    %3081 = vmatprep.subr.bf16.mxu0 0
    %3082 = vmatpush2.bf16.xpose.msra.mxu0 0
    %3083 = vmatprep.subr.bf16.mxu0 0
    %3084 = vmatpush2.bf16.xpose.msra.mxu0 0
    %3085 = vmatprep.subr.bf16.mxu0 0
    %3086 = vmatpush2.bf16.xpose.msra.mxu0 0
    %3087 = vmatprep.subr.bf16.mxu0 0
    %3088 = vmatpush2.bf16.xpose.msra.mxu0 0
    %3089 = vmatprep.subr.bf16.mxu0 0
    %3090 = vmatpush2.bf16.xpose.msra.mxu0 0
    %3091 = vmatprep.subr.bf16.mxu0 0
    %3092 = vmatpush2.bf16.xpose.msra.mxu0 0
    %3093 = vmatprep.subr.bf16.mxu0 0
    %3094 = vmatpush2.bf16.xpose.msra.mxu0 0
    %3095 = vmatprep.subr.bf16.mxu0 0
    %3096 = vmatpush2.bf16.xpose.msra.mxu0 0
    %3097 = vmatprep.mubr.bf16.mxu0 %v580
    %3098 = vmatmul.mubr.bf16.gmra.mxu0 %v579
    %v3099 = vpop.f32.mrf.mxu0
    %v3100 = vadd.f32 %v3060, %v3099
    %v3101 = vpop.f32.mrf.mxu0
    %v3102 = vpop.f32.mrf.mxu0
    %v3103 = vpop.f32.mrf.mxu0
    %3104 = vdwg.mxu0
    %3105 = vmatprep.subr.bf16.mxu0 0
    %3106 = vmatpush1.bf16.xpose.msra.mxu0 0
    %3107 = vmatprep.subr.bf16.mxu0 0
    %3108 = vmatpush1.bf16.xpose.msra.mxu0 0
    %3109 = vmatprep.subr.bf16.mxu0 0
    %3110 = vmatpush1.bf16.xpose.msra.mxu0 0
    %3111 = vmatprep.subr.bf16.mxu0 0
    %3112 = vmatpush1.bf16.xpose.msra.mxu0 0
    %3113 = vmatprep.subr.bf16.mxu0 0
    %3114 = vmatpush1.bf16.xpose.msra.mxu0 0
    %3115 = vmatprep.subr.bf16.mxu0 0
    %3116 = vmatpush1.bf16.xpose.msra.mxu0 0
    %3117 = vmatprep.subr.bf16.mxu0 %v1734
    %3118 = vmatpush1.bf16.xpose.msra.mxu0 %v1733
    %3119 = vmatprep.subr.bf16.mxu0 %v1606
    %3120 = vmatpush1.bf16.xpose.msra.mxu0 %v1605
    %3121 = vmatprep.subr.bf16.mxu0 0
    %3122 = vmatpush2.bf16.xpose.msra.mxu0 0
    %3123 = vmatprep.subr.bf16.mxu0 0
    %3124 = vmatpush2.bf16.xpose.msra.mxu0 0
    %3125 = vmatprep.subr.bf16.mxu0 0
    %3126 = vmatpush2.bf16.xpose.msra.mxu0 0
    %3127 = vmatprep.subr.bf16.mxu0 0
    %3128 = vmatpush2.bf16.xpose.msra.mxu0 0
    %3129 = vmatprep.subr.bf16.mxu0 0
    %3130 = vmatpush2.bf16.xpose.msra.mxu0 0
    %3131 = vmatprep.subr.bf16.mxu0 0
    %3132 = vmatpush2.bf16.xpose.msra.mxu0 0
    %3133 = vmatprep.subr.bf16.mxu0 0
    %3134 = vmatpush2.bf16.xpose.msra.mxu0 0
    %3135 = vmatprep.subr.bf16.mxu0 0
    %3136 = vmatpush2.bf16.xpose.msra.mxu0 0
    %3137 = vmatprep.mubr.bf16.mxu0 %v582
    %3138 = vmatmul.mubr.bf16.gmra.mxu0 %v581
    %v3139 = vpop.f32.mrf.mxu0
    %v3140 = vadd.f32 %v3100, %v3139
    %v3141 = vpop.f32.mrf.mxu0
    %v3142 = vpop.f32.mrf.mxu0
    %v3143 = vpop.f32.mrf.mxu0
    %3144 = vdwg.mxu0
    %3145 = vmatprep.subr.bf16.mxu0 0
    %3146 = vmatpush1.bf16.xpose.msra.mxu0 0
    %3147 = vmatprep.subr.bf16.mxu0 0
    %3148 = vmatpush1.bf16.xpose.msra.mxu0 0
    %3149 = vmatprep.subr.bf16.mxu0 0
    %3150 = vmatpush1.bf16.xpose.msra.mxu0 0
    %3151 = vmatprep.subr.bf16.mxu0 0
    %3152 = vmatpush1.bf16.xpose.msra.mxu0 0
    %3153 = vmatprep.subr.bf16.mxu0 0
    %3154 = vmatpush1.bf16.xpose.msra.mxu0 0
    %3155 = vmatprep.subr.bf16.mxu0 0
    %3156 = vmatpush1.bf16.xpose.msra.mxu0 0
    %3157 = vmatprep.subr.bf16.mxu0 %v1736
    %3158 = vmatpush1.bf16.xpose.msra.mxu0 %v1735
    %3159 = vmatprep.subr.bf16.mxu0 %v1608
    %3160 = vmatpush1.bf16.xpose.msra.mxu0 %v1607
    %3161 = vmatprep.subr.bf16.mxu0 0
    %3162 = vmatpush2.bf16.xpose.msra.mxu0 0
    %3163 = vmatprep.subr.bf16.mxu0 0
    %3164 = vmatpush2.bf16.xpose.msra.mxu0 0
    %3165 = vmatprep.subr.bf16.mxu0 0
    %3166 = vmatpush2.bf16.xpose.msra.mxu0 0
    %3167 = vmatprep.subr.bf16.mxu0 0
    %3168 = vmatpush2.bf16.xpose.msra.mxu0 0
    %3169 = vmatprep.subr.bf16.mxu0 0
    %3170 = vmatpush2.bf16.xpose.msra.mxu0 0
    %3171 = vmatprep.subr.bf16.mxu0 0
    %3172 = vmatpush2.bf16.xpose.msra.mxu0 0
    %3173 = vmatprep.subr.bf16.mxu0 0
    %3174 = vmatpush2.bf16.xpose.msra.mxu0 0
    %3175 = vmatprep.subr.bf16.mxu0 0
    %3176 = vmatpush2.bf16.xpose.msra.mxu0 0
    %3177 = vmatprep.mubr.bf16.mxu0 %v584
    %3178 = vmatmul.mubr.bf16.gmra.mxu0 %v583
    %v3179 = vpop.f32.mrf.mxu0
    %v3180 = vadd.f32 %v3140, %v3179
    %v3181 = vpop.f32.mrf.mxu0
    %v3182 = vpop.f32.mrf.mxu0
    %v3183 = vpop.f32.mrf.mxu0
    %3184 = vdwg.mxu0
    %3185 = vmatprep.subr.bf16.mxu0 0
    %3186 = vmatpush1.bf16.xpose.msra.mxu0 0
    %3187 = vmatprep.subr.bf16.mxu0 0
    %3188 = vmatpush1.bf16.xpose.msra.mxu0 0
    %3189 = vmatprep.subr.bf16.mxu0 0
    %3190 = vmatpush1.bf16.xpose.msra.mxu0 0
    %3191 = vmatprep.subr.bf16.mxu0 0
    %3192 = vmatpush1.bf16.xpose.msra.mxu0 0
    %3193 = vmatprep.subr.bf16.mxu0 0
    %3194 = vmatpush1.bf16.xpose.msra.mxu0 0
    %3195 = vmatprep.subr.bf16.mxu0 0
    %3196 = vmatpush1.bf16.xpose.msra.mxu0 0
    %3197 = vmatprep.subr.bf16.mxu0 %v1738
    %3198 = vmatpush1.bf16.xpose.msra.mxu0 %v1737
    %3199 = vmatprep.subr.bf16.mxu0 %v1610
    %3200 = vmatpush1.bf16.xpose.msra.mxu0 %v1609
    %3201 = vmatprep.subr.bf16.mxu0 0
    %3202 = vmatpush2.bf16.xpose.msra.mxu0 0
    %3203 = vmatprep.subr.bf16.mxu0 0
    %3204 = vmatpush2.bf16.xpose.msra.mxu0 0
    %3205 = vmatprep.subr.bf16.mxu0 0
    %3206 = vmatpush2.bf16.xpose.msra.mxu0 0
    %3207 = vmatprep.subr.bf16.mxu0 0
    %3208 = vmatpush2.bf16.xpose.msra.mxu0 0
    %3209 = vmatprep.subr.bf16.mxu0 0
    %3210 = vmatpush2.bf16.xpose.msra.mxu0 0
    %3211 = vmatprep.subr.bf16.mxu0 0
    %3212 = vmatpush2.bf16.xpose.msra.mxu0 0
    %3213 = vmatprep.subr.bf16.mxu0 0
    %3214 = vmatpush2.bf16.xpose.msra.mxu0 0
    %3215 = vmatprep.subr.bf16.mxu0 0
    %3216 = vmatpush2.bf16.xpose.msra.mxu0 0
    %3217 = vmatprep.mubr.bf16.mxu0 %v586
    %3218 = vmatmul.mubr.bf16.gmra.mxu0 %v585
    %v3219 = vpop.f32.mrf.mxu0
    %v3220 = vadd.f32 %v3180, %v3219
    %v3221 = vpop.f32.mrf.mxu0
    %v3222 = vpop.f32.mrf.mxu0
    %v3223 = vpop.f32.mrf.mxu0
    %3224 = vdwg.mxu0
    %3225 = vmatprep.subr.bf16.mxu0 0
    %3226 = vmatpush1.bf16.xpose.msra.mxu0 0
    %3227 = vmatprep.subr.bf16.mxu0 0
    %3228 = vmatpush1.bf16.xpose.msra.mxu0 0
    %3229 = vmatprep.subr.bf16.mxu0 0
    %3230 = vmatpush1.bf16.xpose.msra.mxu0 0
    %3231 = vmatprep.subr.bf16.mxu0 0
    %3232 = vmatpush1.bf16.xpose.msra.mxu0 0
    %3233 = vmatprep.subr.bf16.mxu0 0
    %3234 = vmatpush1.bf16.xpose.msra.mxu0 0
    %3235 = vmatprep.subr.bf16.mxu0 0
    %3236 = vmatpush1.bf16.xpose.msra.mxu0 0
    %3237 = vmatprep.subr.bf16.mxu0 %v1740
    %3238 = vmatpush1.bf16.xpose.msra.mxu0 %v1739
    %3239 = vmatprep.subr.bf16.mxu0 %v1612
    %3240 = vmatpush1.bf16.xpose.msra.mxu0 %v1611
    %3241 = vmatprep.subr.bf16.mxu0 0
    %3242 = vmatpush2.bf16.xpose.msra.mxu0 0
    %3243 = vmatprep.subr.bf16.mxu0 0
    %3244 = vmatpush2.bf16.xpose.msra.mxu0 0
    %3245 = vmatprep.subr.bf16.mxu0 0
    %3246 = vmatpush2.bf16.xpose.msra.mxu0 0
    %3247 = vmatprep.subr.bf16.mxu0 0
    %3248 = vmatpush2.bf16.xpose.msra.mxu0 0
    %3249 = vmatprep.subr.bf16.mxu0 0
    %3250 = vmatpush2.bf16.xpose.msra.mxu0 0
    %3251 = vmatprep.subr.bf16.mxu0 0
    %3252 = vmatpush2.bf16.xpose.msra.mxu0 0
    %3253 = vmatprep.subr.bf16.mxu0 0
    %3254 = vmatpush2.bf16.xpose.msra.mxu0 0
    %3255 = vmatprep.subr.bf16.mxu0 0
    %3256 = vmatpush2.bf16.xpose.msra.mxu0 0
    %3257 = vmatprep.mubr.bf16.mxu0 %v588
    %3258 = vmatmul.mubr.bf16.gmra.mxu0 %v587
    %v3259 = vpop.f32.mrf.mxu0
    %v3260 = vadd.f32 %v3220, %v3259
    %v3261 = vpop.f32.mrf.mxu0
    %v3262 = vpop.f32.mrf.mxu0
    %v3263 = vpop.f32.mrf.mxu0
    %3264 = vdwg.mxu0
    %3265 = vmatprep.subr.bf16.mxu0 0
    %3266 = vmatpush1.bf16.xpose.msra.mxu0 0
    %3267 = vmatprep.subr.bf16.mxu0 0
    %3268 = vmatpush1.bf16.xpose.msra.mxu0 0
    %3269 = vmatprep.subr.bf16.mxu0 0
    %3270 = vmatpush1.bf16.xpose.msra.mxu0 0
    %3271 = vmatprep.subr.bf16.mxu0 0
    %3272 = vmatpush1.bf16.xpose.msra.mxu0 0
    %3273 = vmatprep.subr.bf16.mxu0 0
    %3274 = vmatpush1.bf16.xpose.msra.mxu0 0
    %3275 = vmatprep.subr.bf16.mxu0 0
    %3276 = vmatpush1.bf16.xpose.msra.mxu0 0
    %3277 = vmatprep.subr.bf16.mxu0 %v1742
    %3278 = vmatpush1.bf16.xpose.msra.mxu0 %v1741
    %3279 = vmatprep.subr.bf16.mxu0 %v1614
    %3280 = vmatpush1.bf16.xpose.msra.mxu0 %v1613
    %3281 = vmatprep.subr.bf16.mxu0 0
    %3282 = vmatpush2.bf16.xpose.msra.mxu0 0
    %3283 = vmatprep.subr.bf16.mxu0 0
    %3284 = vmatpush2.bf16.xpose.msra.mxu0 0
    %3285 = vmatprep.subr.bf16.mxu0 0
    %3286 = vmatpush2.bf16.xpose.msra.mxu0 0
    %3287 = vmatprep.subr.bf16.mxu0 0
    %3288 = vmatpush2.bf16.xpose.msra.mxu0 0
    %3289 = vmatprep.subr.bf16.mxu0 0
    %3290 = vmatpush2.bf16.xpose.msra.mxu0 0
    %3291 = vmatprep.subr.bf16.mxu0 0
    %3292 = vmatpush2.bf16.xpose.msra.mxu0 0
    %3293 = vmatprep.subr.bf16.mxu0 0
    %3294 = vmatpush2.bf16.xpose.msra.mxu0 0
    %3295 = vmatprep.subr.bf16.mxu0 0
    %3296 = vmatpush2.bf16.xpose.msra.mxu0 0
    %3297 = vmatprep.mubr.bf16.mxu0 %v590
    %3298 = vmatmul.mubr.bf16.gmra.mxu0 %v589
    %v3299 = vpop.f32.mrf.mxu0
    %v3300 = vadd.f32 %v3260, %v3299
    %v3301 = vpop.f32.mrf.mxu0
    %v3302 = vpop.f32.mrf.mxu0
    %v3303 = vpop.f32.mrf.mxu0
    %3304 = vdwg.mxu0
    %3305 = vmatprep.subr.bf16.mxu0 0
    %3306 = vmatpush1.bf16.xpose.msra.mxu0 0
    %3307 = vmatprep.subr.bf16.mxu0 0
    %3308 = vmatpush1.bf16.xpose.msra.mxu0 0
    %3309 = vmatprep.subr.bf16.mxu0 0
    %3310 = vmatpush1.bf16.xpose.msra.mxu0 0
    %3311 = vmatprep.subr.bf16.mxu0 0
    %3312 = vmatpush1.bf16.xpose.msra.mxu0 0
    %3313 = vmatprep.subr.bf16.mxu0 0
    %3314 = vmatpush1.bf16.xpose.msra.mxu0 0
    %3315 = vmatprep.subr.bf16.mxu0 0
    %3316 = vmatpush1.bf16.xpose.msra.mxu0 0
    %3317 = vmatprep.subr.bf16.mxu0 %v1744
    %3318 = vmatpush1.bf16.xpose.msra.mxu0 %v1743
    %3319 = vmatprep.subr.bf16.mxu0 %v1616
    %3320 = vmatpush1.bf16.xpose.msra.mxu0 %v1615
    %3321 = vmatprep.subr.bf16.mxu0 0
    %3322 = vmatpush2.bf16.xpose.msra.mxu0 0
    %3323 = vmatprep.subr.bf16.mxu0 0
    %3324 = vmatpush2.bf16.xpose.msra.mxu0 0
    %3325 = vmatprep.subr.bf16.mxu0 0
    %3326 = vmatpush2.bf16.xpose.msra.mxu0 0
    %3327 = vmatprep.subr.bf16.mxu0 0
    %3328 = vmatpush2.bf16.xpose.msra.mxu0 0
    %3329 = vmatprep.subr.bf16.mxu0 0
    %3330 = vmatpush2.bf16.xpose.msra.mxu0 0
    %3331 = vmatprep.subr.bf16.mxu0 0
    %3332 = vmatpush2.bf16.xpose.msra.mxu0 0
    %3333 = vmatprep.subr.bf16.mxu0 0
    %3334 = vmatpush2.bf16.xpose.msra.mxu0 0
    %3335 = vmatprep.subr.bf16.mxu0 0
    %3336 = vmatpush2.bf16.xpose.msra.mxu0 0
    %3337 = vmatprep.mubr.bf16.mxu0 %v592
    %3338 = vmatmul.mubr.bf16.gmra.mxu0 %v591
    %v3339 = vpop.f32.mrf.mxu0
    %v3340 = vadd.f32 %v3300, %v3339
    %v3341 = vpop.f32.mrf.mxu0
    %v3342 = vpop.f32.mrf.mxu0
    %v3343 = vpop.f32.mrf.mxu0
    %3344 = vdwg.mxu0
    %3345 = vmatprep.subr.bf16.mxu0 0
    %3346 = vmatpush1.bf16.xpose.msra.mxu0 0
    %3347 = vmatprep.subr.bf16.mxu0 0
    %3348 = vmatpush1.bf16.xpose.msra.mxu0 0
    %3349 = vmatprep.subr.bf16.mxu0 0
    %3350 = vmatpush1.bf16.xpose.msra.mxu0 0
    %3351 = vmatprep.subr.bf16.mxu0 0
    %3352 = vmatpush1.bf16.xpose.msra.mxu0 0
    %3353 = vmatprep.subr.bf16.mxu0 0
    %3354 = vmatpush1.bf16.xpose.msra.mxu0 0
    %3355 = vmatprep.subr.bf16.mxu0 0
    %3356 = vmatpush1.bf16.xpose.msra.mxu0 0
    %3357 = vmatprep.subr.bf16.mxu0 %v1746
    %3358 = vmatpush1.bf16.xpose.msra.mxu0 %v1745
    %3359 = vmatprep.subr.bf16.mxu0 %v1618
    %3360 = vmatpush1.bf16.xpose.msra.mxu0 %v1617
    %3361 = vmatprep.subr.bf16.mxu0 0
    %3362 = vmatpush2.bf16.xpose.msra.mxu0 0
    %3363 = vmatprep.subr.bf16.mxu0 0
    %3364 = vmatpush2.bf16.xpose.msra.mxu0 0
    %3365 = vmatprep.subr.bf16.mxu0 0
    %3366 = vmatpush2.bf16.xpose.msra.mxu0 0
    %3367 = vmatprep.subr.bf16.mxu0 0
    %3368 = vmatpush2.bf16.xpose.msra.mxu0 0
    %3369 = vmatprep.subr.bf16.mxu0 0
    %3370 = vmatpush2.bf16.xpose.msra.mxu0 0
    %3371 = vmatprep.subr.bf16.mxu0 0
    %3372 = vmatpush2.bf16.xpose.msra.mxu0 0
    %3373 = vmatprep.subr.bf16.mxu0 0
    %3374 = vmatpush2.bf16.xpose.msra.mxu0 0
    %3375 = vmatprep.subr.bf16.mxu0 0
    %3376 = vmatpush2.bf16.xpose.msra.mxu0 0
    %3377 = vmatprep.mubr.bf16.mxu0 %v594
    %3378 = vmatmul.mubr.bf16.gmra.mxu0 %v593
    %v3379 = vpop.f32.mrf.mxu0
    %v3380 = vadd.f32 %v3340, %v3379
    %v3381 = vpop.f32.mrf.mxu0
    %v3382 = vpop.f32.mrf.mxu0
    %v3383 = vpop.f32.mrf.mxu0
    %3384 = vdwg.mxu0
    %3385 = vmatprep.subr.bf16.mxu0 0
    %3386 = vmatpush1.bf16.xpose.msra.mxu0 0
    %3387 = vmatprep.subr.bf16.mxu0 0
    %3388 = vmatpush1.bf16.xpose.msra.mxu0 0
    %3389 = vmatprep.subr.bf16.mxu0 0
    %3390 = vmatpush1.bf16.xpose.msra.mxu0 0
    %3391 = vmatprep.subr.bf16.mxu0 0
    %3392 = vmatpush1.bf16.xpose.msra.mxu0 0
    %3393 = vmatprep.subr.bf16.mxu0 0
    %3394 = vmatpush1.bf16.xpose.msra.mxu0 0
    %3395 = vmatprep.subr.bf16.mxu0 0
    %3396 = vmatpush1.bf16.xpose.msra.mxu0 0
    %3397 = vmatprep.subr.bf16.mxu0 %v1748
    %3398 = vmatpush1.bf16.xpose.msra.mxu0 %v1747
    %3399 = vmatprep.subr.bf16.mxu0 %v1620
    %3400 = vmatpush1.bf16.xpose.msra.mxu0 %v1619
    %3401 = vmatprep.subr.bf16.mxu0 0
    %3402 = vmatpush2.bf16.xpose.msra.mxu0 0
    %3403 = vmatprep.subr.bf16.mxu0 0
    %3404 = vmatpush2.bf16.xpose.msra.mxu0 0
    %3405 = vmatprep.subr.bf16.mxu0 0
    %3406 = vmatpush2.bf16.xpose.msra.mxu0 0
    %3407 = vmatprep.subr.bf16.mxu0 0
    %3408 = vmatpush2.bf16.xpose.msra.mxu0 0
    %3409 = vmatprep.subr.bf16.mxu0 0
    %3410 = vmatpush2.bf16.xpose.msra.mxu0 0
    %3411 = vmatprep.subr.bf16.mxu0 0
    %3412 = vmatpush2.bf16.xpose.msra.mxu0 0
    %3413 = vmatprep.subr.bf16.mxu0 0
    %3414 = vmatpush2.bf16.xpose.msra.mxu0 0
    %3415 = vmatprep.subr.bf16.mxu0 0
    %3416 = vmatpush2.bf16.xpose.msra.mxu0 0
    %3417 = vmatprep.mubr.bf16.mxu0 %v596
    %3418 = vmatmul.mubr.bf16.gmra.mxu0 %v595
    %v3419 = vpop.f32.mrf.mxu0
    %v3420 = vadd.f32 %v3380, %v3419
    %v3421 = vpop.f32.mrf.mxu0
    %v3422 = vpop.f32.mrf.mxu0
    %v3423 = vpop.f32.mrf.mxu0
    %3424 = vdwg.mxu0
    %3425 = vmatprep.subr.bf16.mxu0 0
    %3426 = vmatpush1.bf16.xpose.msra.mxu0 0
    %3427 = vmatprep.subr.bf16.mxu0 0
    %3428 = vmatpush1.bf16.xpose.msra.mxu0 0
    %3429 = vmatprep.subr.bf16.mxu0 0
    %3430 = vmatpush1.bf16.xpose.msra.mxu0 0
    %3431 = vmatprep.subr.bf16.mxu0 0
    %3432 = vmatpush1.bf16.xpose.msra.mxu0 0
    %3433 = vmatprep.subr.bf16.mxu0 0
    %3434 = vmatpush1.bf16.xpose.msra.mxu0 0
    %3435 = vmatprep.subr.bf16.mxu0 0
    %3436 = vmatpush1.bf16.xpose.msra.mxu0 0
    %3437 = vmatprep.subr.bf16.mxu0 %v1750
    %3438 = vmatpush1.bf16.xpose.msra.mxu0 %v1749
    %3439 = vmatprep.subr.bf16.mxu0 %v1622
    %3440 = vmatpush1.bf16.xpose.msra.mxu0 %v1621
    %3441 = vmatprep.subr.bf16.mxu0 0
    %3442 = vmatpush2.bf16.xpose.msra.mxu0 0
    %3443 = vmatprep.subr.bf16.mxu0 0
    %3444 = vmatpush2.bf16.xpose.msra.mxu0 0
    %3445 = vmatprep.subr.bf16.mxu0 0
    %3446 = vmatpush2.bf16.xpose.msra.mxu0 0
    %3447 = vmatprep.subr.bf16.mxu0 0
    %3448 = vmatpush2.bf16.xpose.msra.mxu0 0
    %3449 = vmatprep.subr.bf16.mxu0 0
    %3450 = vmatpush2.bf16.xpose.msra.mxu0 0
    %3451 = vmatprep.subr.bf16.mxu0 0
    %3452 = vmatpush2.bf16.xpose.msra.mxu0 0
    %3453 = vmatprep.subr.bf16.mxu0 0
    %3454 = vmatpush2.bf16.xpose.msra.mxu0 0
    %3455 = vmatprep.subr.bf16.mxu0 0
    %3456 = vmatpush2.bf16.xpose.msra.mxu0 0
    %3457 = vmatprep.mubr.bf16.mxu0 %v598
    %3458 = vmatmul.mubr.bf16.gmra.mxu0 %v597
    %v3459 = vpop.f32.mrf.mxu0
    %v3460 = vadd.f32 %v3420, %v3459
    %v3461 = vpop.f32.mrf.mxu0
    %v3462 = vpop.f32.mrf.mxu0
    %v3463 = vpop.f32.mrf.mxu0
    %3464 = vdwg.mxu0
    %3465 = vmatprep.subr.bf16.mxu0 0
    %3466 = vmatpush1.bf16.xpose.msra.mxu0 0
    %3467 = vmatprep.subr.bf16.mxu0 0
    %3468 = vmatpush1.bf16.xpose.msra.mxu0 0
    %3469 = vmatprep.subr.bf16.mxu0 0
    %3470 = vmatpush1.bf16.xpose.msra.mxu0 0
    %3471 = vmatprep.subr.bf16.mxu0 0
    %3472 = vmatpush1.bf16.xpose.msra.mxu0 0
    %3473 = vmatprep.subr.bf16.mxu0 0
    %3474 = vmatpush1.bf16.xpose.msra.mxu0 0
    %3475 = vmatprep.subr.bf16.mxu0 0
    %3476 = vmatpush1.bf16.xpose.msra.mxu0 0
    %3477 = vmatprep.subr.bf16.mxu0 %v1752
    %3478 = vmatpush1.bf16.xpose.msra.mxu0 %v1751
    %3479 = vmatprep.subr.bf16.mxu0 %v1624
    %3480 = vmatpush1.bf16.xpose.msra.mxu0 %v1623
    %3481 = vmatprep.subr.bf16.mxu0 0
    %3482 = vmatpush2.bf16.xpose.msra.mxu0 0
    %3483 = vmatprep.subr.bf16.mxu0 0
    %3484 = vmatpush2.bf16.xpose.msra.mxu0 0
    %3485 = vmatprep.subr.bf16.mxu0 0
    %3486 = vmatpush2.bf16.xpose.msra.mxu0 0
    %3487 = vmatprep.subr.bf16.mxu0 0
    %3488 = vmatpush2.bf16.xpose.msra.mxu0 0
    %3489 = vmatprep.subr.bf16.mxu0 0
    %3490 = vmatpush2.bf16.xpose.msra.mxu0 0
    %3491 = vmatprep.subr.bf16.mxu0 0
    %3492 = vmatpush2.bf16.xpose.msra.mxu0 0
    %3493 = vmatprep.subr.bf16.mxu0 0
    %3494 = vmatpush2.bf16.xpose.msra.mxu0 0
    %3495 = vmatprep.subr.bf16.mxu0 0
    %3496 = vmatpush2.bf16.xpose.msra.mxu0 0
    %3497 = vmatprep.mubr.bf16.mxu0 %v600
    %3498 = vmatmul.mubr.bf16.gmra.mxu0 %v599
    %v3499 = vpop.f32.mrf.mxu0
    %v3500 = vadd.f32 %v3460, %v3499
    %v3501 = vpop.f32.mrf.mxu0
    %v3502 = vpop.f32.mrf.mxu0
    %v3503 = vpop.f32.mrf.mxu0
    %3504 = vdwg.mxu0
    %3505 = vmatprep.subr.bf16.mxu0 0
    %3506 = vmatpush1.bf16.xpose.msra.mxu0 0
    %3507 = vmatprep.subr.bf16.mxu0 0
    %3508 = vmatpush1.bf16.xpose.msra.mxu0 0
    %3509 = vmatprep.subr.bf16.mxu0 0
    %3510 = vmatpush1.bf16.xpose.msra.mxu0 0
    %3511 = vmatprep.subr.bf16.mxu0 0
    %3512 = vmatpush1.bf16.xpose.msra.mxu0 0
    %3513 = vmatprep.subr.bf16.mxu0 0
    %3514 = vmatpush1.bf16.xpose.msra.mxu0 0
    %3515 = vmatprep.subr.bf16.mxu0 0
    %3516 = vmatpush1.bf16.xpose.msra.mxu0 0
    %3517 = vmatprep.subr.bf16.mxu0 %v1754
    %3518 = vmatpush1.bf16.xpose.msra.mxu0 %v1753
    %3519 = vmatprep.subr.bf16.mxu0 %v1626
    %3520 = vmatpush1.bf16.xpose.msra.mxu0 %v1625
    %3521 = vmatprep.subr.bf16.mxu0 0
    %3522 = vmatpush2.bf16.xpose.msra.mxu0 0
    %3523 = vmatprep.subr.bf16.mxu0 0
    %3524 = vmatpush2.bf16.xpose.msra.mxu0 0
    %3525 = vmatprep.subr.bf16.mxu0 0
    %3526 = vmatpush2.bf16.xpose.msra.mxu0 0
    %3527 = vmatprep.subr.bf16.mxu0 0
    %3528 = vmatpush2.bf16.xpose.msra.mxu0 0
    %3529 = vmatprep.subr.bf16.mxu0 0
    %3530 = vmatpush2.bf16.xpose.msra.mxu0 0
    %3531 = vmatprep.subr.bf16.mxu0 0
    %3532 = vmatpush2.bf16.xpose.msra.mxu0 0
    %3533 = vmatprep.subr.bf16.mxu0 0
    %3534 = vmatpush2.bf16.xpose.msra.mxu0 0
    %3535 = vmatprep.subr.bf16.mxu0 0
    %3536 = vmatpush2.bf16.xpose.msra.mxu0 0
    %3537 = vmatprep.mubr.bf16.mxu0 %v602
    %3538 = vmatmul.mubr.bf16.gmra.mxu0 %v601
    %v3539 = vpop.f32.mrf.mxu0
    %v3540 = vadd.f32 %v3500, %v3539
    %v3541 = vpop.f32.mrf.mxu0
    %v3542 = vpop.f32.mrf.mxu0
    %v3543 = vpop.f32.mrf.mxu0
    %3544 = vdwg.mxu0
    %3545 = vmatprep.subr.bf16.mxu0 0
    %3546 = vmatpush1.bf16.xpose.msra.mxu0 0
    %3547 = vmatprep.subr.bf16.mxu0 0
    %3548 = vmatpush1.bf16.xpose.msra.mxu0 0
    %3549 = vmatprep.subr.bf16.mxu0 0
    %3550 = vmatpush1.bf16.xpose.msra.mxu0 0
    %3551 = vmatprep.subr.bf16.mxu0 0
    %3552 = vmatpush1.bf16.xpose.msra.mxu0 0
    %3553 = vmatprep.subr.bf16.mxu0 0
    %3554 = vmatpush1.bf16.xpose.msra.mxu0 0
    %3555 = vmatprep.subr.bf16.mxu0 0
    %3556 = vmatpush1.bf16.xpose.msra.mxu0 0
    %3557 = vmatprep.subr.bf16.mxu0 %v1756
    %3558 = vmatpush1.bf16.xpose.msra.mxu0 %v1755
    %3559 = vmatprep.subr.bf16.mxu0 %v1628
    %3560 = vmatpush1.bf16.xpose.msra.mxu0 %v1627
    %3561 = vmatprep.subr.bf16.mxu0 0
    %3562 = vmatpush2.bf16.xpose.msra.mxu0 0
    %3563 = vmatprep.subr.bf16.mxu0 0
    %3564 = vmatpush2.bf16.xpose.msra.mxu0 0
    %3565 = vmatprep.subr.bf16.mxu0 0
    %3566 = vmatpush2.bf16.xpose.msra.mxu0 0
    %3567 = vmatprep.subr.bf16.mxu0 0
    %3568 = vmatpush2.bf16.xpose.msra.mxu0 0
    %3569 = vmatprep.subr.bf16.mxu0 0
    %3570 = vmatpush2.bf16.xpose.msra.mxu0 0
    %3571 = vmatprep.subr.bf16.mxu0 0
    %3572 = vmatpush2.bf16.xpose.msra.mxu0 0
    %3573 = vmatprep.subr.bf16.mxu0 0
    %3574 = vmatpush2.bf16.xpose.msra.mxu0 0
    %3575 = vmatprep.subr.bf16.mxu0 0
    %3576 = vmatpush2.bf16.xpose.msra.mxu0 0
    %3577 = vmatprep.mubr.bf16.mxu0 %v604
    %3578 = vmatmul.mubr.bf16.gmra.mxu0 %v603
    %v3579 = vpop.f32.mrf.mxu0
    %v3580 = vadd.f32 %v3540, %v3579
    %v3581 = vpop.f32.mrf.mxu0
    %v3582 = vpop.f32.mrf.mxu0
    %v3583 = vpop.f32.mrf.mxu0
    %3584 = vdwg.mxu0
    %3585 = vmatprep.subr.bf16.mxu0 0
    %3586 = vmatpush1.bf16.xpose.msra.mxu0 0
    %3587 = vmatprep.subr.bf16.mxu0 0
    %3588 = vmatpush1.bf16.xpose.msra.mxu0 0
    %3589 = vmatprep.subr.bf16.mxu0 0
    %3590 = vmatpush1.bf16.xpose.msra.mxu0 0
    %3591 = vmatprep.subr.bf16.mxu0 0
    %3592 = vmatpush1.bf16.xpose.msra.mxu0 0
    %3593 = vmatprep.subr.bf16.mxu0 0
    %3594 = vmatpush1.bf16.xpose.msra.mxu0 0
    %3595 = vmatprep.subr.bf16.mxu0 0
    %3596 = vmatpush1.bf16.xpose.msra.mxu0 0
    %3597 = vmatprep.subr.bf16.mxu0 %v1758
    %3598 = vmatpush1.bf16.xpose.msra.mxu0 %v1757
    %3599 = vmatprep.subr.bf16.mxu0 %v1630
    %3600 = vmatpush1.bf16.xpose.msra.mxu0 %v1629
    %3601 = vmatprep.subr.bf16.mxu0 0
    %3602 = vmatpush2.bf16.xpose.msra.mxu0 0
    %3603 = vmatprep.subr.bf16.mxu0 0
    %3604 = vmatpush2.bf16.xpose.msra.mxu0 0
    %3605 = vmatprep.subr.bf16.mxu0 0
    %3606 = vmatpush2.bf16.xpose.msra.mxu0 0
    %3607 = vmatprep.subr.bf16.mxu0 0
    %3608 = vmatpush2.bf16.xpose.msra.mxu0 0
    %3609 = vmatprep.subr.bf16.mxu0 0
    %3610 = vmatpush2.bf16.xpose.msra.mxu0 0
    %3611 = vmatprep.subr.bf16.mxu0 0
    %3612 = vmatpush2.bf16.xpose.msra.mxu0 0
    %3613 = vmatprep.subr.bf16.mxu0 0
    %3614 = vmatpush2.bf16.xpose.msra.mxu0 0
    %3615 = vmatprep.subr.bf16.mxu0 0
    %3616 = vmatpush2.bf16.xpose.msra.mxu0 0
    %3617 = vmatprep.mubr.bf16.mxu0 %v606
    %3618 = vmatmul.mubr.bf16.gmra.mxu0 %v605
    %v3619 = vpop.f32.mrf.mxu0
    %v3620 = vadd.f32 %v3580, %v3619
    %v3621 = vpop.f32.mrf.mxu0
    %v3622 = vpop.f32.mrf.mxu0
    %v3623 = vpop.f32.mrf.mxu0
    %3624 = vdwg.mxu0
    %3625 = vmatprep.subr.bf16.mxu0 0
    %3626 = vmatpush1.bf16.xpose.msra.mxu0 0
    %3627 = vmatprep.subr.bf16.mxu0 0
    %3628 = vmatpush1.bf16.xpose.msra.mxu0 0
    %3629 = vmatprep.subr.bf16.mxu0 0
    %3630 = vmatpush1.bf16.xpose.msra.mxu0 0
    %3631 = vmatprep.subr.bf16.mxu0 0
    %3632 = vmatpush1.bf16.xpose.msra.mxu0 0
    %3633 = vmatprep.subr.bf16.mxu0 0
    %3634 = vmatpush1.bf16.xpose.msra.mxu0 0
    %3635 = vmatprep.subr.bf16.mxu0 0
    %3636 = vmatpush1.bf16.xpose.msra.mxu0 0
    %3637 = vmatprep.subr.bf16.mxu0 %v1760
    %3638 = vmatpush1.bf16.xpose.msra.mxu0 %v1759
    %3639 = vmatprep.subr.bf16.mxu0 %v1632
    %3640 = vmatpush1.bf16.xpose.msra.mxu0 %v1631
    %3641 = vmatprep.subr.bf16.mxu0 0
    %3642 = vmatpush2.bf16.xpose.msra.mxu0 0
    %3643 = vmatprep.subr.bf16.mxu0 0
    %3644 = vmatpush2.bf16.xpose.msra.mxu0 0
    %3645 = vmatprep.subr.bf16.mxu0 0
    %3646 = vmatpush2.bf16.xpose.msra.mxu0 0
    %3647 = vmatprep.subr.bf16.mxu0 0
    %3648 = vmatpush2.bf16.xpose.msra.mxu0 0
    %3649 = vmatprep.subr.bf16.mxu0 0
    %3650 = vmatpush2.bf16.xpose.msra.mxu0 0
    %3651 = vmatprep.subr.bf16.mxu0 0
    %3652 = vmatpush2.bf16.xpose.msra.mxu0 0
    %3653 = vmatprep.subr.bf16.mxu0 0
    %3654 = vmatpush2.bf16.xpose.msra.mxu0 0
    %3655 = vmatprep.subr.bf16.mxu0 0
    %3656 = vmatpush2.bf16.xpose.msra.mxu0 0
    %3657 = vmatprep.mubr.bf16.mxu0 %v608
    %3658 = vmatmul.mubr.bf16.gmra.mxu0 %v607
    %v3659 = vpop.f32.mrf.mxu0
    %v3660 = vadd.f32 %v3620, %v3659
    %v3661 = vpop.f32.mrf.mxu0
    %v3662 = vpop.f32.mrf.mxu0
    %v3663 = vpop.f32.mrf.mxu0
    %3664 = vdwg.mxu0
    %3665 = vmatprep.subr.bf16.mxu0 0
    %3666 = vmatpush1.bf16.xpose.msra.mxu0 0
    %3667 = vmatprep.subr.bf16.mxu0 0
    %3668 = vmatpush1.bf16.xpose.msra.mxu0 0
    %3669 = vmatprep.subr.bf16.mxu0 0
    %3670 = vmatpush1.bf16.xpose.msra.mxu0 0
    %3671 = vmatprep.subr.bf16.mxu0 0
    %3672 = vmatpush1.bf16.xpose.msra.mxu0 0
    %3673 = vmatprep.subr.bf16.mxu0 0
    %3674 = vmatpush1.bf16.xpose.msra.mxu0 0
    %3675 = vmatprep.subr.bf16.mxu0 0
    %3676 = vmatpush1.bf16.xpose.msra.mxu0 0
    %3677 = vmatprep.subr.bf16.mxu0 %v1762
    %3678 = vmatpush1.bf16.xpose.msra.mxu0 %v1761
    %3679 = vmatprep.subr.bf16.mxu0 %v1634
    %3680 = vmatpush1.bf16.xpose.msra.mxu0 %v1633
    %3681 = vmatprep.subr.bf16.mxu0 0
    %3682 = vmatpush2.bf16.xpose.msra.mxu0 0
    %3683 = vmatprep.subr.bf16.mxu0 0
    %3684 = vmatpush2.bf16.xpose.msra.mxu0 0
    %3685 = vmatprep.subr.bf16.mxu0 0
    %3686 = vmatpush2.bf16.xpose.msra.mxu0 0
    %3687 = vmatprep.subr.bf16.mxu0 0
    %3688 = vmatpush2.bf16.xpose.msra.mxu0 0
    %3689 = vmatprep.subr.bf16.mxu0 0
    %3690 = vmatpush2.bf16.xpose.msra.mxu0 0
    %3691 = vmatprep.subr.bf16.mxu0 0
    %3692 = vmatpush2.bf16.xpose.msra.mxu0 0
    %3693 = vmatprep.subr.bf16.mxu0 0
    %3694 = vmatpush2.bf16.xpose.msra.mxu0 0
    %3695 = vmatprep.subr.bf16.mxu0 0
    %3696 = vmatpush2.bf16.xpose.msra.mxu0 0
    %3697 = vmatprep.mubr.bf16.mxu0 %v610
    %3698 = vmatmul.mubr.bf16.gmra.mxu0 %v609
    %v3699 = vpop.f32.mrf.mxu0
    %v3700 = vadd.f32 %v3660, %v3699
    %v3701 = vpop.f32.mrf.mxu0
    %v3702 = vpop.f32.mrf.mxu0
    %v3703 = vpop.f32.mrf.mxu0
    %3704 = vdwg.mxu0
    %3705 = vmatprep.subr.bf16.mxu0 0
    %3706 = vmatpush1.bf16.xpose.msra.mxu0 0
    %3707 = vmatprep.subr.bf16.mxu0 0
    %3708 = vmatpush1.bf16.xpose.msra.mxu0 0
    %3709 = vmatprep.subr.bf16.mxu0 0
    %3710 = vmatpush1.bf16.xpose.msra.mxu0 0
    %3711 = vmatprep.subr.bf16.mxu0 0
    %3712 = vmatpush1.bf16.xpose.msra.mxu0 0
    %3713 = vmatprep.subr.bf16.mxu0 0
    %3714 = vmatpush1.bf16.xpose.msra.mxu0 0
    %3715 = vmatprep.subr.bf16.mxu0 0
    %3716 = vmatpush1.bf16.xpose.msra.mxu0 0
    %3717 = vmatprep.subr.bf16.mxu0 %v1764
    %3718 = vmatpush1.bf16.xpose.msra.mxu0 %v1763
    %3719 = vmatprep.subr.bf16.mxu0 %v1636
    %3720 = vmatpush1.bf16.xpose.msra.mxu0 %v1635
    %3721 = vmatprep.subr.bf16.mxu0 0
    %3722 = vmatpush2.bf16.xpose.msra.mxu0 0
    %3723 = vmatprep.subr.bf16.mxu0 0
    %3724 = vmatpush2.bf16.xpose.msra.mxu0 0
    %3725 = vmatprep.subr.bf16.mxu0 0
    %3726 = vmatpush2.bf16.xpose.msra.mxu0 0
    %3727 = vmatprep.subr.bf16.mxu0 0
    %3728 = vmatpush2.bf16.xpose.msra.mxu0 0
    %3729 = vmatprep.subr.bf16.mxu0 0
    %3730 = vmatpush2.bf16.xpose.msra.mxu0 0
    %3731 = vmatprep.subr.bf16.mxu0 0
    %3732 = vmatpush2.bf16.xpose.msra.mxu0 0
    %3733 = vmatprep.subr.bf16.mxu0 0
    %3734 = vmatpush2.bf16.xpose.msra.mxu0 0
    %3735 = vmatprep.subr.bf16.mxu0 0
    %3736 = vmatpush2.bf16.xpose.msra.mxu0 0
    %3737 = vmatprep.mubr.bf16.mxu0 %v612
    %3738 = vmatmul.mubr.bf16.gmra.mxu0 %v611
    %v3739 = vpop.f32.mrf.mxu0
    %v3740 = vadd.f32 %v3700, %v3739
    %v3741 = vpop.f32.mrf.mxu0
    %v3742 = vpop.f32.mrf.mxu0
    %v3743 = vpop.f32.mrf.mxu0
    %3744 = vdwg.mxu0
    %3745 = vmatprep.subr.bf16.mxu0 0
    %3746 = vmatpush1.bf16.xpose.msra.mxu0 0
    %3747 = vmatprep.subr.bf16.mxu0 0
    %3748 = vmatpush1.bf16.xpose.msra.mxu0 0
    %3749 = vmatprep.subr.bf16.mxu0 0
    %3750 = vmatpush1.bf16.xpose.msra.mxu0 0
    %3751 = vmatprep.subr.bf16.mxu0 0
    %3752 = vmatpush1.bf16.xpose.msra.mxu0 0
    %3753 = vmatprep.subr.bf16.mxu0 0
    %3754 = vmatpush1.bf16.xpose.msra.mxu0 0
    %3755 = vmatprep.subr.bf16.mxu0 0
    %3756 = vmatpush1.bf16.xpose.msra.mxu0 0
    %3757 = vmatprep.subr.bf16.mxu0 %v1766
    %3758 = vmatpush1.bf16.xpose.msra.mxu0 %v1765
    %3759 = vmatprep.subr.bf16.mxu0 %v1638
    %3760 = vmatpush1.bf16.xpose.msra.mxu0 %v1637
    %3761 = vmatprep.subr.bf16.mxu0 0
    %3762 = vmatpush2.bf16.xpose.msra.mxu0 0
    %3763 = vmatprep.subr.bf16.mxu0 0
    %3764 = vmatpush2.bf16.xpose.msra.mxu0 0
    %3765 = vmatprep.subr.bf16.mxu0 0
    %3766 = vmatpush2.bf16.xpose.msra.mxu0 0
    %3767 = vmatprep.subr.bf16.mxu0 0
    %3768 = vmatpush2.bf16.xpose.msra.mxu0 0
    %3769 = vmatprep.subr.bf16.mxu0 0
    %3770 = vmatpush2.bf16.xpose.msra.mxu0 0
    %3771 = vmatprep.subr.bf16.mxu0 0
    %3772 = vmatpush2.bf16.xpose.msra.mxu0 0
    %3773 = vmatprep.subr.bf16.mxu0 0
    %3774 = vmatpush2.bf16.xpose.msra.mxu0 0
    %3775 = vmatprep.subr.bf16.mxu0 0
    %3776 = vmatpush2.bf16.xpose.msra.mxu0 0
    %3777 = vmatprep.mubr.bf16.mxu0 %v614
    %3778 = vmatmul.mubr.bf16.gmra.mxu0 %v613
    %v3779 = vpop.f32.mrf.mxu0
    %v3780 = vadd.f32 %v3740, %v3779
    %v3781 = vpop.f32.mrf.mxu0
    %v3782 = vpop.f32.mrf.mxu0
    %v3783 = vpop.f32.mrf.mxu0
    %3784 = vdwg.mxu0
    %3785 = vmatprep.subr.bf16.mxu0 0
    %3786 = vmatpush1.bf16.xpose.msra.mxu0 0
    %3787 = vmatprep.subr.bf16.mxu0 0
    %3788 = vmatpush1.bf16.xpose.msra.mxu0 0
    %3789 = vmatprep.subr.bf16.mxu0 0
    %3790 = vmatpush1.bf16.xpose.msra.mxu0 0
    %3791 = vmatprep.subr.bf16.mxu0 0
    %3792 = vmatpush1.bf16.xpose.msra.mxu0 0
    %3793 = vmatprep.subr.bf16.mxu0 0
    %3794 = vmatpush1.bf16.xpose.msra.mxu0 0
    %3795 = vmatprep.subr.bf16.mxu0 0
    %3796 = vmatpush1.bf16.xpose.msra.mxu0 0
    %3797 = vmatprep.subr.bf16.mxu0 %v1768
    %3798 = vmatpush1.bf16.xpose.msra.mxu0 %v1767
    %3799 = vmatprep.subr.bf16.mxu0 %v1640
    %3800 = vmatpush1.bf16.xpose.msra.mxu0 %v1639
    %3801 = vmatprep.subr.bf16.mxu0 0
    %3802 = vmatpush2.bf16.xpose.msra.mxu0 0
    %3803 = vmatprep.subr.bf16.mxu0 0
    %3804 = vmatpush2.bf16.xpose.msra.mxu0 0
    %3805 = vmatprep.subr.bf16.mxu0 0
    %3806 = vmatpush2.bf16.xpose.msra.mxu0 0
    %3807 = vmatprep.subr.bf16.mxu0 0
    %3808 = vmatpush2.bf16.xpose.msra.mxu0 0
    %3809 = vmatprep.subr.bf16.mxu0 0
    %3810 = vmatpush2.bf16.xpose.msra.mxu0 0
    %3811 = vmatprep.subr.bf16.mxu0 0
    %3812 = vmatpush2.bf16.xpose.msra.mxu0 0
    %3813 = vmatprep.subr.bf16.mxu0 0
    %3814 = vmatpush2.bf16.xpose.msra.mxu0 0
    %3815 = vmatprep.subr.bf16.mxu0 0
    %3816 = vmatpush2.bf16.xpose.msra.mxu0 0
    %3817 = vmatprep.mubr.bf16.mxu0 %v616
    %3818 = vmatmul.mubr.bf16.gmra.mxu0 %v615
    %v3819 = vpop.f32.mrf.mxu0
    %v3820 = vadd.f32 %v3780, %v3819
    %v3821 = vpop.f32.mrf.mxu0
    %v3822 = vpop.f32.mrf.mxu0
    %v3823 = vpop.f32.mrf.mxu0
    %3824 = vdwg.mxu0
    %3825 = vmatprep.subr.bf16.mxu0 0
    %3826 = vmatpush1.bf16.xpose.msra.mxu0 0
    %3827 = vmatprep.subr.bf16.mxu0 0
    %3828 = vmatpush1.bf16.xpose.msra.mxu0 0
    %3829 = vmatprep.subr.bf16.mxu0 0
    %3830 = vmatpush1.bf16.xpose.msra.mxu0 0
    %3831 = vmatprep.subr.bf16.mxu0 0
    %3832 = vmatpush1.bf16.xpose.msra.mxu0 0
    %3833 = vmatprep.subr.bf16.mxu0 0
    %3834 = vmatpush1.bf16.xpose.msra.mxu0 0
    %3835 = vmatprep.subr.bf16.mxu0 0
    %3836 = vmatpush1.bf16.xpose.msra.mxu0 0
    %3837 = vmatprep.subr.bf16.mxu0 %v1770
    %3838 = vmatpush1.bf16.xpose.msra.mxu0 %v1769
    %3839 = vmatprep.subr.bf16.mxu0 %v1642
    %3840 = vmatpush1.bf16.xpose.msra.mxu0 %v1641
    %3841 = vmatprep.subr.bf16.mxu0 0
    %3842 = vmatpush2.bf16.xpose.msra.mxu0 0
    %3843 = vmatprep.subr.bf16.mxu0 0
    %3844 = vmatpush2.bf16.xpose.msra.mxu0 0
    %3845 = vmatprep.subr.bf16.mxu0 0
    %3846 = vmatpush2.bf16.xpose.msra.mxu0 0
    %3847 = vmatprep.subr.bf16.mxu0 0
    %3848 = vmatpush2.bf16.xpose.msra.mxu0 0
    %3849 = vmatprep.subr.bf16.mxu0 0
    %3850 = vmatpush2.bf16.xpose.msra.mxu0 0
    %3851 = vmatprep.subr.bf16.mxu0 0
    %3852 = vmatpush2.bf16.xpose.msra.mxu0 0
    %3853 = vmatprep.subr.bf16.mxu0 0
    %3854 = vmatpush2.bf16.xpose.msra.mxu0 0
    %3855 = vmatprep.subr.bf16.mxu0 0
    %3856 = vmatpush2.bf16.xpose.msra.mxu0 0
    %3857 = vmatprep.mubr.bf16.mxu0 %v618
    %3858 = vmatmul.mubr.bf16.gmra.mxu0 %v617
    %v3859 = vpop.f32.mrf.mxu0
    %v3860 = vadd.f32 %v3820, %v3859
    %v3861 = vpop.f32.mrf.mxu0
    %v3862 = vpop.f32.mrf.mxu0
    %v3863 = vpop.f32.mrf.mxu0
    %3864 = vdwg.mxu0
    %3865 = vmatprep.subr.bf16.mxu0 0
    %3866 = vmatpush1.bf16.xpose.msra.mxu0 0
    %3867 = vmatprep.subr.bf16.mxu0 0
    %3868 = vmatpush1.bf16.xpose.msra.mxu0 0
    %3869 = vmatprep.subr.bf16.mxu0 0
    %3870 = vmatpush1.bf16.xpose.msra.mxu0 0
    %3871 = vmatprep.subr.bf16.mxu0 0
    %3872 = vmatpush1.bf16.xpose.msra.mxu0 0
    %3873 = vmatprep.subr.bf16.mxu0 0
    %3874 = vmatpush1.bf16.xpose.msra.mxu0 0
    %3875 = vmatprep.subr.bf16.mxu0 0
    %3876 = vmatpush1.bf16.xpose.msra.mxu0 0
    %3877 = vmatprep.subr.bf16.mxu0 %v1772
    %3878 = vmatpush1.bf16.xpose.msra.mxu0 %v1771
    %3879 = vmatprep.subr.bf16.mxu0 %v1644
    %3880 = vmatpush1.bf16.xpose.msra.mxu0 %v1643
    %3881 = vmatprep.subr.bf16.mxu0 0
    %3882 = vmatpush2.bf16.xpose.msra.mxu0 0
    %3883 = vmatprep.subr.bf16.mxu0 0
    %3884 = vmatpush2.bf16.xpose.msra.mxu0 0
    %3885 = vmatprep.subr.bf16.mxu0 0
    %3886 = vmatpush2.bf16.xpose.msra.mxu0 0
    %3887 = vmatprep.subr.bf16.mxu0 0
    %3888 = vmatpush2.bf16.xpose.msra.mxu0 0
    %3889 = vmatprep.subr.bf16.mxu0 0
    %3890 = vmatpush2.bf16.xpose.msra.mxu0 0
    %3891 = vmatprep.subr.bf16.mxu0 0
    %3892 = vmatpush2.bf16.xpose.msra.mxu0 0
    %3893 = vmatprep.subr.bf16.mxu0 0
    %3894 = vmatpush2.bf16.xpose.msra.mxu0 0
    %3895 = vmatprep.subr.bf16.mxu0 0
    %3896 = vmatpush2.bf16.xpose.msra.mxu0 0
    %3897 = vmatprep.mubr.bf16.mxu0 %v620
    %3898 = vmatmul.mubr.bf16.gmra.mxu0 %v619
    %v3899 = vpop.f32.mrf.mxu0
    %v3900 = vadd.f32 %v3860, %v3899
    %v3901 = vpop.f32.mrf.mxu0
    %v3902 = vpop.f32.mrf.mxu0
    %v3903 = vpop.f32.mrf.mxu0
    %3904 = vdwg.mxu0
    %3905 = vmatprep.subr.bf16.mxu0 0
    %3906 = vmatpush1.bf16.xpose.msra.mxu0 0
    %3907 = vmatprep.subr.bf16.mxu0 0
    %3908 = vmatpush1.bf16.xpose.msra.mxu0 0
    %3909 = vmatprep.subr.bf16.mxu0 0
    %3910 = vmatpush1.bf16.xpose.msra.mxu0 0
    %3911 = vmatprep.subr.bf16.mxu0 0
    %3912 = vmatpush1.bf16.xpose.msra.mxu0 0
    %3913 = vmatprep.subr.bf16.mxu0 0
    %3914 = vmatpush1.bf16.xpose.msra.mxu0 0
    %3915 = vmatprep.subr.bf16.mxu0 0
    %3916 = vmatpush1.bf16.xpose.msra.mxu0 0
    %3917 = vmatprep.subr.bf16.mxu0 %v1774
    %3918 = vmatpush1.bf16.xpose.msra.mxu0 %v1773
    %3919 = vmatprep.subr.bf16.mxu0 %v1646
    %3920 = vmatpush1.bf16.xpose.msra.mxu0 %v1645
    %3921 = vmatprep.subr.bf16.mxu0 0
    %3922 = vmatpush2.bf16.xpose.msra.mxu0 0
    %3923 = vmatprep.subr.bf16.mxu0 0
    %3924 = vmatpush2.bf16.xpose.msra.mxu0 0
    %3925 = vmatprep.subr.bf16.mxu0 0
    %3926 = vmatpush2.bf16.xpose.msra.mxu0 0
    %3927 = vmatprep.subr.bf16.mxu0 0
    %3928 = vmatpush2.bf16.xpose.msra.mxu0 0
    %3929 = vmatprep.subr.bf16.mxu0 0
    %3930 = vmatpush2.bf16.xpose.msra.mxu0 0
    %3931 = vmatprep.subr.bf16.mxu0 0
    %3932 = vmatpush2.bf16.xpose.msra.mxu0 0
    %3933 = vmatprep.subr.bf16.mxu0 0
    %3934 = vmatpush2.bf16.xpose.msra.mxu0 0
    %3935 = vmatprep.subr.bf16.mxu0 0
    %3936 = vmatpush2.bf16.xpose.msra.mxu0 0
    %3937 = vmatprep.mubr.bf16.mxu0 %v622
    %3938 = vmatmul.mubr.bf16.gmra.mxu0 %v621
    %v3939 = vpop.f32.mrf.mxu0
    %v3940 = vadd.f32 %v3900, %v3939
    %v3941 = vpop.f32.mrf.mxu0
    %v3942 = vpop.f32.mrf.mxu0
    %v3943 = vpop.f32.mrf.mxu0
    %3944 = vdwg.mxu0
    %3945 = vmatprep.subr.bf16.mxu0 0
    %3946 = vmatpush1.bf16.xpose.msra.mxu0 0
    %3947 = vmatprep.subr.bf16.mxu0 0
    %3948 = vmatpush1.bf16.xpose.msra.mxu0 0
    %3949 = vmatprep.subr.bf16.mxu0 0
    %3950 = vmatpush1.bf16.xpose.msra.mxu0 0
    %3951 = vmatprep.subr.bf16.mxu0 0
    %3952 = vmatpush1.bf16.xpose.msra.mxu0 0
    %3953 = vmatprep.subr.bf16.mxu0 0
    %3954 = vmatpush1.bf16.xpose.msra.mxu0 0
    %3955 = vmatprep.subr.bf16.mxu0 0
    %3956 = vmatpush1.bf16.xpose.msra.mxu0 0
    %3957 = vmatprep.subr.bf16.mxu0 %v1776
    %3958 = vmatpush1.bf16.xpose.msra.mxu0 %v1775
    %3959 = vmatprep.subr.bf16.mxu0 %v1648
    %3960 = vmatpush1.bf16.xpose.msra.mxu0 %v1647
    %3961 = vmatprep.subr.bf16.mxu0 0
    %3962 = vmatpush2.bf16.xpose.msra.mxu0 0
    %3963 = vmatprep.subr.bf16.mxu0 0
    %3964 = vmatpush2.bf16.xpose.msra.mxu0 0
    %3965 = vmatprep.subr.bf16.mxu0 0
    %3966 = vmatpush2.bf16.xpose.msra.mxu0 0
    %3967 = vmatprep.subr.bf16.mxu0 0
    %3968 = vmatpush2.bf16.xpose.msra.mxu0 0
    %3969 = vmatprep.subr.bf16.mxu0 0
    %3970 = vmatpush2.bf16.xpose.msra.mxu0 0
    %3971 = vmatprep.subr.bf16.mxu0 0
    %3972 = vmatpush2.bf16.xpose.msra.mxu0 0
    %3973 = vmatprep.subr.bf16.mxu0 0
    %3974 = vmatpush2.bf16.xpose.msra.mxu0 0
    %3975 = vmatprep.subr.bf16.mxu0 0
    %3976 = vmatpush2.bf16.xpose.msra.mxu0 0
    %3977 = vmatprep.mubr.bf16.mxu0 %v624
    %3978 = vmatmul.mubr.bf16.gmra.mxu0 %v623
    %v3979 = vpop.f32.mrf.mxu0
    %v3980 = vadd.f32 %v3940, %v3979
    %v3981 = vpop.f32.mrf.mxu0
    %v3982 = vpop.f32.mrf.mxu0
    %v3983 = vpop.f32.mrf.mxu0
    %3984 = vdwg.mxu0
    %3985 = vmatprep.subr.bf16.mxu0 0
    %3986 = vmatpush1.bf16.xpose.msra.mxu0 0
    %3987 = vmatprep.subr.bf16.mxu0 0
    %3988 = vmatpush1.bf16.xpose.msra.mxu0 0
    %3989 = vmatprep.subr.bf16.mxu0 0
    %3990 = vmatpush1.bf16.xpose.msra.mxu0 0
    %3991 = vmatprep.subr.bf16.mxu0 0
    %3992 = vmatpush1.bf16.xpose.msra.mxu0 0
    %3993 = vmatprep.subr.bf16.mxu0 0
    %3994 = vmatpush1.bf16.xpose.msra.mxu0 0
    %3995 = vmatprep.subr.bf16.mxu0 0
    %3996 = vmatpush1.bf16.xpose.msra.mxu0 0
    %3997 = vmatprep.subr.bf16.mxu0 %v1778
    %3998 = vmatpush1.bf16.xpose.msra.mxu0 %v1777
    %3999 = vmatprep.subr.bf16.mxu0 %v1650
    %4000 = vmatpush1.bf16.xpose.msra.mxu0 %v1649
    %4001 = vmatprep.subr.bf16.mxu0 0
    %4002 = vmatpush2.bf16.xpose.msra.mxu0 0
    %4003 = vmatprep.subr.bf16.mxu0 0
    %4004 = vmatpush2.bf16.xpose.msra.mxu0 0
    %4005 = vmatprep.subr.bf16.mxu0 0
    %4006 = vmatpush2.bf16.xpose.msra.mxu0 0
    %4007 = vmatprep.subr.bf16.mxu0 0
    %4008 = vmatpush2.bf16.xpose.msra.mxu0 0
    %4009 = vmatprep.subr.bf16.mxu0 0
    %4010 = vmatpush2.bf16.xpose.msra.mxu0 0
    %4011 = vmatprep.subr.bf16.mxu0 0
    %4012 = vmatpush2.bf16.xpose.msra.mxu0 0
    %4013 = vmatprep.subr.bf16.mxu0 0
    %4014 = vmatpush2.bf16.xpose.msra.mxu0 0
    %4015 = vmatprep.subr.bf16.mxu0 0
    %4016 = vmatpush2.bf16.xpose.msra.mxu0 0
    %4017 = vmatprep.mubr.bf16.mxu0 %v626
    %4018 = vmatmul.mubr.bf16.gmra.mxu0 %v625
    %v4019 = vpop.f32.mrf.mxu0
    %v4020 = vadd.f32 %v3980, %v4019
    %v4021 = vpop.f32.mrf.mxu0
    %v4022 = vpop.f32.mrf.mxu0
    %v4023 = vpop.f32.mrf.mxu0
    %4024 = vdwg.mxu0
    %4025 = vmatprep.subr.bf16.mxu0 0
    %4026 = vmatpush1.bf16.xpose.msra.mxu0 0
    %4027 = vmatprep.subr.bf16.mxu0 0
    %4028 = vmatpush1.bf16.xpose.msra.mxu0 0
    %4029 = vmatprep.subr.bf16.mxu0 0
    %4030 = vmatpush1.bf16.xpose.msra.mxu0 0
    %4031 = vmatprep.subr.bf16.mxu0 0
    %4032 = vmatpush1.bf16.xpose.msra.mxu0 0
    %4033 = vmatprep.subr.bf16.mxu0 0
    %4034 = vmatpush1.bf16.xpose.msra.mxu0 0
    %4035 = vmatprep.subr.bf16.mxu0 0
    %4036 = vmatpush1.bf16.xpose.msra.mxu0 0
    %4037 = vmatprep.subr.bf16.mxu0 %v1780
    %4038 = vmatpush1.bf16.xpose.msra.mxu0 %v1779
    %4039 = vmatprep.subr.bf16.mxu0 %v1652
    %4040 = vmatpush1.bf16.xpose.msra.mxu0 %v1651
    %4041 = vmatprep.subr.bf16.mxu0 0
    %4042 = vmatpush2.bf16.xpose.msra.mxu0 0
    %4043 = vmatprep.subr.bf16.mxu0 0
    %4044 = vmatpush2.bf16.xpose.msra.mxu0 0
    %4045 = vmatprep.subr.bf16.mxu0 0
    %4046 = vmatpush2.bf16.xpose.msra.mxu0 0
    %4047 = vmatprep.subr.bf16.mxu0 0
    %4048 = vmatpush2.bf16.xpose.msra.mxu0 0
    %4049 = vmatprep.subr.bf16.mxu0 0
    %4050 = vmatpush2.bf16.xpose.msra.mxu0 0
    %4051 = vmatprep.subr.bf16.mxu0 0
    %4052 = vmatpush2.bf16.xpose.msra.mxu0 0
    %4053 = vmatprep.subr.bf16.mxu0 0
    %4054 = vmatpush2.bf16.xpose.msra.mxu0 0
    %4055 = vmatprep.subr.bf16.mxu0 0
    %4056 = vmatpush2.bf16.xpose.msra.mxu0 0
    %4057 = vmatprep.mubr.bf16.mxu0 %v628
    %4058 = vmatmul.mubr.bf16.gmra.mxu0 %v627
    %v4059 = vpop.f32.mrf.mxu0
    %v4060 = vadd.f32 %v4020, %v4059
    %v4061 = vpop.f32.mrf.mxu0
    %v4062 = vpop.f32.mrf.mxu0
    %v4063 = vpop.f32.mrf.mxu0
    %4064 = vdwg.mxu0
    %4065 = vmatprep.subr.bf16.mxu0 0
    %4066 = vmatpush1.bf16.xpose.msra.mxu0 0
    %4067 = vmatprep.subr.bf16.mxu0 0
    %4068 = vmatpush1.bf16.xpose.msra.mxu0 0
    %4069 = vmatprep.subr.bf16.mxu0 0
    %4070 = vmatpush1.bf16.xpose.msra.mxu0 0
    %4071 = vmatprep.subr.bf16.mxu0 0
    %4072 = vmatpush1.bf16.xpose.msra.mxu0 0
    %4073 = vmatprep.subr.bf16.mxu0 0
    %4074 = vmatpush1.bf16.xpose.msra.mxu0 0
    %4075 = vmatprep.subr.bf16.mxu0 0
    %4076 = vmatpush1.bf16.xpose.msra.mxu0 0
    %4077 = vmatprep.subr.bf16.mxu0 %v1782
    %4078 = vmatpush1.bf16.xpose.msra.mxu0 %v1781
    %4079 = vmatprep.subr.bf16.mxu0 %v1654
    %4080 = vmatpush1.bf16.xpose.msra.mxu0 %v1653
    %4081 = vmatprep.subr.bf16.mxu0 0
    %4082 = vmatpush2.bf16.xpose.msra.mxu0 0
    %4083 = vmatprep.subr.bf16.mxu0 0
    %4084 = vmatpush2.bf16.xpose.msra.mxu0 0
    %4085 = vmatprep.subr.bf16.mxu0 0
    %4086 = vmatpush2.bf16.xpose.msra.mxu0 0
    %4087 = vmatprep.subr.bf16.mxu0 0
    %4088 = vmatpush2.bf16.xpose.msra.mxu0 0
    %4089 = vmatprep.subr.bf16.mxu0 0
    %4090 = vmatpush2.bf16.xpose.msra.mxu0 0
    %4091 = vmatprep.subr.bf16.mxu0 0
    %4092 = vmatpush2.bf16.xpose.msra.mxu0 0
    %4093 = vmatprep.subr.bf16.mxu0 0
    %4094 = vmatpush2.bf16.xpose.msra.mxu0 0
    %4095 = vmatprep.subr.bf16.mxu0 0
    %4096 = vmatpush2.bf16.xpose.msra.mxu0 0
    %4097 = vmatprep.mubr.bf16.mxu0 %v630
    %4098 = vmatmul.mubr.bf16.gmra.mxu0 %v629
    %v4099 = vpop.f32.mrf.mxu0
    %v4100 = vadd.f32 %v4060, %v4099
    %v4101 = vpop.f32.mrf.mxu0
    %v4102 = vpop.f32.mrf.mxu0
    %v4103 = vpop.f32.mrf.mxu0
    %4104 = vdwg.mxu0
    %4105 = vmatprep.subr.bf16.mxu0 0
    %4106 = vmatpush1.bf16.xpose.msra.mxu0 0
    %4107 = vmatprep.subr.bf16.mxu0 0
    %4108 = vmatpush1.bf16.xpose.msra.mxu0 0
    %4109 = vmatprep.subr.bf16.mxu0 0
    %4110 = vmatpush1.bf16.xpose.msra.mxu0 0
    %4111 = vmatprep.subr.bf16.mxu0 0
    %4112 = vmatpush1.bf16.xpose.msra.mxu0 0
    %4113 = vmatprep.subr.bf16.mxu0 0
    %4114 = vmatpush1.bf16.xpose.msra.mxu0 0
    %4115 = vmatprep.subr.bf16.mxu0 0
    %4116 = vmatpush1.bf16.xpose.msra.mxu0 0
    %4117 = vmatprep.subr.bf16.mxu0 %v1784
    %4118 = vmatpush1.bf16.xpose.msra.mxu0 %v1783
    %4119 = vmatprep.subr.bf16.mxu0 %v1656
    %4120 = vmatpush1.bf16.xpose.msra.mxu0 %v1655
    %4121 = vmatprep.subr.bf16.mxu0 0
    %4122 = vmatpush2.bf16.xpose.msra.mxu0 0
    %4123 = vmatprep.subr.bf16.mxu0 0
    %4124 = vmatpush2.bf16.xpose.msra.mxu0 0
    %4125 = vmatprep.subr.bf16.mxu0 0
    %4126 = vmatpush2.bf16.xpose.msra.mxu0 0
    %4127 = vmatprep.subr.bf16.mxu0 0
    %4128 = vmatpush2.bf16.xpose.msra.mxu0 0
    %4129 = vmatprep.subr.bf16.mxu0 0
    %4130 = vmatpush2.bf16.xpose.msra.mxu0 0
    %4131 = vmatprep.subr.bf16.mxu0 0
    %4132 = vmatpush2.bf16.xpose.msra.mxu0 0
    %4133 = vmatprep.subr.bf16.mxu0 0
    %4134 = vmatpush2.bf16.xpose.msra.mxu0 0
    %4135 = vmatprep.subr.bf16.mxu0 0
    %4136 = vmatpush2.bf16.xpose.msra.mxu0 0
    %4137 = vmatprep.mubr.bf16.mxu0 %v632
    %4138 = vmatmul.mubr.bf16.gmra.mxu0 %v631
    %v4139 = vpop.f32.mrf.mxu0
    %v4140 = vadd.f32 %v4100, %v4139
    %v4141 = vpop.f32.mrf.mxu0
    %v4142 = vpop.f32.mrf.mxu0
    %v4143 = vpop.f32.mrf.mxu0
    %4144 = vdwg.mxu0
    %4145 = vmatprep.subr.bf16.mxu0 0
    %4146 = vmatpush1.bf16.xpose.msra.mxu0 0
    %4147 = vmatprep.subr.bf16.mxu0 0
    %4148 = vmatpush1.bf16.xpose.msra.mxu0 0
    %4149 = vmatprep.subr.bf16.mxu0 0
    %4150 = vmatpush1.bf16.xpose.msra.mxu0 0
    %4151 = vmatprep.subr.bf16.mxu0 0
    %4152 = vmatpush1.bf16.xpose.msra.mxu0 0
    %4153 = vmatprep.subr.bf16.mxu0 0
    %4154 = vmatpush1.bf16.xpose.msra.mxu0 0
    %4155 = vmatprep.subr.bf16.mxu0 0
    %4156 = vmatpush1.bf16.xpose.msra.mxu0 0
    %4157 = vmatprep.subr.bf16.mxu0 %v1786
    %4158 = vmatpush1.bf16.xpose.msra.mxu0 %v1785
    %4159 = vmatprep.subr.bf16.mxu0 %v1658
    %4160 = vmatpush1.bf16.xpose.msra.mxu0 %v1657
    %4161 = vmatprep.subr.bf16.mxu0 0
    %4162 = vmatpush2.bf16.xpose.msra.mxu0 0
    %4163 = vmatprep.subr.bf16.mxu0 0
    %4164 = vmatpush2.bf16.xpose.msra.mxu0 0
    %4165 = vmatprep.subr.bf16.mxu0 0
    %4166 = vmatpush2.bf16.xpose.msra.mxu0 0
    %4167 = vmatprep.subr.bf16.mxu0 0
    %4168 = vmatpush2.bf16.xpose.msra.mxu0 0
    %4169 = vmatprep.subr.bf16.mxu0 0
    %4170 = vmatpush2.bf16.xpose.msra.mxu0 0
    %4171 = vmatprep.subr.bf16.mxu0 0
    %4172 = vmatpush2.bf16.xpose.msra.mxu0 0
    %4173 = vmatprep.subr.bf16.mxu0 0
    %4174 = vmatpush2.bf16.xpose.msra.mxu0 0
    %4175 = vmatprep.subr.bf16.mxu0 0
    %4176 = vmatpush2.bf16.xpose.msra.mxu0 0
    %4177 = vmatprep.mubr.bf16.mxu0 %v634
    %4178 = vmatmul.mubr.bf16.gmra.mxu0 %v633
    %v4179 = vpop.f32.mrf.mxu0
    %v4180 = vadd.f32 %v4140, %v4179
    %v4181 = vpop.f32.mrf.mxu0
    %v4182 = vpop.f32.mrf.mxu0
    %v4183 = vpop.f32.mrf.mxu0
    %4184 = vdwg.mxu0
    %4185 = vmatprep.subr.bf16.mxu0 0
    %4186 = vmatpush1.bf16.xpose.msra.mxu0 0
    %4187 = vmatprep.subr.bf16.mxu0 0
    %4188 = vmatpush1.bf16.xpose.msra.mxu0 0
    %4189 = vmatprep.subr.bf16.mxu0 0
    %4190 = vmatpush1.bf16.xpose.msra.mxu0 0
    %4191 = vmatprep.subr.bf16.mxu0 0
    %4192 = vmatpush1.bf16.xpose.msra.mxu0 0
    %4193 = vmatprep.subr.bf16.mxu0 0
    %4194 = vmatpush1.bf16.xpose.msra.mxu0 0
    %4195 = vmatprep.subr.bf16.mxu0 0
    %4196 = vmatpush1.bf16.xpose.msra.mxu0 0
    %4197 = vmatprep.subr.bf16.mxu0 %v1788
    %4198 = vmatpush1.bf16.xpose.msra.mxu0 %v1787
    %4199 = vmatprep.subr.bf16.mxu0 %v1660
    %4200 = vmatpush1.bf16.xpose.msra.mxu0 %v1659
    %4201 = vmatprep.subr.bf16.mxu0 0
    %4202 = vmatpush2.bf16.xpose.msra.mxu0 0
    %4203 = vmatprep.subr.bf16.mxu0 0
    %4204 = vmatpush2.bf16.xpose.msra.mxu0 0
    %4205 = vmatprep.subr.bf16.mxu0 0
    %4206 = vmatpush2.bf16.xpose.msra.mxu0 0
    %4207 = vmatprep.subr.bf16.mxu0 0
    %4208 = vmatpush2.bf16.xpose.msra.mxu0 0
    %4209 = vmatprep.subr.bf16.mxu0 0
    %4210 = vmatpush2.bf16.xpose.msra.mxu0 0
    %4211 = vmatprep.subr.bf16.mxu0 0
    %4212 = vmatpush2.bf16.xpose.msra.mxu0 0
    %4213 = vmatprep.subr.bf16.mxu0 0
    %4214 = vmatpush2.bf16.xpose.msra.mxu0 0
    %4215 = vmatprep.subr.bf16.mxu0 0
    %4216 = vmatpush2.bf16.xpose.msra.mxu0 0
    %4217 = vmatprep.mubr.bf16.mxu0 %v636
    %4218 = vmatmul.mubr.bf16.gmra.mxu0 %v635
    %v4219 = vpop.f32.mrf.mxu0
    %v4220 = vadd.f32 %v4180, %v4219
    %v4221 = vpop.f32.mrf.mxu0
    %v4222 = vpop.f32.mrf.mxu0
    %v4223 = vpop.f32.mrf.mxu0
    %4224 = vdwg.mxu0
    %4225 = vmatprep.subr.bf16.mxu0 0
    %4226 = vmatpush1.bf16.xpose.msra.mxu0 0
    %4227 = vmatprep.subr.bf16.mxu0 0
    %4228 = vmatpush1.bf16.xpose.msra.mxu0 0
    %4229 = vmatprep.subr.bf16.mxu0 0
    %4230 = vmatpush1.bf16.xpose.msra.mxu0 0
    %4231 = vmatprep.subr.bf16.mxu0 0
    %4232 = vmatpush1.bf16.xpose.msra.mxu0 0
    %4233 = vmatprep.subr.bf16.mxu0 0
    %4234 = vmatpush1.bf16.xpose.msra.mxu0 0
    %4235 = vmatprep.subr.bf16.mxu0 0
    %4236 = vmatpush1.bf16.xpose.msra.mxu0 0
    %4237 = vmatprep.subr.bf16.mxu0 %v1790
    %4238 = vmatpush1.bf16.xpose.msra.mxu0 %v1789
    %4239 = vmatprep.subr.bf16.mxu0 %v1662
    %4240 = vmatpush1.bf16.xpose.msra.mxu0 %v1661
    %4241 = vmatprep.subr.bf16.mxu0 0
    %4242 = vmatpush2.bf16.xpose.msra.mxu0 0
    %4243 = vmatprep.subr.bf16.mxu0 0
    %4244 = vmatpush2.bf16.xpose.msra.mxu0 0
    %4245 = vmatprep.subr.bf16.mxu0 0
    %4246 = vmatpush2.bf16.xpose.msra.mxu0 0
    %4247 = vmatprep.subr.bf16.mxu0 0
    %4248 = vmatpush2.bf16.xpose.msra.mxu0 0
    %4249 = vmatprep.subr.bf16.mxu0 0
    %4250 = vmatpush2.bf16.xpose.msra.mxu0 0
    %4251 = vmatprep.subr.bf16.mxu0 0
    %4252 = vmatpush2.bf16.xpose.msra.mxu0 0
    %4253 = vmatprep.subr.bf16.mxu0 0
    %4254 = vmatpush2.bf16.xpose.msra.mxu0 0
    %4255 = vmatprep.subr.bf16.mxu0 0
    %4256 = vmatpush2.bf16.xpose.msra.mxu0 0
    %4257 = vmatprep.mubr.bf16.mxu0 %v638
    %4258 = vmatmul.mubr.bf16.gmra.mxu0 %v637
    %v4259 = vpop.f32.mrf.mxu0
    %v4260 = vadd.f32 %v4220, %v4259
    %v4261 = vpop.f32.mrf.mxu0
    %v4262 = vpop.f32.mrf.mxu0
    %v4263 = vpop.f32.mrf.mxu0
    %4264 = vdwg.mxu0
    %4265 = vmatprep.subr.bf16.mxu0 0
    %4266 = vmatpush1.bf16.xpose.msra.mxu0 0
    %4267 = vmatprep.subr.bf16.mxu0 0
    %4268 = vmatpush1.bf16.xpose.msra.mxu0 0
    %4269 = vmatprep.subr.bf16.mxu0 0
    %4270 = vmatpush1.bf16.xpose.msra.mxu0 0
    %4271 = vmatprep.subr.bf16.mxu0 0
    %4272 = vmatpush1.bf16.xpose.msra.mxu0 0
    %4273 = vmatprep.subr.bf16.mxu0 0
    %4274 = vmatpush1.bf16.xpose.msra.mxu0 0
    %4275 = vmatprep.subr.bf16.mxu0 0
    %4276 = vmatpush1.bf16.xpose.msra.mxu0 0
    %4277 = vmatprep.subr.bf16.mxu0 %v1792
    %4278 = vmatpush1.bf16.xpose.msra.mxu0 %v1791
    %4279 = vmatprep.subr.bf16.mxu0 %v1664
    %4280 = vmatpush1.bf16.xpose.msra.mxu0 %v1663
    %4281 = vmatprep.subr.bf16.mxu0 0
    %4282 = vmatpush2.bf16.xpose.msra.mxu0 0
    %4283 = vmatprep.subr.bf16.mxu0 0
    %4284 = vmatpush2.bf16.xpose.msra.mxu0 0
    %4285 = vmatprep.subr.bf16.mxu0 0
    %4286 = vmatpush2.bf16.xpose.msra.mxu0 0
    %4287 = vmatprep.subr.bf16.mxu0 0
    %4288 = vmatpush2.bf16.xpose.msra.mxu0 0
    %4289 = vmatprep.subr.bf16.mxu0 0
    %4290 = vmatpush2.bf16.xpose.msra.mxu0 0
    %4291 = vmatprep.subr.bf16.mxu0 0
    %4292 = vmatpush2.bf16.xpose.msra.mxu0 0
    %4293 = vmatprep.subr.bf16.mxu0 0
    %4294 = vmatpush2.bf16.xpose.msra.mxu0 0
    %4295 = vmatprep.subr.bf16.mxu0 0
    %4296 = vmatpush2.bf16.xpose.msra.mxu0 0
    %4297 = vmatprep.mubr.bf16.mxu0 %v640
    %4298 = vmatmul.mubr.bf16.gmra.mxu0 %v639
    %v4299 = vpop.f32.mrf.mxu0
    %v4300 = vadd.f32 %v4260, %v4299
    %v4301 = vpop.f32.mrf.mxu0
    %v4302 = vpop.f32.mrf.mxu0
    %v4303 = vpop.f32.mrf.mxu0
    %4304 = vdwg.mxu0
    %4305 = vmatprep.subr.bf16.mxu0 0
    %4306 = vmatpush1.bf16.xpose.msra.mxu0 0
    %4307 = vmatprep.subr.bf16.mxu0 0
    %4308 = vmatpush1.bf16.xpose.msra.mxu0 0
    %4309 = vmatprep.subr.bf16.mxu0 0
    %4310 = vmatpush1.bf16.xpose.msra.mxu0 0
    %4311 = vmatprep.subr.bf16.mxu0 0
    %4312 = vmatpush1.bf16.xpose.msra.mxu0 0
    %4313 = vmatprep.subr.bf16.mxu0 0
    %4314 = vmatpush1.bf16.xpose.msra.mxu0 0
    %4315 = vmatprep.subr.bf16.mxu0 0
    %4316 = vmatpush1.bf16.xpose.msra.mxu0 0
    %4317 = vmatprep.subr.bf16.mxu0 %v1794
    %4318 = vmatpush1.bf16.xpose.msra.mxu0 %v1793
    %4319 = vmatprep.subr.bf16.mxu0 %v1666
    %4320 = vmatpush1.bf16.xpose.msra.mxu0 %v1665
    %4321 = vmatprep.subr.bf16.mxu0 0
    %4322 = vmatpush2.bf16.xpose.msra.mxu0 0
    %4323 = vmatprep.subr.bf16.mxu0 0
    %4324 = vmatpush2.bf16.xpose.msra.mxu0 0
    %4325 = vmatprep.subr.bf16.mxu0 0
    %4326 = vmatpush2.bf16.xpose.msra.mxu0 0
    %4327 = vmatprep.subr.bf16.mxu0 0
    %4328 = vmatpush2.bf16.xpose.msra.mxu0 0
    %4329 = vmatprep.subr.bf16.mxu0 0
    %4330 = vmatpush2.bf16.xpose.msra.mxu0 0
    %4331 = vmatprep.subr.bf16.mxu0 0
    %4332 = vmatpush2.bf16.xpose.msra.mxu0 0
    %4333 = vmatprep.subr.bf16.mxu0 0
    %4334 = vmatpush2.bf16.xpose.msra.mxu0 0
    %4335 = vmatprep.subr.bf16.mxu0 0
    %4336 = vmatpush2.bf16.xpose.msra.mxu0 0
    %4337 = vmatprep.mubr.bf16.mxu0 %v642
    %4338 = vmatmul.mubr.bf16.gmra.mxu0 %v641
    %v4339 = vpop.f32.mrf.mxu0
    %v4340 = vadd.f32 %v4300, %v4339
    %v4341 = vpop.f32.mrf.mxu0
    %v4342 = vpop.f32.mrf.mxu0
    %v4343 = vpop.f32.mrf.mxu0
    %4344 = vdwg.mxu0
    %4345 = vmatprep.subr.bf16.mxu0 0
    %4346 = vmatpush1.bf16.xpose.msra.mxu0 0
    %4347 = vmatprep.subr.bf16.mxu0 0
    %4348 = vmatpush1.bf16.xpose.msra.mxu0 0
    %4349 = vmatprep.subr.bf16.mxu0 0
    %4350 = vmatpush1.bf16.xpose.msra.mxu0 0
    %4351 = vmatprep.subr.bf16.mxu0 0
    %4352 = vmatpush1.bf16.xpose.msra.mxu0 0
    %4353 = vmatprep.subr.bf16.mxu0 0
    %4354 = vmatpush1.bf16.xpose.msra.mxu0 0
    %4355 = vmatprep.subr.bf16.mxu0 0
    %4356 = vmatpush1.bf16.xpose.msra.mxu0 0
    %4357 = vmatprep.subr.bf16.mxu0 %v1796
    %4358 = vmatpush1.bf16.xpose.msra.mxu0 %v1795
    %4359 = vmatprep.subr.bf16.mxu0 %v1668
    %4360 = vmatpush1.bf16.xpose.msra.mxu0 %v1667
    %4361 = vmatprep.subr.bf16.mxu0 0
    %4362 = vmatpush2.bf16.xpose.msra.mxu0 0
    %4363 = vmatprep.subr.bf16.mxu0 0
    %4364 = vmatpush2.bf16.xpose.msra.mxu0 0
    %4365 = vmatprep.subr.bf16.mxu0 0
    %4366 = vmatpush2.bf16.xpose.msra.mxu0 0
    %4367 = vmatprep.subr.bf16.mxu0 0
    %4368 = vmatpush2.bf16.xpose.msra.mxu0 0
    %4369 = vmatprep.subr.bf16.mxu0 0
    %4370 = vmatpush2.bf16.xpose.msra.mxu0 0
    %4371 = vmatprep.subr.bf16.mxu0 0
    %4372 = vmatpush2.bf16.xpose.msra.mxu0 0
    %4373 = vmatprep.subr.bf16.mxu0 0
    %4374 = vmatpush2.bf16.xpose.msra.mxu0 0
    %4375 = vmatprep.subr.bf16.mxu0 0
    %4376 = vmatpush2.bf16.xpose.msra.mxu0 0
    %4377 = vmatprep.mubr.bf16.mxu0 %v644
    %4378 = vmatmul.mubr.bf16.gmra.mxu0 %v643
    %v4379 = vpop.f32.mrf.mxu0
    %v4380 = vadd.f32 %v4340, %v4379
    %v4381 = vpop.f32.mrf.mxu0
    %v4382 = vpop.f32.mrf.mxu0
    %v4383 = vpop.f32.mrf.mxu0
    %4384 = vdwg.mxu0
    %4385 = vmatprep.subr.bf16.mxu0 0
    %4386 = vmatpush1.bf16.xpose.msra.mxu0 0
    %4387 = vmatprep.subr.bf16.mxu0 0
    %4388 = vmatpush1.bf16.xpose.msra.mxu0 0
    %4389 = vmatprep.subr.bf16.mxu0 0
    %4390 = vmatpush1.bf16.xpose.msra.mxu0 0
    %4391 = vmatprep.subr.bf16.mxu0 0
    %4392 = vmatpush1.bf16.xpose.msra.mxu0 0
    %4393 = vmatprep.subr.bf16.mxu0 0
    %4394 = vmatpush1.bf16.xpose.msra.mxu0 0
    %4395 = vmatprep.subr.bf16.mxu0 0
    %4396 = vmatpush1.bf16.xpose.msra.mxu0 0
    %4397 = vmatprep.subr.bf16.mxu0 %v1798
    %4398 = vmatpush1.bf16.xpose.msra.mxu0 %v1797
    %4399 = vmatprep.subr.bf16.mxu0 %v1670
    %4400 = vmatpush1.bf16.xpose.msra.mxu0 %v1669
    %4401 = vmatprep.subr.bf16.mxu0 0
    %4402 = vmatpush2.bf16.xpose.msra.mxu0 0
    %4403 = vmatprep.subr.bf16.mxu0 0
    %4404 = vmatpush2.bf16.xpose.msra.mxu0 0
    %4405 = vmatprep.subr.bf16.mxu0 0
    %4406 = vmatpush2.bf16.xpose.msra.mxu0 0
    %4407 = vmatprep.subr.bf16.mxu0 0
    %4408 = vmatpush2.bf16.xpose.msra.mxu0 0
    %4409 = vmatprep.subr.bf16.mxu0 0
    %4410 = vmatpush2.bf16.xpose.msra.mxu0 0
    %4411 = vmatprep.subr.bf16.mxu0 0
    %4412 = vmatpush2.bf16.xpose.msra.mxu0 0
    %4413 = vmatprep.subr.bf16.mxu0 0
    %4414 = vmatpush2.bf16.xpose.msra.mxu0 0
    %4415 = vmatprep.subr.bf16.mxu0 0
    %4416 = vmatpush2.bf16.xpose.msra.mxu0 0
    %4417 = vmatprep.mubr.bf16.mxu0 %v646
    %4418 = vmatmul.mubr.bf16.gmra.mxu0 %v645
    %v4419 = vpop.f32.mrf.mxu0
    %v4420 = vadd.f32 %v4380, %v4419
    %v4421 = vpop.f32.mrf.mxu0
    %v4422 = vpop.f32.mrf.mxu0
    %v4423 = vpop.f32.mrf.mxu0
    %4424 = vdwg.mxu0
    %4425 = vmatprep.subr.bf16.mxu0 0
    %4426 = vmatpush1.bf16.xpose.msra.mxu0 0
    %4427 = vmatprep.subr.bf16.mxu0 0
    %4428 = vmatpush1.bf16.xpose.msra.mxu0 0
    %4429 = vmatprep.subr.bf16.mxu0 0
    %4430 = vmatpush1.bf16.xpose.msra.mxu0 0
    %4431 = vmatprep.subr.bf16.mxu0 0
    %4432 = vmatpush1.bf16.xpose.msra.mxu0 0
    %4433 = vmatprep.subr.bf16.mxu0 0
    %4434 = vmatpush1.bf16.xpose.msra.mxu0 0
    %4435 = vmatprep.subr.bf16.mxu0 0
    %4436 = vmatpush1.bf16.xpose.msra.mxu0 0
    %4437 = vmatprep.subr.bf16.mxu0 %v1800
    %4438 = vmatpush1.bf16.xpose.msra.mxu0 %v1799
    %4439 = vmatprep.subr.bf16.mxu0 %v1672
    %4440 = vmatpush1.bf16.xpose.msra.mxu0 %v1671
    %4441 = vmatprep.subr.bf16.mxu0 0
    %4442 = vmatpush2.bf16.xpose.msra.mxu0 0
    %4443 = vmatprep.subr.bf16.mxu0 0
    %4444 = vmatpush2.bf16.xpose.msra.mxu0 0
    %4445 = vmatprep.subr.bf16.mxu0 0
    %4446 = vmatpush2.bf16.xpose.msra.mxu0 0
    %4447 = vmatprep.subr.bf16.mxu0 0
    %4448 = vmatpush2.bf16.xpose.msra.mxu0 0
    %4449 = vmatprep.subr.bf16.mxu0 0
    %4450 = vmatpush2.bf16.xpose.msra.mxu0 0
    %4451 = vmatprep.subr.bf16.mxu0 0
    %4452 = vmatpush2.bf16.xpose.msra.mxu0 0
    %4453 = vmatprep.subr.bf16.mxu0 0
    %4454 = vmatpush2.bf16.xpose.msra.mxu0 0
    %4455 = vmatprep.subr.bf16.mxu0 0
    %4456 = vmatpush2.bf16.xpose.msra.mxu0 0
    %4457 = vmatprep.mubr.bf16.mxu0 %v648
    %4458 = vmatmul.mubr.bf16.gmra.mxu0 %v647
    %v4459 = vpop.f32.mrf.mxu0
    %v4460 = vadd.f32 %v4420, %v4459
    %v4461 = vpop.f32.mrf.mxu0
    %v4462 = vpop.f32.mrf.mxu0
    %v4463 = vpop.f32.mrf.mxu0
    %4464 = vdwg.mxu0
    %4465 = vmatprep.subr.bf16.mxu0 0
    %4466 = vmatpush1.bf16.xpose.msra.mxu0 0
    %4467 = vmatprep.subr.bf16.mxu0 0
    %4468 = vmatpush1.bf16.xpose.msra.mxu0 0
    %4469 = vmatprep.subr.bf16.mxu0 0
    %4470 = vmatpush1.bf16.xpose.msra.mxu0 0
    %4471 = vmatprep.subr.bf16.mxu0 0
    %4472 = vmatpush1.bf16.xpose.msra.mxu0 0
    %4473 = vmatprep.subr.bf16.mxu0 0
    %4474 = vmatpush1.bf16.xpose.msra.mxu0 0
    %4475 = vmatprep.subr.bf16.mxu0 0
    %4476 = vmatpush1.bf16.xpose.msra.mxu0 0
    %4477 = vmatprep.subr.bf16.mxu0 %v1802
    %4478 = vmatpush1.bf16.xpose.msra.mxu0 %v1801
    %4479 = vmatprep.subr.bf16.mxu0 %v1674
    %4480 = vmatpush1.bf16.xpose.msra.mxu0 %v1673
    %4481 = vmatprep.subr.bf16.mxu0 0
    %4482 = vmatpush2.bf16.xpose.msra.mxu0 0
    %4483 = vmatprep.subr.bf16.mxu0 0
    %4484 = vmatpush2.bf16.xpose.msra.mxu0 0
    %4485 = vmatprep.subr.bf16.mxu0 0
    %4486 = vmatpush2.bf16.xpose.msra.mxu0 0
    %4487 = vmatprep.subr.bf16.mxu0 0
    %4488 = vmatpush2.bf16.xpose.msra.mxu0 0
    %4489 = vmatprep.subr.bf16.mxu0 0
    %4490 = vmatpush2.bf16.xpose.msra.mxu0 0
    %4491 = vmatprep.subr.bf16.mxu0 0
    %4492 = vmatpush2.bf16.xpose.msra.mxu0 0
    %4493 = vmatprep.subr.bf16.mxu0 0
    %4494 = vmatpush2.bf16.xpose.msra.mxu0 0
    %4495 = vmatprep.subr.bf16.mxu0 0
    %4496 = vmatpush2.bf16.xpose.msra.mxu0 0
    %4497 = vmatprep.mubr.bf16.mxu0 %v650
    %4498 = vmatmul.mubr.bf16.gmra.mxu0 %v649
    %v4499 = vpop.f32.mrf.mxu0
    %v4500 = vadd.f32 %v4460, %v4499
    %v4501 = vpop.f32.mrf.mxu0
    %v4502 = vpop.f32.mrf.mxu0
    %v4503 = vpop.f32.mrf.mxu0
    %4504 = vdwg.mxu0
    %4505 = vmatprep.subr.bf16.mxu0 0
    %4506 = vmatpush1.bf16.xpose.msra.mxu0 0
    %4507 = vmatprep.subr.bf16.mxu0 0
    %4508 = vmatpush1.bf16.xpose.msra.mxu0 0
    %4509 = vmatprep.subr.bf16.mxu0 0
    %4510 = vmatpush1.bf16.xpose.msra.mxu0 0
    %4511 = vmatprep.subr.bf16.mxu0 0
    %4512 = vmatpush1.bf16.xpose.msra.mxu0 0
    %4513 = vmatprep.subr.bf16.mxu0 0
    %4514 = vmatpush1.bf16.xpose.msra.mxu0 0
    %4515 = vmatprep.subr.bf16.mxu0 0
    %4516 = vmatpush1.bf16.xpose.msra.mxu0 0
    %4517 = vmatprep.subr.bf16.mxu0 %v1804
    %4518 = vmatpush1.bf16.xpose.msra.mxu0 %v1803
    %4519 = vmatprep.subr.bf16.mxu0 %v1676
    %4520 = vmatpush1.bf16.xpose.msra.mxu0 %v1675
    %4521 = vmatprep.subr.bf16.mxu0 0
    %4522 = vmatpush2.bf16.xpose.msra.mxu0 0
    %4523 = vmatprep.subr.bf16.mxu0 0
    %4524 = vmatpush2.bf16.xpose.msra.mxu0 0
    %4525 = vmatprep.subr.bf16.mxu0 0
    %4526 = vmatpush2.bf16.xpose.msra.mxu0 0
    %4527 = vmatprep.subr.bf16.mxu0 0
    %4528 = vmatpush2.bf16.xpose.msra.mxu0 0
    %4529 = vmatprep.subr.bf16.mxu0 0
    %4530 = vmatpush2.bf16.xpose.msra.mxu0 0
    %4531 = vmatprep.subr.bf16.mxu0 0
    %4532 = vmatpush2.bf16.xpose.msra.mxu0 0
    %4533 = vmatprep.subr.bf16.mxu0 0
    %4534 = vmatpush2.bf16.xpose.msra.mxu0 0
    %4535 = vmatprep.subr.bf16.mxu0 0
    %4536 = vmatpush2.bf16.xpose.msra.mxu0 0
    %4537 = vmatprep.mubr.bf16.mxu0 %v652
    %4538 = vmatmul.mubr.bf16.gmra.mxu0 %v651
    %v4539 = vpop.f32.mrf.mxu0
    %v4540 = vadd.f32 %v4500, %v4539
    %v4541 = vpop.f32.mrf.mxu0
    %v4542 = vpop.f32.mrf.mxu0
    %v4543 = vpop.f32.mrf.mxu0
    %4544 = vdwg.mxu0
    %4545 = vmatprep.subr.bf16.mxu0 0
    %4546 = vmatpush1.bf16.xpose.msra.mxu0 0
    %4547 = vmatprep.subr.bf16.mxu0 0
    %4548 = vmatpush1.bf16.xpose.msra.mxu0 0
    %4549 = vmatprep.subr.bf16.mxu0 0
    %4550 = vmatpush1.bf16.xpose.msra.mxu0 0
    %4551 = vmatprep.subr.bf16.mxu0 0
    %4552 = vmatpush1.bf16.xpose.msra.mxu0 0
    %4553 = vmatprep.subr.bf16.mxu0 0
    %4554 = vmatpush1.bf16.xpose.msra.mxu0 0
    %4555 = vmatprep.subr.bf16.mxu0 0
    %4556 = vmatpush1.bf16.xpose.msra.mxu0 0
    %4557 = vmatprep.subr.bf16.mxu0 %v1806
    %4558 = vmatpush1.bf16.xpose.msra.mxu0 %v1805
    %4559 = vmatprep.subr.bf16.mxu0 %v1678
    %4560 = vmatpush1.bf16.xpose.msra.mxu0 %v1677
    %4561 = vmatprep.subr.bf16.mxu0 0
    %4562 = vmatpush2.bf16.xpose.msra.mxu0 0
    %4563 = vmatprep.subr.bf16.mxu0 0
    %4564 = vmatpush2.bf16.xpose.msra.mxu0 0
    %4565 = vmatprep.subr.bf16.mxu0 0
    %4566 = vmatpush2.bf16.xpose.msra.mxu0 0
    %4567 = vmatprep.subr.bf16.mxu0 0
    %4568 = vmatpush2.bf16.xpose.msra.mxu0 0
    %4569 = vmatprep.subr.bf16.mxu0 0
    %4570 = vmatpush2.bf16.xpose.msra.mxu0 0
    %4571 = vmatprep.subr.bf16.mxu0 0
    %4572 = vmatpush2.bf16.xpose.msra.mxu0 0
    %4573 = vmatprep.subr.bf16.mxu0 0
    %4574 = vmatpush2.bf16.xpose.msra.mxu0 0
    %4575 = vmatprep.subr.bf16.mxu0 0
    %4576 = vmatpush2.bf16.xpose.msra.mxu0 0
    %4577 = vmatprep.mubr.bf16.mxu0 %v654
    %4578 = vmatmul.mubr.bf16.gmra.mxu0 %v653
    %v4579 = vpop.f32.mrf.mxu0
    %v4580 = vadd.f32 %v4540, %v4579
    %v4581 = vpop.f32.mrf.mxu0
    %v4582 = vpop.f32.mrf.mxu0
    %v4583 = vpop.f32.mrf.mxu0
    %4584 = vdwg.mxu0
    %4585 = vmatprep.subr.bf16.mxu0 0
    %4586 = vmatpush1.bf16.xpose.msra.mxu0 0
    %4587 = vmatprep.subr.bf16.mxu0 0
    %4588 = vmatpush1.bf16.xpose.msra.mxu0 0
    %4589 = vmatprep.subr.bf16.mxu0 0
    %4590 = vmatpush1.bf16.xpose.msra.mxu0 0
    %4591 = vmatprep.subr.bf16.mxu0 0
    %4592 = vmatpush1.bf16.xpose.msra.mxu0 0
    %4593 = vmatprep.subr.bf16.mxu0 0
    %4594 = vmatpush1.bf16.xpose.msra.mxu0 0
    %4595 = vmatprep.subr.bf16.mxu0 0
    %4596 = vmatpush1.bf16.xpose.msra.mxu0 0
    %4597 = vmatprep.subr.bf16.mxu0 %v1808
    %4598 = vmatpush1.bf16.xpose.msra.mxu0 %v1807
    %4599 = vmatprep.subr.bf16.mxu0 %v1680
    %4600 = vmatpush1.bf16.xpose.msra.mxu0 %v1679
    %4601 = vmatprep.subr.bf16.mxu0 0
    %4602 = vmatpush2.bf16.xpose.msra.mxu0 0
    %4603 = vmatprep.subr.bf16.mxu0 0
    %4604 = vmatpush2.bf16.xpose.msra.mxu0 0
    %4605 = vmatprep.subr.bf16.mxu0 0
    %4606 = vmatpush2.bf16.xpose.msra.mxu0 0
    %4607 = vmatprep.subr.bf16.mxu0 0
    %4608 = vmatpush2.bf16.xpose.msra.mxu0 0
    %4609 = vmatprep.subr.bf16.mxu0 0
    %4610 = vmatpush2.bf16.xpose.msra.mxu0 0
    %4611 = vmatprep.subr.bf16.mxu0 0
    %4612 = vmatpush2.bf16.xpose.msra.mxu0 0
    %4613 = vmatprep.subr.bf16.mxu0 0
    %4614 = vmatpush2.bf16.xpose.msra.mxu0 0
    %4615 = vmatprep.subr.bf16.mxu0 0
    %4616 = vmatpush2.bf16.xpose.msra.mxu0 0
    %4617 = vmatprep.mubr.bf16.mxu0 %v656
    %4618 = vmatmul.mubr.bf16.gmra.mxu0 %v655
    %v4619 = vpop.f32.mrf.mxu0
    %v4620 = vadd.f32 %v4580, %v4619
    %v4621 = vpop.f32.mrf.mxu0
    %v4622 = vpop.f32.mrf.mxu0
    %v4623 = vpop.f32.mrf.mxu0
    %4624 = vdwg.mxu0
    %vm4625 = vcmask 261120
    %4626 = vst.msk [vmem:[#allocation2] sm:$0xff] %vm4625, %v4620
    // Predicated region
    $region14: #{forward.1} parent=1 // pred_check
      _
    $region15: #{forward.1} parent=1 // pred_check_branch
      %4628 = sbr.rel (0) target = $region17
    $region16: #{forward.1} parent=1 // pred_region
      %s4630 = ssub.s32 128, 128
      %4631 = vsyncadd [#allocation3], %s4630
      %s4633 = sshll.u32 [#allocation2], 4
      %s4634 = int_to_ptr.vmem [resolvable:$true] %s4633
      %4636 = dma.vmem_to_hbm [thread:$0]  %s4634, 128, %s3, [#allocation3]
    $region17: #{forward.1} parent=1 // pred_fallthru
      _
    // Predicated region
    $region18: #{forward.1} parent=1 // pred_check
      _
    $region19: #{forward.1} parent=1 // pred_check_branch
      %4638 = sbr.rel (0) target = $region21
    $region20: #{forward.1} parent=1 // pred_region
      %4639 = dma.done [#allocation3], 128
    $region21: #{forward.1} parent=1 // pred_fallthru
      _
    %4640 = vsyncpa [#allocation3], 1

</llo_original>
